<compile_context>
chip_gen: v7x
topology: tpu7x:2x2x1
jax: 0.10.0
libtpu: 0.0.40
codegen_flags: <defaults>
</compile_context>

<pallas_src>
import math
import jax
import jax.numpy as jnp
from jax.experimental import pallas as pl
from jax.experimental.pallas import tpu as pltpu  # noqa: F401  (TPU backend)

# ---- small, deterministic config (mirrors the module's __init__ hyper-params) ----
B = 2      # batch
T = 8      # patch_size (time steps)
N = 16     # num_nodes
E = 8      # num_edges
D = 32     # local_embed_dim
L = 2      # tem_layer_num
G = 2      # graph_layer_num
LN_EPS = 1e-5

BN = B * N          # 32  rows  (sublane axis)
TD = T * D          # 256 lanes (lane axis, multiple of 128)

assert (D & (D - 1)) == 0, "in-kernel block mask uses a shift; D must be a power of 2"
D_SHIFT = D.bit_length() - 1

# ---------------- slab layouts (shared between prep and kernel) ----------------
# Weight slab: NW lane-tiled (D, TD) compact channel weights, stacked along sublanes.
W_ORDER = []
for _i in range(L):
    W_ORDER += [f"filt{_i}", f"gate{_i}", f"skip{_i}"]
W_ORDER += [f"hconv{_j}" for _j in range(G)]
W_ORDER += [f"hconvg{_j}" for _j in range(G)]
W_ORDER += ["wfa", "wfx", "wga"]
W_ORDER += [f"outlin{_j}" for _j in range(G)]
W_ORDER += ["end"]
W_IDX = {n: k for k, n in enumerate(W_ORDER)}
NW = len(W_ORDER)                       # 16

def _align8(x):
    return (x + 7) & ~7

# Small slab rows (lane width TD):
S_START_M = 0                           # (T, TD)   start_conv expansion matrix
S_WSCORE = _align8(S_START_M + T)       # (T, E)    folded HyperGraphConstructor weight
S_AGEO = _align8(S_WSCORE + T)          # (BN, BN)  block-diag normalized geographic adjacency
S_BMASK = _align8(S_AGEO + BN)          # (BN, BN)  kron(I_B, ones(N,N)) batch mask
S_BIAS0 = _align8(S_BMASK + BN)
S_START_B = S_BIAS0                     # (1, TD)
S_BSCORE = S_BIAS0 + 1                  # (1, E)
S_TEMP_B = S_BIAS0 + 2                  # 3 rows / temporal layer: filt_b, gate_b, skip_b
S_OUTLIN_B = S_TEMP_B + 3 * L
S_LN_G = S_OUTLIN_B + 1
S_LN_B = S_OUTLIN_B + 2
S_END_B = S_OUTLIN_B + 3
S_ROWS = _align8(S_END_B + 1)           # 96


# ----------------------------------------------------------------------------------
# Kernel: single grid-less invocation, lane-dense (BN, TD) activations, 3 input DMAs.
# ----------------------------------------------------------------------------------
def sthgnn_kernel(xbt_ref, wslab_ref, sslab_ref, out_ref):
    f32 = jnp.float32

    # Block-diagonal mask (TD, TD): 1 where lane-chunk == sublane-chunk.  Built in-kernel
    # from iota (zero DMA bytes); exact 0/1 values.
    ri = jax.lax.broadcasted_iota(jnp.int32, (TD, TD), 0)
    ci = jax.lax.broadcasted_iota(jnp.int32, (TD, TD), 1)
    bd_mask = (jnp.right_shift(ri, D_SHIFT) == jnp.right_shift(ci, D_SHIFT)).astype(f32)

    def bd(name):
        """Rebuild the exact kron(I_T, W) block-diagonal weight from its lane-tiled strip."""
        k = W_IDX[name]
        w_wide = wslab_ref[k * D:(k + 1) * D, :]                 # (D, TD), aligned static slice
        w_tiled = jnp.concatenate([w_wide] * T, axis=0)          # sublane tiling (8-aligned)
        return w_tiled * bd_mask                                 # exact: entries are W or 0

    def srow(r):                                                  # one (1, TD) bias row
        return sslab_ref[r:r + 1, :]

    xbt = xbt_ref[...]                                            # (BN, T), row = b*N + n

    # ---------------- HyperGraphConstructor (weight chain folded at prep) ----------------
    w_score = sslab_ref[S_WSCORE:S_WSCORE + T, 0:E]               # (T, E)
    b_score = sslab_ref[S_BSCORE:S_BSCORE + 1, 0:E]               # (1, E)
    scores = jnp.dot(xbt, w_score, preferred_element_type=f32) + b_score
    scores = scores - jnp.max(scores, axis=-1, keepdims=True)
    ex = jnp.exp(scores)
    H_data = ex * pl.reciprocal(jnp.sum(ex, axis=-1, keepdims=True), approx=True)   # (BN, E)

    # ---------------- batched hypergraph normalization -> block-diag (BN, BN) -------------
    bmask = sslab_ref[S_BMASK:S_BMASK + BN, 0:BN]                 # kron(I_B, ones(N,N))
    a_geo_big = sslab_ref[S_AGEO:S_AGEO + BN, 0:BN]               # precomputed (batch-indep.)
    Dv = jnp.sum(H_data, axis=-1, keepdims=True)
    Dv_inv = jnp.where(Dv > 0, 1.0 / (Dv + 1e-8), jnp.zeros_like(Dv))
    Be = jnp.dot(bmask, H_data, preferred_element_type=f32)       # per-batch edge degree
    Be_inv = jnp.where(Be > 0, 1.0 / (Be + 1e-8), jnp.zeros_like(Be))
    A_big = bmask * jnp.dot(Dv_inv * H_data, (Be_inv * H_data).T,
                            preferred_element_type=f32)           # (BN, BN)

    # ---------------- start_conv (Linear(1, D)) into the lane-dense layout ----------------
    start_m = sslab_ref[S_START_M:S_START_M + T, :]               # (T, TD)
    x = jnp.dot(xbt, start_m, preferred_element_type=f32) + srow(S_START_B)
    skip = x                                                      # (BN, TD)

    # ---------------- expand graph-side weights once (used in both temporal layers) --------
    w_hc = [bd(f"hconv{j}") for j in range(G)]
    w_hcg = [bd(f"hconvg{j}") for j in range(G)]
    w_fa, w_fx, w_ga = bd("wfa"), bd("wfx"), bd("wga")
    w_out = [bd(f"outlin{j}") for j in range(G)]
    ln_red = bd_mask * (1.0 / D)                                  # chunk-mean matrix (free)
    ln_g, ln_b = srow(S_LN_G), srow(S_LN_B)
    outlin_b = srow(S_OUTLIN_B)

    def layernorm(v):
        mu = jnp.dot(v, ln_red, preferred_element_type=f32)
        d = v - mu
        var = jnp.dot(d * d, ln_red, preferred_element_type=f32)
        return d * jax.lax.rsqrt(var + LN_EPS) * ln_g + ln_b

    def hyper_conv(x_in):
        x_data = x_in
        x_geo = x_in
        acc = None
        for j in range(G):
            # einsum 'btnd,bmn->btmd' == block-diag node mixing in the (BN, TD) layout
            x_data = jnp.dot(jnp.dot(A_big, x_data, preferred_element_type=f32),
                             w_hc[j], preferred_element_type=f32)
            x_geo = jnp.dot(jnp.dot(a_geo_big, x_geo, preferred_element_type=f32),
                            w_hcg[j], preferred_element_type=f32)
            # W(cat([x_data, X])) + W_g(cat([x_geo, X])) with pre-split / pre-summed weights
            V = jax.nn.sigmoid(
                jnp.dot(x_data, w_fa, preferred_element_type=f32)
                + jnp.dot(x_in, w_fx, preferred_element_type=f32)
                + jnp.dot(x_geo, w_ga, preferred_element_type=f32))
            x_fused = x_geo + V * (x_data - x_geo)
            contrib = jnp.dot(x_fused, w_out[j], preferred_element_type=f32)
            acc = contrib if acc is None else acc + contrib
        return acc + outlin_b

    # ---------------- temporal layers ----------------
    for i in range(L):
        filt = jnp.tanh(jnp.dot(x, bd(f"filt{i}"), preferred_element_type=f32)
                        + srow(S_TEMP_B + 3 * i + 0))
        gate = jax.nn.sigmoid(jnp.dot(x, bd(f"gate{i}"), preferred_element_type=f32)
                              + srow(S_TEMP_B + 3 * i + 1))
        xg = filt * gate
        skip = skip + (jnp.dot(xg, bd(f"skip{i}"), preferred_element_type=f32)
                       + srow(S_TEMP_B + 3 * i + 2))
        x = layernorm(hyper_conv(xg))

    out = jnp.maximum(skip, 0.0)
    out_ref[...] = jnp.dot(out, bd("end"), preferred_element_type=f32) + srow(S_END_B)


# ----------------------------------------------------------------------------------
# One-time weight preprocessing (off the per-call hot path): build the two slabs.
# ----------------------------------------------------------------------------------
def prepare_inputs(p):
    f32 = jnp.float32
    with jax.default_matmul_precision("highest"):
        def lane_tile(w):                     # (D, D) used as x @ w  ->  (D, TD) strip
            return jnp.tile(w.astype(f32), (1, T))

        def brow(b):                          # (D,) bias -> (TD,) lane-tiled row
            return jnp.tile(b.astype(f32), (T,))

        # fold the HyperGraphConstructor:  scores = P_last @ w_score + b_score
        M = p["wq"].T @ (p["wk"] @ p["hedge"].T)                  # (D, E)
        scale = 1.0 / math.sqrt(D)
        w_score = (p["wnode"].T @ M) * scale                      # (T, E)
        b_score = (p["bnode"] @ M) * scale                        # (E,)

        # geographic hypergraph (batch independent): normalize once, block-diag over batch
        H_geo = p["A"] @ p["G_l"]                                 # (N, E)
        Dg = jnp.sum(H_geo, -1, keepdims=True)
        Dg_inv = jnp.where(Dg > 0, 1.0 / (Dg + 1e-8), jnp.zeros_like(Dg))
        Bg = jnp.sum(H_geo, 0, keepdims=True)
        Bg_inv = jnp.where(Bg > 0, 1.0 / (Bg + 1e-8), jnp.zeros_like(Bg))
        A_geo = (Dg_inv * H_geo) @ (Bg_inv * H_geo).T             # (N, N)
        a_geo_big = jnp.kron(jnp.eye(B, dtype=f32), A_geo)        # (BN, BN)
        bmask = jnp.kron(jnp.eye(B, dtype=f32), jnp.ones((N, N), f32))

        start_m = jnp.kron(jnp.eye(T, dtype=f32), p["start_w"].T.astype(f32))   # (T, TD)

        wfuse_t = p["wfuse"].T                                    # (2D, D)
        wgfuse_t = p["wgfuse"].T
        outlin_t = p["outlin_w"].T                                # (G*D, D)

        # ---- weight slab: compact lane-tiled strips instead of kron-expanded slabs ----
        wmap = {}
        for i in range(L):
            wmap[f"filt{i}"] = p["filt_w"][i].T
            wmap[f"gate{i}"] = p["gate_w"][i].T
            wmap[f"skip{i}"] = p["skip_w"][i].T
        for j in range(G):
            wmap[f"hconv{j}"] = p["hconv_w"][j]                   # used as x @ W (no .T)
            wmap[f"hconvg{j}"] = p["hconv_wg"][j]
        wmap["wfa"] = wfuse_t[:D]
        wmap["wfx"] = wfuse_t[D:] + wgfuse_t[D:]                  # pre-summed X_in projections
        wmap["wga"] = wgfuse_t[:D]
        for j in range(G):
            wmap[f"outlin{j}"] = outlin_t[j * D:(j + 1) * D]
        wmap["end"] = p["end_w"].T
        wslab = jnp.concatenate([lane_tile(wmap[n]) for n in W_ORDER], axis=0)   # (NW*D, TD)

        # ---- small slab: all remaining matrices/biases packed into one array ----
        sslab = jnp.zeros((S_ROWS, TD), f32)
        sslab = sslab.at[S_START_M:S_START_M + T, :].set(start_m)
        sslab = sslab.at[S_WSCORE:S_WSCORE + T, 0:E].set(w_score)
        sslab = sslab.at[S_AGEO:S_AGEO + BN, 0:BN].set(a_geo_big)
        sslab = sslab.at[S_BMASK:S_BMASK + BN, 0:BN].set(bmask)
        sslab = sslab.at[S_START_B, :].set(brow(p["start_b"]))
        sslab = sslab.at[S_BSCORE, 0:E].set(b_score.astype(f32))
        for i in range(L):
            sslab = sslab.at[S_TEMP_B + 3 * i + 0, :].set(brow(p["filt_b"][i]))
            sslab = sslab.at[S_TEMP_B + 3 * i + 1, :].set(brow(p["gate_b"][i]))
            sslab = sslab.at[S_TEMP_B + 3 * i + 2, :].set(brow(p["skip_b"][i]))
        sslab = sslab.at[S_OUTLIN_B, :].set(brow(p["outlin_b"]))
        sslab = sslab.at[S_LN_G, :].set(brow(p["ln_g"]))
        sslab = sslab.at[S_LN_B, :].set(brow(p["ln_b"]))
        sslab = sslab.at[S_END_B, :].set(brow(p["end_b"]))

    return wslab, sslab


# ----------------------------------------------------------------------------------
# Per-call wrappers.
# ----------------------------------------------------------------------------------
def _call_kernel(xbt, wslab, sslab):
    # Grid-less on purpose: ~5-6 MiB resident (inputs + in-kernel expanded weights), far
    # under scoped-VMEM defaults; a grid would only add per-step overhead at this size.
    # (v7x note: this uses one TensorCore; add a parallel batch grid axis if B grows.)
    return pl.pallas_call(
        sthgnn_kernel,
        out_shape=jax.ShapeDtypeStruct((BN, TD), jnp.float32),
    )(xbt, wslab, sslab)


@jax.jit
def sthgnn_forward_flat(X, wslab, sslab):
    """X: (B, T, N). Returns the lane-dense (B*N, T*D) slab (preferred for consumers that
    can take this layout — skips the output relayout launch)."""
    xbt = jnp.transpose(X, (0, 2, 1)).reshape(BN, T)              # 1 KiB relayout
    return _call_kernel(xbt, wslab, sslab)


@jax.jit
def sthgnn_forward(X, wslab, sslab):
    """X: (B, T, N) float32. Returns (B, T, N, D) matching the torch module."""
    xbt = jnp.transpose(X, (0, 2, 1)).reshape(BN, T)
    out_flat = _call_kernel(xbt, wslab, sslab)
    return jnp.transpose(out_flat.reshape(B, N, T, D), (0, 2, 1, 3))


# ---------------- pure-JAX reference (mirrors the torch forward) ----------------
def hyper_conv_ref(Xin, H_data, H_geo, p):
    Dv = jnp.sum(H_data, -1, keepdims=True)
    Dv_inv = jnp.where(Dv > 0, 1.0 / (Dv + 1e-8), jnp.zeros_like(Dv))
    Be = jnp.sum(H_data, 1, keepdims=True)
    Be_inv = jnp.where(Be > 0, 1.0 / (Be + 1e-8), jnp.zeros_like(Be))
    A_norm = (Dv_inv * H_data) @ jnp.swapaxes(Be_inv * H_data, 1, 2)     # (B,N,N)
    Dg = jnp.sum(H_geo, -1, keepdims=True)
    Dg_inv = jnp.where(Dg > 0, 1.0 / (Dg + 1e-8), jnp.zeros_like(Dg))
    Bg = jnp.sum(H_geo, 0, keepdims=True)
    Bg_inv = jnp.where(Bg > 0, 1.0 / (Bg + 1e-8), jnp.zeros_like(Bg))
    A_geo = (Dg_inv * H_geo) @ (Bg_inv * H_geo).T                        # (N,N)
    outs = []
    xd, xg = Xin, Xin
    for j in range(G):
        xd = jnp.einsum("btnd,bmn->btmd", xd, A_norm) @ p["hconv_w"][j]
        xg = jnp.einsum("btnd,mn->btmd", xg, A_geo) @ p["hconv_wg"][j]
        V = jax.nn.sigmoid(
            jnp.concatenate([xd, Xin], -1) @ p["wfuse"].T
            + jnp.concatenate([xg, Xin], -1) @ p["wgfuse"].T)
        outs.append(V * xd + (1.0 - V) * xg)
    return jnp.concatenate(outs, -1) @ p["outlin_w"].T + p["outlin_b"]


def reference_forward(X, p):
    P_last = jnp.transpose(X, (0, 2, 1))
    Emb = P_last @ p["wnode"].T + p["bnode"]
    Q = Emb @ p["wq"].T
    Kmat = p["hedge"] @ p["wk"].T
    H_data = jax.nn.softmax(Q @ Kmat.T / jnp.float32(math.sqrt(D)), axis=-1)
    H_geo = p["A"] @ p["G_l"]

    x = X[..., None] * p["start_w"][:, 0] + p["start_b"]
    skip = x
    for i in range(L):
        res = x
        filt = jnp.tanh(res @ p["filt_w"][i].T + p["filt_b"][i])
        gate = jax.nn.sigmoid(res @ p["gate_w"][i].T + p["gate_b"][i])
        x = filt * gate
        skip = skip + (x @ p["skip_w"][i].T + p["skip_b"][i])
        x = hyper_conv_ref(x, H_data, H_geo, p)
        mu = jnp.mean(x, -1, keepdims=True)
        var = jnp.mean((x - mu) ** 2, -1, keepdims=True)
        x = (x - mu) / jnp.sqrt(var + LN_EPS) * p["ln_g"] + p["ln_b"]
    out = jax.nn.relu(skip)
    return out @ p["end_w"].T + p["end_b"]


def make_params():
    keys = jax.random.split(jax.random.PRNGKey(0), 24)
    r = lambda k, s, sc=0.1: jax.random.normal(k, s, jnp.float32) * sc
    p = {
        "hedge": r(keys[0], (E, D)),
        "G_l": r(keys[1], (N, E)),
        "wq": r(keys[2], (D, D)),
        "wk": r(keys[3], (D, D)),
        "wnode": r(keys[4], (D, T)),
        "bnode": r(keys[5], (D,)),
        # TODO(synk): adjacency is loaded from an .npy file in the torch module; use a
        # deterministic random non-negative matrix instead.
        "A": jnp.abs(r(keys[6], (N, N), 1.0)),
        "start_w": r(keys[7], (D, 1)),
        "start_b": r(keys[8], (D,)),
        "filt_w": r(keys[9], (L, D, D)),
        "filt_b": r(keys[10], (L, D)),
        "gate_w": r(keys[11], (L, D, D)),
        "gate_b": r(keys[12], (L, D)),
        "skip_w": r(keys[13], (L, D, D)),
        "skip_b": r(keys[14], (L, D)),
        "hconv_w": r(keys[15], (G, D, D)),
        "hconv_wg": r(keys[16], (G, D, D)),
        "wfuse": r(keys[17], (D, 2 * D)),
        "wgfuse": r(keys[18], (D, 2 * D)),
        "outlin_w": r(keys[19], (D, G * D)),
        "outlin_b": r(keys[20], (D,)),
        "ln_g": jnp.ones((D,), jnp.float32),
        "ln_b": jnp.zeros((D,), jnp.float32),
        "end_w": r(keys[21], (D, D)),
        "end_b": r(keys[22], (D,)),
    }
    return p, keys[23]


if __name__ == "__main__":
    params, xkey = make_params()
    X = jax.random.normal(xkey, (B, T, N), jnp.float32)      # (batch, patch_size, num_nodes)

    wslab, sslab = prepare_inputs(params)                    # one-time weight preprocessing
    out = sthgnn_forward(X, wslab, sslab)
    out = jax.block_until_ready(out)
    assert out.shape == (B, T, N, D)

    with jax.default_matmul_precision("highest"):
        ref = jax.block_until_ready(reference_forward(X, params))
    err = float(jnp.max(jnp.abs(out - ref)))
    assert jnp.all(jnp.isfinite(out)) and err < 5e-3, f"mismatch vs reference: {err}"

    print("KERNEL_OK")
</pallas_src>

<mosaic_0001>
module attributes {stable_mosaic.version = 11 : i64} {
  func.func @sthgnn_kernel(%arg0: memref<32x8xf32, #tpu.memory_space<vmem>>, %arg1: memref<512x256xf32, #tpu.memory_space<vmem>>, %arg2: memref<96x256xf32, #tpu.memory_space<vmem>>, %arg3: memref<32x256xf32, #tpu.memory_space<vmem>>) attributes {dimension_semantics = [], scalar_prefetch = 0 : i64, scratch_operands = 0 : i64, tpu.core_type = #tpu.core_type<tc>} {
    %0 = tpu.iota {dimensions = array<i32: 0>} : vector<256x256xi32>
    %1 = tpu.iota {dimensions = array<i32: 1>} : vector<256x256xi32>
    %c5_i32 = arith.constant 5 : i32
    %2 = vector.broadcast %c5_i32 : i32 to vector<256x256xi32>
    %3 = arith.shrsi %0, %2 : vector<256x256xi32>
    %c5_i32_0 = arith.constant 5 : i32
    %4 = vector.broadcast %c5_i32_0 : i32 to vector<256x256xi32>
    %5 = arith.shrsi %1, %4 : vector<256x256xi32>
    %6 = arith.cmpi eq, %3, %5 : vector<256x256xi32>
    %7 = arith.extui %6 : vector<256x256xi1> to vector<256x256xi32>
    %8 = arith.sitofp %7 : vector<256x256xi32> to vector<256x256xf32>
    %c0 = arith.constant 0 : index
    %c0_1 = arith.constant 0 : index
    %9 = vector.load %arg0[%c0, %c0_1] : memref<32x8xf32, #tpu.memory_space<vmem>>, vector<32x8xf32>
    %c8 = arith.constant 8 : index
    %c0_2 = arith.constant 0 : index
    %10 = vector.load %arg2[%c8, %c0_2] : memref<96x256xf32, #tpu.memory_space<vmem>>, vector<8x8xf32>
    %c81 = arith.constant 81 : index
    %c0_3 = arith.constant 0 : index
    %11 = vector.load %arg2[%c81, %c0_3] : memref<96x256xf32, #tpu.memory_space<vmem>>, vector<1x8xf32>
    %cst = arith.constant dense<0.000000e+00> : vector<32x8xf32>
    %12 = tpu.matmul %9, %10, %cst {dimension_numbers = #tpu.dot_dimension_numbers<[1], [0], [0], [1], [0, 0, 1, 1], [], []>} : vector<32x8xf32>, vector<8x8xf32>, vector<32x8xf32> -> vector<32x8xf32>
    %13 = vector.broadcast %11 : vector<1x8xf32> to vector<32x8xf32>
    %14 = arith.addf %12, %13 : vector<32x8xf32>
    %cst_4 = arith.constant dense<0xFF800000> : vector<32xf32>
    %15 = vector.multi_reduction <maximumf>, %14, %cst_4 [1] : vector<32x8xf32> to vector<32xf32>
    %16 = vector.shape_cast %15 : vector<32xf32> to vector<32x1xf32>
    %17 = vector.broadcast %16 : vector<32x1xf32> to vector<32x8xf32>
    %18 = arith.subf %14, %17 : vector<32x8xf32>
    %19 = math.exp %18 : vector<32x8xf32>
    %cst_5 = arith.constant dense<0.000000e+00> : vector<32xf32>
    %20 = vector.multi_reduction <add>, %19, %cst_5 [1] : vector<32x8xf32> to vector<32xf32>
    %21 = vector.shape_cast %20 : vector<32xf32> to vector<32x1xf32>
    %22 = tpu.reciprocal %21 {approx = true} : vector<32x1xf32> -> vector<32x1xf32>
    %23 = vector.broadcast %22 : vector<32x1xf32> to vector<32x8xf32>
    %24 = arith.mulf %19, %23 : vector<32x8xf32>
    %c48 = arith.constant 48 : index
    %c0_6 = arith.constant 0 : index
    %25 = vector.load %arg2[%c48, %c0_6] : memref<96x256xf32, #tpu.memory_space<vmem>>, vector<32x32xf32>
    %c16 = arith.constant 16 : index
    %c0_7 = arith.constant 0 : index
    %26 = vector.load %arg2[%c16, %c0_7] : memref<96x256xf32, #tpu.memory_space<vmem>>, vector<32x32xf32>
    %cst_8 = arith.constant dense<0.000000e+00> : vector<32xf32>
    %27 = vector.multi_reduction <add>, %24, %cst_8 [1] : vector<32x8xf32> to vector<32xf32>
    %28 = vector.shape_cast %27 : vector<32xf32> to vector<32x1xf32>
    %cst_9 = arith.constant 0.000000e+00 : f32
    %29 = vector.broadcast %cst_9 : f32 to vector<32x1xf32>
    %30 = arith.cmpf ogt, %28, %29 : vector<32x1xf32>
    %cst_10 = arith.constant 9.99999993E-9 : f32
    %31 = vector.broadcast %cst_10 : f32 to vector<32x1xf32>
    %32 = arith.addf %28, %31 : vector<32x1xf32>
    %cst_11 = arith.constant 1.000000e+00 : f32
    %33 = vector.broadcast %cst_11 : f32 to vector<32x1xf32>
    %34 = arith.divf %33, %32 : vector<32x1xf32>
    %cst_12 = arith.constant 0.000000e+00 : f32
    %35 = vector.broadcast %cst_12 : f32 to vector<32x1xf32>
    %36 = arith.select %30, %34, %35 : vector<32x1xi1>, vector<32x1xf32>
    %cst_13 = arith.constant dense<0.000000e+00> : vector<32x8xf32>
    %37 = tpu.matmul %25, %24, %cst_13 {dimension_numbers = #tpu.dot_dimension_numbers<[1], [0], [0], [1], [0, 0, 1, 1], [], []>} : vector<32x32xf32>, vector<32x8xf32>, vector<32x8xf32> -> vector<32x8xf32>
    %cst_14 = arith.constant 0.000000e+00 : f32
    %38 = vector.broadcast %cst_14 : f32 to vector<32x8xf32>
    %39 = arith.cmpf ogt, %37, %38 : vector<32x8xf32>
    %cst_15 = arith.constant 9.99999993E-9 : f32
    %40 = vector.broadcast %cst_15 : f32 to vector<32x8xf32>
    %41 = arith.addf %37, %40 : vector<32x8xf32>
    %cst_16 = arith.constant 1.000000e+00 : f32
    %42 = vector.broadcast %cst_16 : f32 to vector<32x8xf32>
    %43 = arith.divf %42, %41 : vector<32x8xf32>
    %cst_17 = arith.constant 0.000000e+00 : f32
    %44 = vector.broadcast %cst_17 : f32 to vector<32x8xf32>
    %45 = arith.select %39, %43, %44 : vector<32x8xi1>, vector<32x8xf32>
    %46 = vector.broadcast %36 : vector<32x1xf32> to vector<32x8xf32>
    %47 = arith.mulf %46, %24 : vector<32x8xf32>
    %48 = arith.mulf %45, %24 : vector<32x8xf32>
    %49 = tpu.transpose %48, [1, 0] : vector<32x8xf32> -> vector<8x32xf32>
    %cst_18 = arith.constant dense<0.000000e+00> : vector<32x32xf32>
    %50 = tpu.matmul %47, %49, %cst_18 {dimension_numbers = #tpu.dot_dimension_numbers<[1], [0], [0], [1], [0, 0, 1, 1], [], []>} : vector<32x8xf32>, vector<8x32xf32>, vector<32x32xf32> -> vector<32x32xf32>
    %51 = arith.mulf %25, %50 : vector<32x32xf32>
    %c0_19 = arith.constant 0 : index
    %c0_20 = arith.constant 0 : index
    %52 = vector.load %arg2[%c0_19, %c0_20] : memref<96x256xf32, #tpu.memory_space<vmem>>, vector<8x256xf32>
    %cst_21 = arith.constant dense<0.000000e+00> : vector<32x256xf32>
    %53 = tpu.matmul %9, %52, %cst_21 {dimension_numbers = #tpu.dot_dimension_numbers<[1], [0], [0], [1], [0, 0, 1, 1], [], []>} : vector<32x8xf32>, vector<8x256xf32>, vector<32x256xf32> -> vector<32x256xf32>
    %c80 = arith.constant 80 : index
    %c0_22 = arith.constant 0 : index
    %54 = vector.load %arg2[%c80, %c0_22] : memref<96x256xf32, #tpu.memory_space<vmem>>, vector<1x256xf32>
    %55 = vector.broadcast %54 : vector<1x256xf32> to vector<32x256xf32>
    %56 = arith.addf %53, %55 : vector<32x256xf32>
    %c192 = arith.constant 192 : index
    %c0_23 = arith.constant 0 : index
    %57 = vector.load %arg1[%c192, %c0_23] : memref<512x256xf32, #tpu.memory_space<vmem>>, vector<32x256xf32>
    %58 = tpu.concatenate %57, %57, %57, %57, %57, %57, %57, %57 in 0 : vector<32x256xf32>, vector<32x256xf32>, vector<32x256xf32>, vector<32x256xf32>, vector<32x256xf32>, vector<32x256xf32>, vector<32x256xf32>, vector<32x256xf32> -> vector<256x256xf32>
    %59 = arith.mulf %58, %8 : vector<256x256xf32>
    %c224 = arith.constant 224 : index
    %c0_24 = arith.constant 0 : index
    %60 = vector.load %arg1[%c224, %c0_24] : memref<512x256xf32, #tpu.memory_space<vmem>>, vector<32x256xf32>
    %61 = tpu.concatenate %60, %60, %60, %60, %60, %60, %60, %60 in 0 : vector<32x256xf32>, vector<32x256xf32>, vector<32x256xf32>, vector<32x256xf32>, vector<32x256xf32>, vector<32x256xf32>, vector<32x256xf32>, vector<32x256xf32> -> vector<256x256xf32>
    %62 = arith.mulf %61, %8 : vector<256x256xf32>
    %c256 = arith.constant 256 : index
    %c0_25 = arith.constant 0 : index
    %63 = vector.load %arg1[%c256, %c0_25] : memref<512x256xf32, #tpu.memory_space<vmem>>, vector<32x256xf32>
    %64 = tpu.concatenate %63, %63, %63, %63, %63, %63, %63, %63 in 0 : vector<32x256xf32>, vector<32x256xf32>, vector<32x256xf32>, vector<32x256xf32>, vector<32x256xf32>, vector<32x256xf32>, vector<32x256xf32>, vector<32x256xf32> -> vector<256x256xf32>
    %65 = arith.mulf %64, %8 : vector<256x256xf32>
    %c288 = arith.constant 288 : index
    %c0_26 = arith.constant 0 : index
    %66 = vector.load %arg1[%c288, %c0_26] : memref<512x256xf32, #tpu.memory_space<vmem>>, vector<32x256xf32>
    %67 = tpu.concatenate %66, %66, %66, %66, %66, %66, %66, %66 in 0 : vector<32x256xf32>, vector<32x256xf32>, vector<32x256xf32>, vector<32x256xf32>, vector<32x256xf32>, vector<32x256xf32>, vector<32x256xf32>, vector<32x256xf32> -> vector<256x256xf32>
    %68 = arith.mulf %67, %8 : vector<256x256xf32>
    %c320 = arith.constant 320 : index
    %c0_27 = arith.constant 0 : index
    %69 = vector.load %arg1[%c320, %c0_27] : memref<512x256xf32, #tpu.memory_space<vmem>>, vector<32x256xf32>
    %70 = tpu.concatenate %69, %69, %69, %69, %69, %69, %69, %69 in 0 : vector<32x256xf32>, vector<32x256xf32>, vector<32x256xf32>, vector<32x256xf32>, vector<32x256xf32>, vector<32x256xf32>, vector<32x256xf32>, vector<32x256xf32> -> vector<256x256xf32>
    %71 = arith.mulf %70, %8 : vector<256x256xf32>
    %c352 = arith.constant 352 : index
    %c0_28 = arith.constant 0 : index
    %72 = vector.load %arg1[%c352, %c0_28] : memref<512x256xf32, #tpu.memory_space<vmem>>, vector<32x256xf32>
    %73 = tpu.concatenate %72, %72, %72, %72, %72, %72, %72, %72 in 0 : vector<32x256xf32>, vector<32x256xf32>, vector<32x256xf32>, vector<32x256xf32>, vector<32x256xf32>, vector<32x256xf32>, vector<32x256xf32>, vector<32x256xf32> -> vector<256x256xf32>
    %74 = arith.mulf %73, %8 : vector<256x256xf32>
    %c384 = arith.constant 384 : index
    %c0_29 = arith.constant 0 : index
    %75 = vector.load %arg1[%c384, %c0_29] : memref<512x256xf32, #tpu.memory_space<vmem>>, vector<32x256xf32>
    %76 = tpu.concatenate %75, %75, %75, %75, %75, %75, %75, %75 in 0 : vector<32x256xf32>, vector<32x256xf32>, vector<32x256xf32>, vector<32x256xf32>, vector<32x256xf32>, vector<32x256xf32>, vector<32x256xf32>, vector<32x256xf32> -> vector<256x256xf32>
    %77 = arith.mulf %76, %8 : vector<256x256xf32>
    %c416 = arith.constant 416 : index
    %c0_30 = arith.constant 0 : index
    %78 = vector.load %arg1[%c416, %c0_30] : memref<512x256xf32, #tpu.memory_space<vmem>>, vector<32x256xf32>
    %79 = tpu.concatenate %78, %78, %78, %78, %78, %78, %78, %78 in 0 : vector<32x256xf32>, vector<32x256xf32>, vector<32x256xf32>, vector<32x256xf32>, vector<32x256xf32>, vector<32x256xf32>, vector<32x256xf32>, vector<32x256xf32> -> vector<256x256xf32>
    %80 = arith.mulf %79, %8 : vector<256x256xf32>
    %c448 = arith.constant 448 : index
    %c0_31 = arith.constant 0 : index
    %81 = vector.load %arg1[%c448, %c0_31] : memref<512x256xf32, #tpu.memory_space<vmem>>, vector<32x256xf32>
    %82 = tpu.concatenate %81, %81, %81, %81, %81, %81, %81, %81 in 0 : vector<32x256xf32>, vector<32x256xf32>, vector<32x256xf32>, vector<32x256xf32>, vector<32x256xf32>, vector<32x256xf32>, vector<32x256xf32>, vector<32x256xf32> -> vector<256x256xf32>
    %83 = arith.mulf %82, %8 : vector<256x256xf32>
    %cst_32 = arith.constant 3.125000e-02 : f32
    %84 = vector.broadcast %cst_32 : f32 to vector<256x256xf32>
    %85 = arith.mulf %8, %84 : vector<256x256xf32>
    %c89 = arith.constant 89 : index
    %c0_33 = arith.constant 0 : index
    %86 = vector.load %arg2[%c89, %c0_33] : memref<96x256xf32, #tpu.memory_space<vmem>>, vector<1x256xf32>
    %c90 = arith.constant 90 : index
    %c0_34 = arith.constant 0 : index
    %87 = vector.load %arg2[%c90, %c0_34] : memref<96x256xf32, #tpu.memory_space<vmem>>, vector<1x256xf32>
    %c88 = arith.constant 88 : index
    %c0_35 = arith.constant 0 : index
    %88 = vector.load %arg2[%c88, %c0_35] : memref<96x256xf32, #tpu.memory_space<vmem>>, vector<1x256xf32>
    %c0_36 = arith.constant 0 : index
    %c0_37 = arith.constant 0 : index
    %89 = vector.load %arg1[%c0_36, %c0_37] : memref<512x256xf32, #tpu.memory_space<vmem>>, vector<32x256xf32>
    %90 = tpu.concatenate %89, %89, %89, %89, %89, %89, %89, %89 in 0 : vector<32x256xf32>, vector<32x256xf32>, vector<32x256xf32>, vector<32x256xf32>, vector<32x256xf32>, vector<32x256xf32>, vector<32x256xf32>, vector<32x256xf32> -> vector<256x256xf32>
    %91 = arith.mulf %90, %8 : vector<256x256xf32>
    %cst_38 = arith.constant dense<0.000000e+00> : vector<32x256xf32>
    %92 = tpu.matmul %56, %91, %cst_38 {dimension_numbers = #tpu.dot_dimension_numbers<[1], [0], [0], [1], [0, 0, 1, 1], [], []>} : vector<32x256xf32>, vector<256x256xf32>, vector<32x256xf32> -> vector<32x256xf32>
    %c82 = arith.constant 82 : index
    %c0_39 = arith.constant 0 : index
    %93 = vector.load %arg2[%c82, %c0_39] : memref<96x256xf32, #tpu.memory_space<vmem>>, vector<1x256xf32>
    %94 = vector.broadcast %93 : vector<1x256xf32> to vector<32x256xf32>
    %95 = arith.addf %92, %94 : vector<32x256xf32>
    %96 = math.tanh %95 : vector<32x256xf32>
    %c32 = arith.constant 32 : index
    %c0_40 = arith.constant 0 : index
    %97 = vector.load %arg1[%c32, %c0_40] : memref<512x256xf32, #tpu.memory_space<vmem>>, vector<32x256xf32>
    %98 = tpu.concatenate %97, %97, %97, %97, %97, %97, %97, %97 in 0 : vector<32x256xf32>, vector<32x256xf32>, vector<32x256xf32>, vector<32x256xf32>, vector<32x256xf32>, vector<32x256xf32>, vector<32x256xf32>, vector<32x256xf32> -> vector<256x256xf32>
    %99 = arith.mulf %98, %8 : vector<256x256xf32>
    %cst_41 = arith.constant dense<0.000000e+00> : vector<32x256xf32>
    %100 = tpu.matmul %56, %99, %cst_41 {dimension_numbers = #tpu.dot_dimension_numbers<[1], [0], [0], [1], [0, 0, 1, 1], [], []>} : vector<32x256xf32>, vector<256x256xf32>, vector<32x256xf32> -> vector<32x256xf32>
    %c83 = arith.constant 83 : index
    %c0_42 = arith.constant 0 : index
    %101 = vector.load %arg2[%c83, %c0_42] : memref<96x256xf32, #tpu.memory_space<vmem>>, vector<1x256xf32>
    %102 = vector.broadcast %101 : vector<1x256xf32> to vector<32x256xf32>
    %103 = arith.addf %100, %102 : vector<32x256xf32>
    %104 = arith.negf %103 : vector<32x256xf32>
    %105 = math.exp %104 : vector<32x256xf32>
    %cst_43 = arith.constant 1.000000e+00 : f32
    %106 = vector.broadcast %cst_43 : f32 to vector<32x256xf32>
    %107 = arith.addf %106, %105 : vector<32x256xf32>
    %108 = arith.divf %106, %107 : vector<32x256xf32>
    %109 = arith.mulf %96, %108 : vector<32x256xf32>
    %c64 = arith.constant 64 : index
    %c0_44 = arith.constant 0 : index
    %110 = vector.load %arg1[%c64, %c0_44] : memref<512x256xf32, #tpu.memory_space<vmem>>, vector<32x256xf32>
    %111 = tpu.concatenate %110, %110, %110, %110, %110, %110, %110, %110 in 0 : vector<32x256xf32>, vector<32x256xf32>, vector<32x256xf32>, vector<32x256xf32>, vector<32x256xf32>, vector<32x256xf32>, vector<32x256xf32>, vector<32x256xf32> -> vector<256x256xf32>
    %112 = arith.mulf %111, %8 : vector<256x256xf32>
    %cst_45 = arith.constant dense<0.000000e+00> : vector<32x256xf32>
    %113 = tpu.matmul %109, %112, %cst_45 {dimension_numbers = #tpu.dot_dimension_numbers<[1], [0], [0], [1], [0, 0, 1, 1], [], []>} : vector<32x256xf32>, vector<256x256xf32>, vector<32x256xf32> -> vector<32x256xf32>
    %c84 = arith.constant 84 : index
    %c0_46 = arith.constant 0 : index
    %114 = vector.load %arg2[%c84, %c0_46] : memref<96x256xf32, #tpu.memory_space<vmem>>, vector<1x256xf32>
    %115 = vector.broadcast %114 : vector<1x256xf32> to vector<32x256xf32>
    %116 = arith.addf %113, %115 : vector<32x256xf32>
    %117 = arith.addf %56, %116 : vector<32x256xf32>
    %cst_47 = arith.constant dense<0.000000e+00> : vector<32x256xf32>
    %118 = tpu.matmul %51, %109, %cst_47 {dimension_numbers = #tpu.dot_dimension_numbers<[1], [0], [0], [1], [0, 0, 1, 1], [], []>} : vector<32x32xf32>, vector<32x256xf32>, vector<32x256xf32> -> vector<32x256xf32>
    %cst_48 = arith.constant dense<0.000000e+00> : vector<32x256xf32>
    %119 = tpu.matmul %118, %59, %cst_48 {dimension_numbers = #tpu.dot_dimension_numbers<[1], [0], [0], [1], [0, 0, 1, 1], [], []>} : vector<32x256xf32>, vector<256x256xf32>, vector<32x256xf32> -> vector<32x256xf32>
    %cst_49 = arith.constant dense<0.000000e+00> : vector<32x256xf32>
    %120 = tpu.matmul %26, %109, %cst_49 {dimension_numbers = #tpu.dot_dimension_numbers<[1], [0], [0], [1], [0, 0, 1, 1], [], []>} : vector<32x32xf32>, vector<32x256xf32>, vector<32x256xf32> -> vector<32x256xf32>
    %cst_50 = arith.constant dense<0.000000e+00> : vector<32x256xf32>
    %121 = tpu.matmul %120, %65, %cst_50 {dimension_numbers = #tpu.dot_dimension_numbers<[1], [0], [0], [1], [0, 0, 1, 1], [], []>} : vector<32x256xf32>, vector<256x256xf32>, vector<32x256xf32> -> vector<32x256xf32>
    %cst_51 = arith.constant dense<0.000000e+00> : vector<32x256xf32>
    %122 = tpu.matmul %119, %71, %cst_51 {dimension_numbers = #tpu.dot_dimension_numbers<[1], [0], [0], [1], [0, 0, 1, 1], [], []>} : vector<32x256xf32>, vector<256x256xf32>, vector<32x256xf32> -> vector<32x256xf32>
    %cst_52 = arith.constant dense<0.000000e+00> : vector<32x256xf32>
    %123 = tpu.matmul %109, %74, %cst_52 {dimension_numbers = #tpu.dot_dimension_numbers<[1], [0], [0], [1], [0, 0, 1, 1], [], []>} : vector<32x256xf32>, vector<256x256xf32>, vector<32x256xf32> -> vector<32x256xf32>
    %124 = arith.addf %122, %123 : vector<32x256xf32>
    %cst_53 = arith.constant dense<0.000000e+00> : vector<32x256xf32>
    %125 = tpu.matmul %121, %77, %cst_53 {dimension_numbers = #tpu.dot_dimension_numbers<[1], [0], [0], [1], [0, 0, 1, 1], [], []>} : vector<32x256xf32>, vector<256x256xf32>, vector<32x256xf32> -> vector<32x256xf32>
    %126 = arith.addf %124, %125 : vector<32x256xf32>
    %127 = arith.negf %126 : vector<32x256xf32>
    %128 = math.exp %127 : vector<32x256xf32>
    %cst_54 = arith.constant 1.000000e+00 : f32
    %129 = vector.broadcast %cst_54 : f32 to vector<32x256xf32>
    %130 = arith.addf %129, %128 : vector<32x256xf32>
    %131 = arith.divf %129, %130 : vector<32x256xf32>
    %132 = arith.subf %119, %121 : vector<32x256xf32>
    %133 = arith.mulf %131, %132 : vector<32x256xf32>
    %134 = arith.addf %121, %133 : vector<32x256xf32>
    %cst_55 = arith.constant dense<0.000000e+00> : vector<32x256xf32>
    %135 = tpu.matmul %134, %80, %cst_55 {dimension_numbers = #tpu.dot_dimension_numbers<[1], [0], [0], [1], [0, 0, 1, 1], [], []>} : vector<32x256xf32>, vector<256x256xf32>, vector<32x256xf32> -> vector<32x256xf32>
    %cst_56 = arith.constant dense<0.000000e+00> : vector<32x256xf32>
    %136 = tpu.matmul %51, %119, %cst_56 {dimension_numbers = #tpu.dot_dimension_numbers<[1], [0], [0], [1], [0, 0, 1, 1], [], []>} : vector<32x32xf32>, vector<32x256xf32>, vector<32x256xf32> -> vector<32x256xf32>
    %cst_57 = arith.constant dense<0.000000e+00> : vector<32x256xf32>
    %137 = tpu.matmul %136, %62, %cst_57 {dimension_numbers = #tpu.dot_dimension_numbers<[1], [0], [0], [1], [0, 0, 1, 1], [], []>} : vector<32x256xf32>, vector<256x256xf32>, vector<32x256xf32> -> vector<32x256xf32>
    %cst_58 = arith.constant dense<0.000000e+00> : vector<32x256xf32>
    %138 = tpu.matmul %26, %121, %cst_58 {dimension_numbers = #tpu.dot_dimension_numbers<[1], [0], [0], [1], [0, 0, 1, 1], [], []>} : vector<32x32xf32>, vector<32x256xf32>, vector<32x256xf32> -> vector<32x256xf32>
    %cst_59 = arith.constant dense<0.000000e+00> : vector<32x256xf32>
    %139 = tpu.matmul %138, %68, %cst_59 {dimension_numbers = #tpu.dot_dimension_numbers<[1], [0], [0], [1], [0, 0, 1, 1], [], []>} : vector<32x256xf32>, vector<256x256xf32>, vector<32x256xf32> -> vector<32x256xf32>
    %cst_60 = arith.constant dense<0.000000e+00> : vector<32x256xf32>
    %140 = tpu.matmul %137, %71, %cst_60 {dimension_numbers = #tpu.dot_dimension_numbers<[1], [0], [0], [1], [0, 0, 1, 1], [], []>} : vector<32x256xf32>, vector<256x256xf32>, vector<32x256xf32> -> vector<32x256xf32>
    %cst_61 = arith.constant dense<0.000000e+00> : vector<32x256xf32>
    %141 = tpu.matmul %109, %74, %cst_61 {dimension_numbers = #tpu.dot_dimension_numbers<[1], [0], [0], [1], [0, 0, 1, 1], [], []>} : vector<32x256xf32>, vector<256x256xf32>, vector<32x256xf32> -> vector<32x256xf32>
    %142 = arith.addf %140, %141 : vector<32x256xf32>
    %cst_62 = arith.constant dense<0.000000e+00> : vector<32x256xf32>
    %143 = tpu.matmul %139, %77, %cst_62 {dimension_numbers = #tpu.dot_dimension_numbers<[1], [0], [0], [1], [0, 0, 1, 1], [], []>} : vector<32x256xf32>, vector<256x256xf32>, vector<32x256xf32> -> vector<32x256xf32>
    %144 = arith.addf %142, %143 : vector<32x256xf32>
    %145 = arith.negf %144 : vector<32x256xf32>
    %146 = math.exp %145 : vector<32x256xf32>
    %cst_63 = arith.constant 1.000000e+00 : f32
    %147 = vector.broadcast %cst_63 : f32 to vector<32x256xf32>
    %148 = arith.addf %147, %146 : vector<32x256xf32>
    %149 = arith.divf %147, %148 : vector<32x256xf32>
    %150 = arith.subf %137, %139 : vector<32x256xf32>
    %151 = arith.mulf %149, %150 : vector<32x256xf32>
    %152 = arith.addf %139, %151 : vector<32x256xf32>
    %cst_64 = arith.constant dense<0.000000e+00> : vector<32x256xf32>
    %153 = tpu.matmul %152, %83, %cst_64 {dimension_numbers = #tpu.dot_dimension_numbers<[1], [0], [0], [1], [0, 0, 1, 1], [], []>} : vector<32x256xf32>, vector<256x256xf32>, vector<32x256xf32> -> vector<32x256xf32>
    %154 = arith.addf %135, %153 : vector<32x256xf32>
    %155 = vector.broadcast %88 : vector<1x256xf32> to vector<32x256xf32>
    %156 = arith.addf %154, %155 : vector<32x256xf32>
    %cst_65 = arith.constant dense<0.000000e+00> : vector<32x256xf32>
    %157 = tpu.matmul %156, %85, %cst_65 {dimension_numbers = #tpu.dot_dimension_numbers<[1], [0], [0], [1], [0, 0, 1, 1], [], []>} : vector<32x256xf32>, vector<256x256xf32>, vector<32x256xf32> -> vector<32x256xf32>
    %158 = arith.subf %156, %157 : vector<32x256xf32>
    %159 = arith.mulf %158, %158 : vector<32x256xf32>
    %cst_66 = arith.constant dense<0.000000e+00> : vector<32x256xf32>
    %160 = tpu.matmul %159, %85, %cst_66 {dimension_numbers = #tpu.dot_dimension_numbers<[1], [0], [0], [1], [0, 0, 1, 1], [], []>} : vector<32x256xf32>, vector<256x256xf32>, vector<32x256xf32> -> vector<32x256xf32>
    %cst_67 = arith.constant 9.99999974E-6 : f32
    %161 = vector.broadcast %cst_67 : f32 to vector<32x256xf32>
    %162 = arith.addf %160, %161 : vector<32x256xf32>
    %163 = math.rsqrt %162 : vector<32x256xf32>
    %164 = arith.mulf %158, %163 : vector<32x256xf32>
    %165 = vector.broadcast %86 : vector<1x256xf32> to vector<32x256xf32>
    %166 = arith.mulf %164, %165 : vector<32x256xf32>
    %167 = vector.broadcast %87 : vector<1x256xf32> to vector<32x256xf32>
    %168 = arith.addf %166, %167 : vector<32x256xf32>
    %c96 = arith.constant 96 : index
    %c0_68 = arith.constant 0 : index
    %169 = vector.load %arg1[%c96, %c0_68] : memref<512x256xf32, #tpu.memory_space<vmem>>, vector<32x256xf32>
    %170 = tpu.concatenate %169, %169, %169, %169, %169, %169, %169, %169 in 0 : vector<32x256xf32>, vector<32x256xf32>, vector<32x256xf32>, vector<32x256xf32>, vector<32x256xf32>, vector<32x256xf32>, vector<32x256xf32>, vector<32x256xf32> -> vector<256x256xf32>
    %171 = arith.mulf %170, %8 : vector<256x256xf32>
    %cst_69 = arith.constant dense<0.000000e+00> : vector<32x256xf32>
    %172 = tpu.matmul %168, %171, %cst_69 {dimension_numbers = #tpu.dot_dimension_numbers<[1], [0], [0], [1], [0, 0, 1, 1], [], []>} : vector<32x256xf32>, vector<256x256xf32>, vector<32x256xf32> -> vector<32x256xf32>
    %c85 = arith.constant 85 : index
    %c0_70 = arith.constant 0 : index
    %173 = vector.load %arg2[%c85, %c0_70] : memref<96x256xf32, #tpu.memory_space<vmem>>, vector<1x256xf32>
    %174 = vector.broadcast %173 : vector<1x256xf32> to vector<32x256xf32>
    %175 = arith.addf %172, %174 : vector<32x256xf32>
    %176 = math.tanh %175 : vector<32x256xf32>
    %c128 = arith.constant 128 : index
    %c0_71 = arith.constant 0 : index
    %177 = vector.load %arg1[%c128, %c0_71] : memref<512x256xf32, #tpu.memory_space<vmem>>, vector<32x256xf32>
    %178 = tpu.concatenate %177, %177, %177, %177, %177, %177, %177, %177 in 0 : vector<32x256xf32>, vector<32x256xf32>, vector<32x256xf32>, vector<32x256xf32>, vector<32x256xf32>, vector<32x256xf32>, vector<32x256xf32>, vector<32x256xf32> -> vector<256x256xf32>
    %179 = arith.mulf %178, %8 : vector<256x256xf32>
    %cst_72 = arith.constant dense<0.000000e+00> : vector<32x256xf32>
    %180 = tpu.matmul %168, %179, %cst_72 {dimension_numbers = #tpu.dot_dimension_numbers<[1], [0], [0], [1], [0, 0, 1, 1], [], []>} : vector<32x256xf32>, vector<256x256xf32>, vector<32x256xf32> -> vector<32x256xf32>
    %c86 = arith.constant 86 : index
    %c0_73 = arith.constant 0 : index
    %181 = vector.load %arg2[%c86, %c0_73] : memref<96x256xf32, #tpu.memory_space<vmem>>, vector<1x256xf32>
    %182 = vector.broadcast %181 : vector<1x256xf32> to vector<32x256xf32>
    %183 = arith.addf %180, %182 : vector<32x256xf32>
    %184 = arith.negf %183 : vector<32x256xf32>
    %185 = math.exp %184 : vector<32x256xf32>
    %cst_74 = arith.constant 1.000000e+00 : f32
    %186 = vector.broadcast %cst_74 : f32 to vector<32x256xf32>
    %187 = arith.addf %186, %185 : vector<32x256xf32>
    %188 = arith.divf %186, %187 : vector<32x256xf32>
    %189 = arith.mulf %176, %188 : vector<32x256xf32>
    %c160 = arith.constant 160 : index
    %c0_75 = arith.constant 0 : index
    %190 = vector.load %arg1[%c160, %c0_75] : memref<512x256xf32, #tpu.memory_space<vmem>>, vector<32x256xf32>
    %191 = tpu.concatenate %190, %190, %190, %190, %190, %190, %190, %190 in 0 : vector<32x256xf32>, vector<32x256xf32>, vector<32x256xf32>, vector<32x256xf32>, vector<32x256xf32>, vector<32x256xf32>, vector<32x256xf32>, vector<32x256xf32> -> vector<256x256xf32>
    %192 = arith.mulf %191, %8 : vector<256x256xf32>
    %cst_76 = arith.constant dense<0.000000e+00> : vector<32x256xf32>
    %193 = tpu.matmul %189, %192, %cst_76 {dimension_numbers = #tpu.dot_dimension_numbers<[1], [0], [0], [1], [0, 0, 1, 1], [], []>} : vector<32x256xf32>, vector<256x256xf32>, vector<32x256xf32> -> vector<32x256xf32>
    %c87 = arith.constant 87 : index
    %c0_77 = arith.constant 0 : index
    %194 = vector.load %arg2[%c87, %c0_77] : memref<96x256xf32, #tpu.memory_space<vmem>>, vector<1x256xf32>
    %195 = vector.broadcast %194 : vector<1x256xf32> to vector<32x256xf32>
    %196 = arith.addf %193, %195 : vector<32x256xf32>
    %197 = arith.addf %117, %196 : vector<32x256xf32>
    %cst_78 = arith.constant 0.000000e+00 : f32
    %198 = vector.broadcast %cst_78 : f32 to vector<32x256xf32>
    %199 = arith.maximumf %197, %198 : vector<32x256xf32>
    %c480 = arith.constant 480 : index
    %c0_79 = arith.constant 0 : index
    %200 = vector.load %arg1[%c480, %c0_79] : memref<512x256xf32, #tpu.memory_space<vmem>>, vector<32x256xf32>
    %201 = tpu.concatenate %200, %200, %200, %200, %200, %200, %200, %200 in 0 : vector<32x256xf32>, vector<32x256xf32>, vector<32x256xf32>, vector<32x256xf32>, vector<32x256xf32>, vector<32x256xf32>, vector<32x256xf32>, vector<32x256xf32> -> vector<256x256xf32>
    %202 = arith.mulf %201, %8 : vector<256x256xf32>
    %cst_80 = arith.constant dense<0.000000e+00> : vector<32x256xf32>
    %203 = tpu.matmul %199, %202, %cst_80 {dimension_numbers = #tpu.dot_dimension_numbers<[1], [0], [0], [1], [0, 0, 1, 1], [], []>} : vector<32x256xf32>, vector<256x256xf32>, vector<32x256xf32> -> vector<32x256xf32>
    %c91 = arith.constant 91 : index
    %c0_81 = arith.constant 0 : index
    %204 = vector.load %arg2[%c91, %c0_81] : memref<96x256xf32, #tpu.memory_space<vmem>>, vector<1x256xf32>
    %205 = vector.broadcast %204 : vector<1x256xf32> to vector<32x256xf32>
    %206 = arith.addf %203, %205 : vector<32x256xf32>
    %c0_82 = arith.constant 0 : index
    %c0_83 = arith.constant 0 : index
    %207 = vector.load %arg3[%c0_82, %c0_83] : memref<32x256xf32, #tpu.memory_space<vmem>>, vector<32x256xf32>
    tpu.vector_store %arg3[%c0_82, %c0_83], %206 {strides = array<i32>} : memref<32x256xf32, #tpu.memory_space<vmem>>, vector<32x256xf32>,
    return
  }
}

</mosaic_0001>

<llo_original>
// kernel: sthgnn_forward.1
$region0: #{sthgnn_forward.1}
  #allocation0 [shape = 'u32[]', space=smem, size = 0x4, offset = 0x4, fixed_abs, tag = 'smem constant byte address 0x4 - core index']
  #allocation1 [shape = 'u32[144,128]{1,0:T(1,128)}', space=vmem, size = 0x12000, scoped, tag = 'internal scratch']
  %s0 = inlined_call_operand.vmem [shape: f32[32,8], index: 0, kind: input, shape index: {}]
  %s1 = inlined_call_operand.hbm [shape: f32[512,256], index: 1, kind: input, shape index: {}]
  %s2 = inlined_call_operand.hbm [shape: f32[96,256], index: 2, kind: input, shape index: {}]
  %s3 = inlined_call_operand.vmem [shape: f32[32,256], index: 3, kind: output, shape index: {}]
  %s4 = sld [smem:[#allocation0]]
  $region30: #{sthgnn_forward.1} parent=0
    _
  %s6 = ssub.s32 1, %s4
  %s7 = scalar_select 0, %s6, %s4
  $region1: #{sthgnn_forward.1} parent=0
    #allocation2 [shape = 'u8[524288]{0}', space=vmem, size = 0x80000, scoped, tag = 'input window, operand 1, single buffered']
    #allocation3 [shape = 's32[1]{0}', space=sflag, size = 0x4, scoped, tag = 'scoped memory for sthgnn_forward.1']
    #allocation4 [shape = 'u8[98304]{0}', space=vmem, size = 0x18000, scoped, tag = 'input window, operand 2, single buffered']
    #allocation5 [shape = 's32[1]{0}', space=sflag, size = 0x4, scoped, tag = 'scoped memory for sthgnn_forward.1']
    %8 = vsyncpa [#allocation3], 0
    %9 = vsyncpa [#allocation5], 0
    // Predicated region
    $region2: #{sthgnn_forward.1} parent=1 // pred_check
      _
    $region3: #{sthgnn_forward.1} parent=1 // pred_check_branch
      %11 = sbr.rel (0) target = $region5
    $region4: #{sthgnn_forward.1} parent=1 // pred_region
      _
    $region5: #{sthgnn_forward.1} parent=1 // pred_fallthru
      _
    // Predicated region
    $region6: #{sthgnn_forward.1} parent=1 // pred_check
      _
    $region7: #{sthgnn_forward.1} parent=1 // pred_check_branch
      %13 = sbr.rel (0) target = $region9
    $region8: #{sthgnn_forward.1} parent=1 // pred_region
      %s15 = ssub.s32 16384, 16384
      %16 = vsyncadd [#allocation3], %s15
      %s17 = sshll.u32 [#allocation2], 4
      %s18 = int_to_ptr.vmem [resolvable:$true] %s17
      %23 = dma.hbm_to_vmem [thread:$0]  %s1, 16384, %s18, [#allocation3], 256, 256, 16
    $region9: #{sthgnn_forward.1} parent=1 // pred_fallthru
      _
    // Predicated region
    $region10: #{sthgnn_forward.1} parent=1 // pred_check
      _
    $region11: #{sthgnn_forward.1} parent=1 // pred_check_branch
      %25 = sbr.rel (0) target = $region13
    $region12: #{sthgnn_forward.1} parent=1 // pred_region
      %s27 = ssub.s32 3072, 3072
      %28 = vsyncadd [#allocation5], %s27
      %s29 = sshll.u32 [#allocation4], 4
      %s30 = int_to_ptr.vmem [resolvable:$true] %s29
      %35 = dma.hbm_to_vmem [thread:$0]  %s2, 3072, %s30, [#allocation5], 256, 256, 16
    $region13: #{sthgnn_forward.1} parent=1 // pred_fallthru
      _
    // Predicated region
    $region14: #{sthgnn_forward.1} parent=1 // pred_check
      _
    $region15: #{sthgnn_forward.1} parent=1 // pred_check_branch
      %37 = sbr.rel (0) target = $region17
    $region16: #{sthgnn_forward.1} parent=1 // pred_region
      %38 = dma.done [#allocation3], 16384
    $region17: #{sthgnn_forward.1} parent=1 // pred_fallthru
      _
    // Predicated region
    $region18: #{sthgnn_forward.1} parent=1 // pred_check
      _
    $region19: #{sthgnn_forward.1} parent=1 // pred_check_branch
      %40 = sbr.rel (0) target = $region21
    $region20: #{sthgnn_forward.1} parent=1 // pred_region
      %41 = dma.done [#allocation5], 3072
    $region21: #{sthgnn_forward.1} parent=1 // pred_fallthru
      _
    %v42 = vlaneseq
    %v43 = vshrl.u32 %v42, 7
    %v44 = vadd.s32 %v43, 8
    %v45 = vadd.s32 %v43, 16
    %v46 = vadd.s32 %v43, 24
    %v47 = vadd.s32 %v43, 32
    %v48 = vadd.s32 %v43, 40
    %v49 = vadd.s32 %v43, 48
    %v50 = vadd.s32 %v43, 56
    %v51 = vadd.s32 %v43, 64
    %v52 = vadd.s32 %v43, 72
    %v53 = vadd.s32 %v43, 80
    %v54 = vadd.s32 %v43, 88
    %v55 = vadd.s32 %v43, 96
    %v56 = vadd.s32 %v43, 104
    %v57 = vadd.s32 %v43, 112
    %v58 = vadd.s32 %v43, 120
    %v59 = vadd.s32 %v43, 128
    %v60 = vadd.s32 %v43, 136
    %v61 = vadd.s32 %v43, 144
    %v62 = vadd.s32 %v43, 152
    %v63 = vadd.s32 %v43, 160
    %v64 = vadd.s32 %v43, 168
    %v65 = vadd.s32 %v43, 176
    %v66 = vadd.s32 %v43, 184
    %v67 = vadd.s32 %v43, 192
    %v68 = vadd.s32 %v43, 200
    %v69 = vadd.s32 %v43, 208
    %v70 = vadd.s32 %v43, 216
    %v71 = vadd.s32 %v43, 224
    %v72 = vadd.s32 %v43, 232
    %v73 = vadd.s32 %v43, 240
    %v74 = vadd.s32 %v43, 248
    %v75 = vlaneseq
    %v76 = vand.u32 %v75, 127
    %v77 = vadd.s32 %v76, 128
    %v78 = vshra.s32 %v43, 5
    %v79 = vshra.s32 %v44, 5
    %v80 = vshra.s32 %v45, 5
    %v81 = vshra.s32 %v46, 5
    %v82 = vshra.s32 %v47, 5
    %v83 = vshra.s32 %v48, 5
    %v84 = vshra.s32 %v49, 5
    %v85 = vshra.s32 %v50, 5
    %v86 = vshra.s32 %v51, 5
    %v87 = vshra.s32 %v52, 5
    %v88 = vshra.s32 %v53, 5
    %v89 = vshra.s32 %v54, 5
    %v90 = vshra.s32 %v55, 5
    %v91 = vshra.s32 %v56, 5
    %v92 = vshra.s32 %v57, 5
    %v93 = vshra.s32 %v58, 5
    %v94 = vshra.s32 %v59, 5
    %v95 = vshra.s32 %v60, 5
    %v96 = vshra.s32 %v61, 5
    %v97 = vshra.s32 %v62, 5
    %v98 = vshra.s32 %v63, 5
    %v99 = vshra.s32 %v64, 5
    %v100 = vshra.s32 %v65, 5
    %v101 = vshra.s32 %v66, 5
    %v102 = vshra.s32 %v67, 5
    %v103 = vshra.s32 %v68, 5
    %v104 = vshra.s32 %v69, 5
    %v105 = vshra.s32 %v70, 5
    %v106 = vshra.s32 %v71, 5
    %v107 = vshra.s32 %v72, 5
    %v108 = vshra.s32 %v73, 5
    %v109 = vshra.s32 %v74, 5
    %v110 = vshra.s32 %v76, 5
    %v111 = vshra.s32 %v77, 5
    %vm112 = vcmp.eq.s32.totalorder %v78, %v110
    %vm113 = vcmp.eq.s32.totalorder %v78, %v111
    %vm114 = vcmp.eq.s32.totalorder %v79, %v110
    %vm115 = vcmp.eq.s32.totalorder %v79, %v111
    %vm116 = vcmp.eq.s32.totalorder %v80, %v110
    %vm117 = vcmp.eq.s32.totalorder %v80, %v111
    %vm118 = vcmp.eq.s32.totalorder %v81, %v110
    %vm119 = vcmp.eq.s32.totalorder %v81, %v111
    %vm120 = vcmp.eq.s32.totalorder %v82, %v110
    %vm121 = vcmp.eq.s32.totalorder %v82, %v111
    %vm122 = vcmp.eq.s32.totalorder %v83, %v110
    %vm123 = vcmp.eq.s32.totalorder %v83, %v111
    %vm124 = vcmp.eq.s32.totalorder %v84, %v110
    %vm125 = vcmp.eq.s32.totalorder %v84, %v111
    %vm126 = vcmp.eq.s32.totalorder %v85, %v110
    %vm127 = vcmp.eq.s32.totalorder %v85, %v111
    %vm128 = vcmp.eq.s32.totalorder %v86, %v110
    %vm129 = vcmp.eq.s32.totalorder %v86, %v111
    %vm130 = vcmp.eq.s32.totalorder %v87, %v110
    %vm131 = vcmp.eq.s32.totalorder %v87, %v111
    %vm132 = vcmp.eq.s32.totalorder %v88, %v110
    %vm133 = vcmp.eq.s32.totalorder %v88, %v111
    %vm134 = vcmp.eq.s32.totalorder %v89, %v110
    %vm135 = vcmp.eq.s32.totalorder %v89, %v111
    %vm136 = vcmp.eq.s32.totalorder %v90, %v110
    %vm137 = vcmp.eq.s32.totalorder %v90, %v111
    %vm138 = vcmp.eq.s32.totalorder %v91, %v110
    %vm139 = vcmp.eq.s32.totalorder %v91, %v111
    %vm140 = vcmp.eq.s32.totalorder %v92, %v110
    %vm141 = vcmp.eq.s32.totalorder %v92, %v111
    %vm142 = vcmp.eq.s32.totalorder %v93, %v110
    %vm143 = vcmp.eq.s32.totalorder %v93, %v111
    %vm144 = vcmp.eq.s32.totalorder %v94, %v110
    %vm145 = vcmp.eq.s32.totalorder %v94, %v111
    %vm146 = vcmp.eq.s32.totalorder %v95, %v110
    %vm147 = vcmp.eq.s32.totalorder %v95, %v111
    %vm148 = vcmp.eq.s32.totalorder %v96, %v110
    %vm149 = vcmp.eq.s32.totalorder %v96, %v111
    %vm150 = vcmp.eq.s32.totalorder %v97, %v110
    %vm151 = vcmp.eq.s32.totalorder %v97, %v111
    %vm152 = vcmp.eq.s32.totalorder %v98, %v110
    %vm153 = vcmp.eq.s32.totalorder %v98, %v111
    %vm154 = vcmp.eq.s32.totalorder %v99, %v110
    %vm155 = vcmp.eq.s32.totalorder %v99, %v111
    %vm156 = vcmp.eq.s32.totalorder %v100, %v110
    %vm157 = vcmp.eq.s32.totalorder %v100, %v111
    %vm158 = vcmp.eq.s32.totalorder %v101, %v110
    %vm159 = vcmp.eq.s32.totalorder %v101, %v111
    %vm160 = vcmp.eq.s32.totalorder %v102, %v110
    %vm161 = vcmp.eq.s32.totalorder %v102, %v111
    %vm162 = vcmp.eq.s32.totalorder %v103, %v110
    %vm163 = vcmp.eq.s32.totalorder %v103, %v111
    %vm164 = vcmp.eq.s32.totalorder %v104, %v110
    %vm165 = vcmp.eq.s32.totalorder %v104, %v111
    %vm166 = vcmp.eq.s32.totalorder %v105, %v110
    %vm167 = vcmp.eq.s32.totalorder %v105, %v111
    %vm168 = vcmp.eq.s32.totalorder %v106, %v110
    %vm169 = vcmp.eq.s32.totalorder %v106, %v111
    %vm170 = vcmp.eq.s32.totalorder %v107, %v110
    %vm171 = vcmp.eq.s32.totalorder %v107, %v111
    %vm172 = vcmp.eq.s32.totalorder %v108, %v110
    %vm173 = vcmp.eq.s32.totalorder %v108, %v111
    %vm174 = vcmp.eq.s32.totalorder %v109, %v110
    %vm175 = vcmp.eq.s32.totalorder %v109, %v111
    %v176 = vsel %vm112, 1, 0
    %v177 = vsel %vm113, 1, 0
    %v178 = vsel %vm114, 1, 0
    %v179 = vsel %vm115, 1, 0
    %v180 = vsel %vm116, 1, 0
    %v181 = vsel %vm117, 1, 0
    %v182 = vsel %vm118, 1, 0
    %v183 = vsel %vm119, 1, 0
    %v184 = vsel %vm120, 1, 0
    %v185 = vsel %vm121, 1, 0
    %v186 = vsel %vm122, 1, 0
    %v187 = vsel %vm123, 1, 0
    %v188 = vsel %vm124, 1, 0
    %v189 = vsel %vm125, 1, 0
    %v190 = vsel %vm126, 1, 0
    %v191 = vsel %vm127, 1, 0
    %v192 = vsel %vm128, 1, 0
    %v193 = vsel %vm129, 1, 0
    %v194 = vsel %vm130, 1, 0
    %v195 = vsel %vm131, 1, 0
    %v196 = vsel %vm132, 1, 0
    %v197 = vsel %vm133, 1, 0
    %v198 = vsel %vm134, 1, 0
    %v199 = vsel %vm135, 1, 0
    %v200 = vsel %vm136, 1, 0
    %v201 = vsel %vm137, 1, 0
    %v202 = vsel %vm138, 1, 0
    %v203 = vsel %vm139, 1, 0
    %v204 = vsel %vm140, 1, 0
    %v205 = vsel %vm141, 1, 0
    %v206 = vsel %vm142, 1, 0
    %v207 = vsel %vm143, 1, 0
    %v208 = vsel %vm144, 1, 0
    %v209 = vsel %vm145, 1, 0
    %v210 = vsel %vm146, 1, 0
    %v211 = vsel %vm147, 1, 0
    %v212 = vsel %vm148, 1, 0
    %v213 = vsel %vm149, 1, 0
    %v214 = vsel %vm150, 1, 0
    %v215 = vsel %vm151, 1, 0
    %v216 = vsel %vm152, 1, 0
    %v217 = vsel %vm153, 1, 0
    %v218 = vsel %vm154, 1, 0
    %v219 = vsel %vm155, 1, 0
    %v220 = vsel %vm156, 1, 0
    %v221 = vsel %vm157, 1, 0
    %v222 = vsel %vm158, 1, 0
    %v223 = vsel %vm159, 1, 0
    %v224 = vsel %vm160, 1, 0
    %v225 = vsel %vm161, 1, 0
    %v226 = vsel %vm162, 1, 0
    %v227 = vsel %vm163, 1, 0
    %v228 = vsel %vm164, 1, 0
    %v229 = vsel %vm165, 1, 0
    %v230 = vsel %vm166, 1, 0
    %v231 = vsel %vm167, 1, 0
    %v232 = vsel %vm168, 1, 0
    %v233 = vsel %vm169, 1, 0
    %v234 = vsel %vm170, 1, 0
    %v235 = vsel %vm171, 1, 0
    %v236 = vsel %vm172, 1, 0
    %v237 = vsel %vm173, 1, 0
    %v238 = vsel %vm174, 1, 0
    %v239 = vsel %vm175, 1, 0
    %v240 = vcvt.s32.f32 %v176
    %v241 = vcvt.s32.f32 %v177
    %v242 = vcvt.s32.f32 %v178
    %v243 = vcvt.s32.f32 %v179
    %v244 = vcvt.s32.f32 %v180
    %v245 = vcvt.s32.f32 %v181
    %v246 = vcvt.s32.f32 %v182
    %v247 = vcvt.s32.f32 %v183
    %v248 = vcvt.s32.f32 %v184
    %v249 = vcvt.s32.f32 %v185
    %v250 = vcvt.s32.f32 %v186
    %v251 = vcvt.s32.f32 %v187
    %v252 = vcvt.s32.f32 %v188
    %v253 = vcvt.s32.f32 %v189
    %v254 = vcvt.s32.f32 %v190
    %v255 = vcvt.s32.f32 %v191
    %v256 = vcvt.s32.f32 %v192
    %v257 = vcvt.s32.f32 %v193
    %v258 = vcvt.s32.f32 %v194
    %v259 = vcvt.s32.f32 %v195
    %v260 = vcvt.s32.f32 %v196
    %v261 = vcvt.s32.f32 %v197
    %v262 = vcvt.s32.f32 %v198
    %v263 = vcvt.s32.f32 %v199
    %v264 = vcvt.s32.f32 %v200
    %v265 = vcvt.s32.f32 %v201
    %v266 = vcvt.s32.f32 %v202
    %v267 = vcvt.s32.f32 %v203
    %v268 = vcvt.s32.f32 %v204
    %v269 = vcvt.s32.f32 %v205
    %v270 = vcvt.s32.f32 %v206
    %v271 = vcvt.s32.f32 %v207
    %v272 = vcvt.s32.f32 %v208
    %v273 = vcvt.s32.f32 %v209
    %v274 = vcvt.s32.f32 %v210
    %v275 = vcvt.s32.f32 %v211
    %v276 = vcvt.s32.f32 %v212
    %v277 = vcvt.s32.f32 %v213
    %v278 = vcvt.s32.f32 %v214
    %v279 = vcvt.s32.f32 %v215
    %v280 = vcvt.s32.f32 %v216
    %v281 = vcvt.s32.f32 %v217
    %v282 = vcvt.s32.f32 %v218
    %v283 = vcvt.s32.f32 %v219
    %v284 = vcvt.s32.f32 %v220
    %v285 = vcvt.s32.f32 %v221
    %v286 = vcvt.s32.f32 %v222
    %v287 = vcvt.s32.f32 %v223
    %v288 = vcvt.s32.f32 %v224
    %v289 = vcvt.s32.f32 %v225
    %v290 = vcvt.s32.f32 %v226
    %v291 = vcvt.s32.f32 %v227
    %v292 = vcvt.s32.f32 %v228
    %v293 = vcvt.s32.f32 %v229
    %v294 = vcvt.s32.f32 %v230
    %v295 = vcvt.s32.f32 %v231
    %v296 = vcvt.s32.f32 %v232
    %v297 = vcvt.s32.f32 %v233
    %v298 = vcvt.s32.f32 %v234
    %v299 = vcvt.s32.f32 %v235
    %v300 = vcvt.s32.f32 %v236
    %v301 = vcvt.s32.f32 %v237
    %v302 = vcvt.s32.f32 %v238
    %v303 = vcvt.s32.f32 %v239
    %v304 = vld [vmem:[%s0] sm:$0xff]
    %v305 = vld [vmem:[%s0 + $0x8] sm:$0xff]
    %v306 = vld [vmem:[%s0 + $0x10] sm:$0xff]
    %v307 = vld [vmem:[%s0 + $0x18] sm:$0xff]
    %v308 = vld [vmem:[#allocation4 + $0x10] sm:$0xff]
    %v309 = vld [vmem:[#allocation4 + $0xa1] ss:$0 sm:$0xff]
    %vm310 = vcmask 64512
    %v312 = vsel %vm310, %v304, 0
    %v315 = vsel %vm310, %v305, 0
    %v318 = vsel %vm310, %v306, 0
    %v321 = vsel %vm310, %v307, 0
    %323 = vmatprep.subr.mxu0 0.0
    %324 = vmatpush1.msra.mxu0 %v308
    %325 = vmatprep.subr.mxu0 0.0
    %326 = vmatpush1.msra.mxu0 0.0
    %327 = vmatprep.subr.mxu0 0.0
    %328 = vmatpush1.msra.mxu0 0.0
    %329 = vmatprep.subr.mxu0 0.0
    %330 = vmatpush1.msra.mxu0 0.0
    %331 = vmatprep.subr.mxu0 0.0
    %332 = vmatpush1.msra.mxu0 0.0
    %333 = vmatprep.subr.mxu0 0.0
    %334 = vmatpush1.msra.mxu0 0.0
    %335 = vmatprep.subr.mxu0 0.0
    %336 = vmatpush1.msra.mxu0 0.0
    %337 = vmatprep.subr.mxu0 0.0
    %338 = vmatpush1.msra.mxu0 0.0
    %339 = vmatprep.subr.mxu0 0.0
    %340 = vmatpush1.msra.mxu0 0.0
    %341 = vmatprep.subr.mxu0 0.0
    %342 = vmatpush1.msra.mxu0 0.0
    %343 = vmatprep.subr.mxu0 0.0
    %344 = vmatpush1.msra.mxu0 0.0
    %345 = vmatprep.subr.mxu0 0.0
    %346 = vmatpush1.msra.mxu0 0.0
    %347 = vmatprep.subr.mxu0 0.0
    %348 = vmatpush1.msra.mxu0 0.0
    %349 = vmatprep.subr.mxu0 0.0
    %350 = vmatpush1.msra.mxu0 0.0
    %351 = vmatprep.subr.mxu0 0.0
    %352 = vmatpush1.msra.mxu0 0.0
    %353 = vmatprep.subr.mxu0 0.0
    %354 = vmatpush1.msra.mxu0 0.0
    %355 = vmatprep.subr.mxu0 0.0
    %356 = vmatpush1.msra.mxu0 0.0
    %357 = vmatprep.subr.mxu0 0.0
    %358 = vmatpush1.msra.mxu0 0.0
    %359 = vmatprep.subr.mxu0 0.0
    %360 = vmatpush1.msra.mxu0 0.0
    %361 = vmatprep.subr.mxu0 0.0
    %362 = vmatpush1.msra.mxu0 0.0
    %363 = vmatprep.subr.mxu0 0.0
    %364 = vmatpush1.msra.mxu0 0.0
    %365 = vmatprep.subr.mxu0 0.0
    %366 = vmatpush1.msra.mxu0 0.0
    %367 = vmatprep.subr.mxu0 0.0
    %368 = vmatpush1.msra.mxu0 0.0
    %369 = vmatprep.subr.mxu0 0.0
    %370 = vmatpush1.msra.mxu0 0.0
    %371 = vmatprep.subr.mxu0 0.0
    %372 = vmatpush1.msra.mxu0 0.0
    %373 = vmatprep.subr.mxu0 0.0
    %374 = vmatpush1.msra.mxu0 0.0
    %375 = vmatprep.subr.mxu0 0.0
    %376 = vmatpush1.msra.mxu0 0.0
    %377 = vmatprep.subr.mxu0 0.0
    %378 = vmatpush1.msra.mxu0 0.0
    %379 = vmatprep.subr.mxu0 0.0
    %380 = vmatpush1.msra.mxu0 0.0
    %381 = vmatprep.subr.mxu0 0.0
    %382 = vmatpush1.msra.mxu0 0.0
    %383 = vmatprep.subr.mxu0 0.0
    %384 = vmatpush1.msra.mxu0 0.0
    %385 = vmatprep.subr.mxu0 0.0
    %386 = vmatpush1.msra.mxu0 0.0
    %387 = vmatprep.mubr.f32.mxu0 0.0
    %388 = vmatmul.mubr.f32.gmra.mrb[0].mxu0 %v312
    %v389 = vpop.f32.mrb[0].mxu0
    %v390 = vadd.f32 %v309, %v389
    %v391 = vpop.f32.mrb[0].mxu0
    %392 = vmatprep.mubr.f32.mxu0 0.0
    %393 = vmatmul.mubr.f32.gmra.mrb[0].mxu0 %v315
    %v394 = vpop.f32.mrb[0].mxu0
    %v395 = vadd.f32 %v309, %v394
    %v396 = vpop.f32.mrb[0].mxu0
    %397 = vmatprep.mubr.f32.mxu0 0.0
    %398 = vmatmul.mubr.f32.gmra.mrb[0].mxu0 %v318
    %v399 = vpop.f32.mrb[0].mxu0
    %v400 = vadd.f32 %v309, %v399
    %v401 = vpop.f32.mrb[0].mxu0
    %402 = vmatprep.mubr.f32.mxu0 0.0
    %403 = vmatmul.mubr.f32.gmra.mrb[0].mxu0 %v321
    %v404 = vpop.f32.mrb[0].mxu0
    %v405 = vadd.f32 %v309, %v404
    %v406 = vpop.f32.mrb[0].mxu0
    %407 = vdwg.mxu0
    %v408 = vsel %vm310, %v390, -inf
    %409 = vmax.xlane.f32.xlu0 %v408
    %v410 = vpop.xlane.xlu0 %409
    %v411 = vsel %vm310, %v395, -inf
    %412 = vmax.xlane.f32.xlu0 %v411
    %v413 = vpop.xlane.xlu0 %412
    %v414 = vsel %vm310, %v400, -inf
    %415 = vmax.xlane.f32.xlu0 %v414
    %v416 = vpop.xlane.xlu0 %415
    %v417 = vsel %vm310, %v405, -inf
    %418 = vmax.xlane.f32.xlu0 %v417
    %v419 = vpop.xlane.xlu0 %418
    %v420 = vsub.f32 %v390, %v410
    %v421 = vsub.f32 %v395, %v413
    %v422 = vsub.f32 %v400, %v416
    %v423 = vsub.f32 %v405, %v419
    %v424 = vmul.f32 %v420, 1.442695
    %v425 = vpow.pop %v424
    %v426 = vmul.f32 %v421, 1.442695
    %v427 = vpow.pop %v426
    %v428 = vmul.f32 %v422, 1.442695
    %v429 = vpow.pop %v428
    %v430 = vmul.f32 %v423, 1.442695
    %v431 = vpow.pop %v430
    %v432 = vsel %vm310, %v425, 0.0
    %433 = vadd.xlane.f32.xlu0 %v432
    %v434 = vpop.xlane.xlu0 %433
    %v435 = vsel %vm310, %v427, 0.0
    %436 = vadd.xlane.f32.xlu0 %v435
    %v437 = vpop.xlane.xlu0 %436
    %v438 = vsel %vm310, %v429, 0.0
    %439 = vadd.xlane.f32.xlu0 %v438
    %v440 = vpop.xlane.xlu0 %439
    %v441 = vsel %vm310, %v431, 0.0
    %442 = vadd.xlane.f32.xlu0 %v441
    %v443 = vpop.xlane.xlu0 %442
    %v444 = vrcp.pop %v434
    %v445 = vrcp.pop %v437
    %v446 = vrcp.pop %v440
    %v447 = vrcp.pop %v443
    %v448 = vmul.f32 %v425, %v444
    %v449 = vmul.f32 %v427, %v445
    %v450 = vmul.f32 %v429, %v446
    %v451 = vmul.f32 %v431, %v447
    %v452 = vld [vmem:[#allocation4 + $0x60] sm:$0xff]
    %v453 = vld [vmem:[#allocation4 + $0x70] sm:$0xff]
    %v454 = vld [vmem:[#allocation4 + $0x80] sm:$0xff]
    %v455 = vld [vmem:[#allocation4 + $0x90] sm:$0xff]
    %v456 = vld [vmem:[#allocation4 + $0x20] sm:$0xff]
    %v457 = vld [vmem:[#allocation4 + $0x30] sm:$0xff]
    %v458 = vld [vmem:[#allocation4 + $0x40] sm:$0xff]
    %v459 = vld [vmem:[#allocation4 + $0x50] sm:$0xff]
    %v460 = vsel %vm310, %v448, 0.0
    %461 = vadd.xlane.f32.xlu0 %v460
    %v462 = vpop.xlane.xlu0 %461
    %v463 = vsel %vm310, %v449, 0.0
    %464 = vadd.xlane.f32.xlu0 %v463
    %v465 = vpop.xlane.xlu0 %464
    %v466 = vsel %vm310, %v450, 0.0
    %467 = vadd.xlane.f32.xlu0 %v466
    %v468 = vpop.xlane.xlu0 %467
    %v469 = vsel %vm310, %v451, 0.0
    %470 = vadd.xlane.f32.xlu0 %v469
    %v471 = vpop.xlane.xlu0 %470
    %vm472 = vcmp.gt.f32.partialorder %v462, 0.0
    %vm473 = vcmp.gt.f32.partialorder %v465, 0.0
    %vm474 = vcmp.gt.f32.partialorder %v468, 0.0
    %vm475 = vcmp.gt.f32.partialorder %v471, 0.0
    %v476 = vadd.f32 %v462, 1e-08
    %v477 = vadd.f32 %v465, 1e-08
    %v478 = vadd.f32 %v468, 1e-08
    %v479 = vadd.f32 %v471, 1e-08
    %v480 = vrcp.pop %v476
    %v481 = vmul.f32 1.0, %v480
    %v482 = vrcp.pop %v477
    %v483 = vmul.f32 1.0, %v482
    %v484 = vrcp.pop %v478
    %v485 = vmul.f32 1.0, %v484
    %v486 = vrcp.pop %v479
    %v487 = vmul.f32 1.0, %v486
    %v488 = vsel %vm472, %v481, 0.0
    %v489 = vsel %vm473, %v483, 0.0
    %v490 = vsel %vm474, %v485, 0.0
    %v491 = vsel %vm475, %v487, 0.0
    %vm492 = vcmask 261120
    %v494 = vsel %vm492, %v452, 0
    %v497 = vsel %vm492, %v453, 0
    %v500 = vsel %vm492, %v454, 0
    %v503 = vsel %vm492, %v455, 0
    %505 = vmatprep.subr.mxu0 0.0
    %506 = vmatpush1.msra.mxu0 %v448
    %507 = vmatprep.subr.mxu0 0.0
    %508 = vmatpush1.msra.mxu0 %v449
    %509 = vmatprep.subr.mxu0 0.0
    %510 = vmatpush1.msra.mxu0 %v450
    %511 = vmatprep.subr.mxu0 0.0
    %512 = vmatpush1.msra.mxu0 %v451
    %513 = vmatprep.subr.mxu0 0.0
    %514 = vmatpush1.msra.mxu0 0.0
    %515 = vmatprep.subr.mxu0 0.0
    %516 = vmatpush1.msra.mxu0 0.0
    %517 = vmatprep.subr.mxu0 0.0
    %518 = vmatpush1.msra.mxu0 0.0
    %519 = vmatprep.subr.mxu0 0.0
    %520 = vmatpush1.msra.mxu0 0.0
    %521 = vmatprep.subr.mxu0 0.0
    %522 = vmatpush1.msra.mxu0 0.0
    %523 = vmatprep.subr.mxu0 0.0
    %524 = vmatpush1.msra.mxu0 0.0
    %525 = vmatprep.subr.mxu0 0.0
    %526 = vmatpush1.msra.mxu0 0.0
    %527 = vmatprep.subr.mxu0 0.0
    %528 = vmatpush1.msra.mxu0 0.0
    %529 = vmatprep.subr.mxu0 0.0
    %530 = vmatpush1.msra.mxu0 0.0
    %531 = vmatprep.subr.mxu0 0.0
    %532 = vmatpush1.msra.mxu0 0.0
    %533 = vmatprep.subr.mxu0 0.0
    %534 = vmatpush1.msra.mxu0 0.0
    %535 = vmatprep.subr.mxu0 0.0
    %536 = vmatpush1.msra.mxu0 0.0
    %537 = vmatprep.subr.mxu0 0.0
    %538 = vmatpush1.msra.mxu0 0.0
    %539 = vmatprep.subr.mxu0 0.0
    %540 = vmatpush1.msra.mxu0 0.0
    %541 = vmatprep.subr.mxu0 0.0
    %542 = vmatpush1.msra.mxu0 0.0
    %543 = vmatprep.subr.mxu0 0.0
    %544 = vmatpush1.msra.mxu0 0.0
    %545 = vmatprep.subr.mxu0 0.0
    %546 = vmatpush1.msra.mxu0 0.0
    %547 = vmatprep.subr.mxu0 0.0
    %548 = vmatpush1.msra.mxu0 0.0
    %549 = vmatprep.subr.mxu0 0.0
    %550 = vmatpush1.msra.mxu0 0.0
    %551 = vmatprep.subr.mxu0 0.0
    %552 = vmatpush1.msra.mxu0 0.0
    %553 = vmatprep.subr.mxu0 0.0
    %554 = vmatpush1.msra.mxu0 0.0
    %555 = vmatprep.subr.mxu0 0.0
    %556 = vmatpush1.msra.mxu0 0.0
    %557 = vmatprep.subr.mxu0 0.0
    %558 = vmatpush1.msra.mxu0 0.0
    %559 = vmatprep.subr.mxu0 0.0
    %560 = vmatpush1.msra.mxu0 0.0
    %561 = vmatprep.subr.mxu0 0.0
    %562 = vmatpush1.msra.mxu0 0.0
    %563 = vmatprep.subr.mxu0 0.0
    %564 = vmatpush1.msra.mxu0 0.0
    %565 = vmatprep.subr.mxu0 0.0
    %566 = vmatpush1.msra.mxu0 0.0
    %567 = vmatprep.subr.mxu0 0.0
    %568 = vmatpush1.msra.mxu0 0.0
    %569 = vmatprep.mubr.f32.mxu0 0.0
    %570 = vmatmul.mubr.f32.gmra.mrb[0].mxu0 %v494
    %v571 = vpop.f32.mrb[0].mxu0
    %v572 = vadd.f32 0.0, %v571
    %v573 = vpop.f32.mrb[0].mxu0
    %574 = vmatprep.mubr.f32.mxu0 0.0
    %575 = vmatmul.mubr.f32.gmra.mrb[0].mxu0 %v497
    %v576 = vpop.f32.mrb[0].mxu0
    %v577 = vadd.f32 0.0, %v576
    %v578 = vpop.f32.mrb[0].mxu0
    %579 = vmatprep.mubr.f32.mxu0 0.0
    %580 = vmatmul.mubr.f32.gmra.mrb[0].mxu0 %v500
    %v581 = vpop.f32.mrb[0].mxu0
    %v582 = vadd.f32 0.0, %v581
    %v583 = vpop.f32.mrb[0].mxu0
    %584 = vmatprep.mubr.f32.mxu0 0.0
    %585 = vmatmul.mubr.f32.gmra.mrb[0].mxu0 %v503
    %v586 = vpop.f32.mrb[0].mxu0
    %v587 = vadd.f32 0.0, %v586
    %v588 = vpop.f32.mrb[0].mxu0
    %589 = vdwg.mxu0
    %vm590 = vcmp.gt.f32.partialorder %v572, 0.0
    %vm591 = vcmp.gt.f32.partialorder %v577, 0.0
    %vm592 = vcmp.gt.f32.partialorder %v582, 0.0
    %vm593 = vcmp.gt.f32.partialorder %v587, 0.0
    %v594 = vadd.f32 %v572, 1e-08
    %v595 = vadd.f32 %v577, 1e-08
    %v596 = vadd.f32 %v582, 1e-08
    %v597 = vadd.f32 %v587, 1e-08
    %v598 = vrcp.pop %v594
    %v599 = vmul.f32 1.0, %v598
    %v600 = vrcp.pop %v595
    %v601 = vmul.f32 1.0, %v600
    %v602 = vrcp.pop %v596
    %v603 = vmul.f32 1.0, %v602
    %v604 = vrcp.pop %v597
    %v605 = vmul.f32 1.0, %v604
    %v606 = vsel %vm590, %v599, 0.0
    %v607 = vsel %vm591, %v601, 0.0
    %v608 = vsel %vm592, %v603, 0.0
    %v609 = vsel %vm593, %v605, 0.0
    %v610 = vmul.f32 %v488, %v448
    %v611 = vmul.f32 %v489, %v449
    %v612 = vmul.f32 %v490, %v450
    %v613 = vmul.f32 %v491, %v451
    %v614 = vmul.f32 %v606, %v448
    %v615 = vmul.f32 %v607, %v449
    %v616 = vmul.f32 %v608, %v450
    %v617 = vmul.f32 %v609, %v451
    %v619 = vsel %vm310, %v610, 0
    %v622 = vsel %vm310, %v611, 0
    %v625 = vsel %vm310, %v612, 0
    %v628 = vsel %vm310, %v613, 0
    %v631 = vsel %vm310, %v614, 0
    %v634 = vsel %vm310, %v615, 0
    %v637 = vsel %vm310, %v616, 0
    %v640 = vsel %vm310, %v617, 0
    %642 = vmatprep.subr.mxu0 0.0
    %643 = vmatpush1.xpose.msra.mxu0 %v631
    %644 = vmatprep.subr.mxu0 0.0
    %645 = vmatpush1.xpose.msra.mxu0 %v634
    %646 = vmatprep.subr.mxu0 0.0
    %647 = vmatpush1.xpose.msra.mxu0 %v637
    %648 = vmatprep.subr.mxu0 0.0
    %649 = vmatpush1.xpose.msra.mxu0 %v640
    %650 = vmatprep.subr.mxu0 0.0
    %651 = vmatpush1.xpose.msra.mxu0 0.0
    %652 = vmatprep.subr.mxu0 0.0
    %653 = vmatpush1.xpose.msra.mxu0 0.0
    %654 = vmatprep.subr.mxu0 0.0
    %655 = vmatpush1.xpose.msra.mxu0 0.0
    %656 = vmatprep.subr.mxu0 0.0
    %657 = vmatpush1.xpose.msra.mxu0 0.0
    %658 = vmatprep.subr.mxu0 0.0
    %659 = vmatpush1.xpose.msra.mxu0 0.0
    %660 = vmatprep.subr.mxu0 0.0
    %661 = vmatpush1.xpose.msra.mxu0 0.0
    %662 = vmatprep.subr.mxu0 0.0
    %663 = vmatpush1.xpose.msra.mxu0 0.0
    %664 = vmatprep.subr.mxu0 0.0
    %665 = vmatpush1.xpose.msra.mxu0 0.0
    %666 = vmatprep.subr.mxu0 0.0
    %667 = vmatpush1.xpose.msra.mxu0 0.0
    %668 = vmatprep.subr.mxu0 0.0
    %669 = vmatpush1.xpose.msra.mxu0 0.0
    %670 = vmatprep.subr.mxu0 0.0
    %671 = vmatpush1.xpose.msra.mxu0 0.0
    %672 = vmatprep.subr.mxu0 0.0
    %673 = vmatpush1.xpose.msra.mxu0 0.0
    %674 = vmatprep.subr.mxu0 0.0
    %675 = vmatpush1.xpose.msra.mxu0 0.0
    %676 = vmatprep.subr.mxu0 0.0
    %677 = vmatpush1.xpose.msra.mxu0 0.0
    %678 = vmatprep.subr.mxu0 0.0
    %679 = vmatpush1.xpose.msra.mxu0 0.0
    %680 = vmatprep.subr.mxu0 0.0
    %681 = vmatpush1.xpose.msra.mxu0 0.0
    %682 = vmatprep.subr.mxu0 0.0
    %683 = vmatpush1.xpose.msra.mxu0 0.0
    %684 = vmatprep.subr.mxu0 0.0
    %685 = vmatpush1.xpose.msra.mxu0 0.0
    %686 = vmatprep.subr.mxu0 0.0
    %687 = vmatpush1.xpose.msra.mxu0 0.0
    %688 = vmatprep.subr.mxu0 0.0
    %689 = vmatpush1.xpose.msra.mxu0 0.0
    %690 = vmatprep.subr.mxu0 0.0
    %691 = vmatpush1.xpose.msra.mxu0 0.0
    %692 = vmatprep.subr.mxu0 0.0
    %693 = vmatpush1.xpose.msra.mxu0 0.0
    %694 = vmatprep.subr.mxu0 0.0
    %695 = vmatpush1.xpose.msra.mxu0 0.0
    %696 = vmatprep.subr.mxu0 0.0
    %697 = vmatpush1.xpose.msra.mxu0 0.0
    %698 = vmatprep.subr.mxu0 0.0
    %699 = vmatpush1.xpose.msra.mxu0 0.0
    %700 = vmatprep.subr.mxu0 0.0
    %701 = vmatpush1.xpose.msra.mxu0 0.0
    %702 = vmatprep.subr.mxu0 0.0
    %703 = vmatpush1.xpose.msra.mxu0 0.0
    %704 = vmatprep.subr.mxu0 0.0
    %705 = vmatpush1.xpose.msra.mxu0 0.0
    %706 = vmatprep.mubr.f32.mxu0 0.0
    %707 = vmatmul.mubr.f32.gmra.mrb[0].mxu0 %v619
    %v708 = vpop.f32.mrb[0].mxu0
    %v709 = vadd.f32 0.0, %v708
    %v710 = vpop.f32.mrb[0].mxu0
    %711 = vmatprep.mubr.f32.mxu0 0.0
    %712 = vmatmul.mubr.f32.gmra.mrb[0].mxu0 %v622
    %v713 = vpop.f32.mrb[0].mxu0
    %v714 = vadd.f32 0.0, %v713
    %v715 = vpop.f32.mrb[0].mxu0
    %716 = vmatprep.mubr.f32.mxu0 0.0
    %717 = vmatmul.mubr.f32.gmra.mrb[0].mxu0 %v625
    %v718 = vpop.f32.mrb[0].mxu0
    %v719 = vadd.f32 0.0, %v718
    %v720 = vpop.f32.mrb[0].mxu0
    %721 = vmatprep.mubr.f32.mxu0 0.0
    %722 = vmatmul.mubr.f32.gmra.mrb[0].mxu0 %v628
    %v723 = vpop.f32.mrb[0].mxu0
    %v724 = vadd.f32 0.0, %v723
    %v725 = vpop.f32.mrb[0].mxu0
    %726 = vdwg.mxu0
    %v727 = vmul.f32 %v452, %v709
    %v728 = vmul.f32 %v453, %v714
    %v729 = vmul.f32 %v454, %v719
    %v730 = vmul.f32 %v455, %v724
    %v731 = vld [vmem:[#allocation4] sm:$0xff]
    %v732 = vld [vmem:[#allocation4 + $0x8] sm:$0xff]
    %s733 = scalar_lea.vmem [#allocation4], 160
    %v734 = vld [vmem:[%s733] ss:$8 sm:$0x3]
    %v736 = vlaneseq
    %v737 = vshrl.u32 %v736, 7
    %v738 = vsub.s32 0, %v737
    %v739 = vrot.slane %v734, %v738
    %v740 = vlaneseq
    %v741 = vshrl.u32 %v740, 7
    %v742 = vsub.s32 1, %v741
    %v743 = vrot.slane %v734, %v742
    %746 = vmatprep.subr.mxu0 %v732
    %747 = vmatpush1.msra.mxu0 %v731
    %748 = vmatprep.subr.mxu0 0.0
    %749 = vmatpush1.msra.mxu0 0.0
    %750 = vmatprep.subr.mxu0 0.0
    %751 = vmatpush1.msra.mxu0 0.0
    %752 = vmatprep.subr.mxu0 0.0
    %753 = vmatpush1.msra.mxu0 0.0
    %754 = vmatprep.subr.mxu0 0.0
    %755 = vmatpush1.msra.mxu0 0.0
    %756 = vmatprep.subr.mxu0 0.0
    %757 = vmatpush1.msra.mxu0 0.0
    %758 = vmatprep.subr.mxu0 0.0
    %759 = vmatpush1.msra.mxu0 0.0
    %760 = vmatprep.subr.mxu0 0.0
    %761 = vmatpush1.msra.mxu0 0.0
    %762 = vmatprep.subr.mxu0 0.0
    %763 = vmatpush1.msra.mxu0 0.0
    %764 = vmatprep.subr.mxu0 0.0
    %765 = vmatpush1.msra.mxu0 0.0
    %766 = vmatprep.subr.mxu0 0.0
    %767 = vmatpush1.msra.mxu0 0.0
    %768 = vmatprep.subr.mxu0 0.0
    %769 = vmatpush1.msra.mxu0 0.0
    %770 = vmatprep.subr.mxu0 0.0
    %771 = vmatpush1.msra.mxu0 0.0
    %772 = vmatprep.subr.mxu0 0.0
    %773 = vmatpush1.msra.mxu0 0.0
    %774 = vmatprep.subr.mxu0 0.0
    %775 = vmatpush1.msra.mxu0 0.0
    %776 = vmatprep.subr.mxu0 0.0
    %777 = vmatpush1.msra.mxu0 0.0
    %778 = vmatprep.subr.mxu0 0.0
    %779 = vmatpush1.msra.mxu0 0.0
    %780 = vmatprep.subr.mxu0 0.0
    %781 = vmatpush1.msra.mxu0 0.0
    %782 = vmatprep.subr.mxu0 0.0
    %783 = vmatpush1.msra.mxu0 0.0
    %784 = vmatprep.subr.mxu0 0.0
    %785 = vmatpush1.msra.mxu0 0.0
    %786 = vmatprep.subr.mxu0 0.0
    %787 = vmatpush1.msra.mxu0 0.0
    %788 = vmatprep.subr.mxu0 0.0
    %789 = vmatpush1.msra.mxu0 0.0
    %790 = vmatprep.subr.mxu0 0.0
    %791 = vmatpush1.msra.mxu0 0.0
    %792 = vmatprep.subr.mxu0 0.0
    %793 = vmatpush1.msra.mxu0 0.0
    %794 = vmatprep.subr.mxu0 0.0
    %795 = vmatpush1.msra.mxu0 0.0
    %796 = vmatprep.subr.mxu0 0.0
    %797 = vmatpush1.msra.mxu0 0.0
    %798 = vmatprep.subr.mxu0 0.0
    %799 = vmatpush1.msra.mxu0 0.0
    %800 = vmatprep.subr.mxu0 0.0
    %801 = vmatpush1.msra.mxu0 0.0
    %802 = vmatprep.subr.mxu0 0.0
    %803 = vmatpush1.msra.mxu0 0.0
    %804 = vmatprep.subr.mxu0 0.0
    %805 = vmatpush1.msra.mxu0 0.0
    %806 = vmatprep.subr.mxu0 0.0
    %807 = vmatpush1.msra.mxu0 0.0
    %808 = vmatprep.subr.mxu0 0.0
    %809 = vmatpush1.msra.mxu0 0.0
    %810 = vmatprep.mubr.f32.mxu0 0.0
    %811 = vmatmul.mubr.f32.gmra.mrb[0].mxu0 %v312
    %v812 = vpop.f32.mrb[0].mxu0
    %v813 = vadd.f32 %v739, %v812
    %v814 = vpop.f32.mrb[0].mxu0
    %v815 = vadd.f32 %v743, %v814
    %816 = vmatprep.mubr.f32.mxu0 0.0
    %817 = vmatmul.mubr.f32.gmra.mrb[0].mxu0 %v315
    %v818 = vpop.f32.mrb[0].mxu0
    %v819 = vadd.f32 %v739, %v818
    %v820 = vpop.f32.mrb[0].mxu0
    %v821 = vadd.f32 %v743, %v820
    %822 = vmatprep.mubr.f32.mxu0 0.0
    %823 = vmatmul.mubr.f32.gmra.mrb[0].mxu0 %v318
    %v824 = vpop.f32.mrb[0].mxu0
    %v825 = vadd.f32 %v739, %v824
    %v826 = vpop.f32.mrb[0].mxu0
    %v827 = vadd.f32 %v743, %v826
    %828 = vmatprep.mubr.f32.mxu0 0.0
    %829 = vmatmul.mubr.f32.gmra.mrb[0].mxu0 %v321
    %v830 = vpop.f32.mrb[0].mxu0
    %v831 = vadd.f32 %v739, %v830
    %v832 = vpop.f32.mrb[0].mxu0
    %v833 = vadd.f32 %v743, %v832
    %834 = vdwg.mxu0
    %v835 = vld [vmem:[#allocation2 + $0x180] sm:$0xff]
    %v836 = vld [vmem:[#allocation2 + $0x188] sm:$0xff]
    %v837 = vld [vmem:[#allocation2 + $0x190] sm:$0xff]
    %v838 = vld [vmem:[#allocation2 + $0x198] sm:$0xff]
    %v839 = vld [vmem:[#allocation2 + $0x1a0] sm:$0xff]
    %v840 = vld [vmem:[#allocation2 + $0x1a8] sm:$0xff]
    %v841 = vld [vmem:[#allocation2 + $0x1b0] sm:$0xff]
    %v842 = vld [vmem:[#allocation2 + $0x1b8] sm:$0xff]
    %v843 = vmul.f32 %v835, %v240
    %v844 = vmul.f32 %v836, %v241
    %v845 = vmul.f32 %v837, %v242
    %v846 = vmul.f32 %v838, %v243
    %v847 = vmul.f32 %v839, %v244
    %v848 = vmul.f32 %v840, %v245
    %v849 = vmul.f32 %v841, %v246
    %v850 = vmul.f32 %v842, %v247
    %v851 = vmul.f32 %v835, %v248
    %v852 = vmul.f32 %v836, %v249
    %v853 = vmul.f32 %v837, %v250
    %v854 = vmul.f32 %v838, %v251
    %v855 = vmul.f32 %v839, %v252
    %v856 = vmul.f32 %v840, %v253
    %v857 = vmul.f32 %v841, %v254
    %v858 = vmul.f32 %v842, %v255
    %v859 = vmul.f32 %v835, %v256
    %v860 = vmul.f32 %v836, %v257
    %v861 = vmul.f32 %v837, %v258
    %v862 = vmul.f32 %v838, %v259
    %v863 = vmul.f32 %v839, %v260
    %v864 = vmul.f32 %v840, %v261
    %v865 = vmul.f32 %v841, %v262
    %v866 = vmul.f32 %v842, %v263
    %v867 = vmul.f32 %v835, %v264
    %v868 = vmul.f32 %v836, %v265
    %v869 = vmul.f32 %v837, %v266
    %v870 = vmul.f32 %v838, %v267
    %v871 = vmul.f32 %v839, %v268
    %v872 = vmul.f32 %v840, %v269
    %v873 = vmul.f32 %v841, %v270
    %v874 = vmul.f32 %v842, %v271
    %v875 = vmul.f32 %v835, %v272
    %v876 = vmul.f32 %v836, %v273
    %v877 = vmul.f32 %v837, %v274
    %v878 = vmul.f32 %v838, %v275
    %v879 = vmul.f32 %v839, %v276
    %v880 = vmul.f32 %v840, %v277
    %v881 = vmul.f32 %v841, %v278
    %v882 = vmul.f32 %v842, %v279
    %v883 = vmul.f32 %v835, %v280
    %v884 = vmul.f32 %v836, %v281
    %v885 = vmul.f32 %v837, %v282
    %v886 = vmul.f32 %v838, %v283
    %v887 = vmul.f32 %v839, %v284
    %v888 = vmul.f32 %v840, %v285
    %v889 = vmul.f32 %v841, %v286
    %v890 = vmul.f32 %v842, %v287
    %v891 = vmul.f32 %v835, %v288
    %v892 = vmul.f32 %v836, %v289
    %v893 = vmul.f32 %v837, %v290
    %v894 = vmul.f32 %v838, %v291
    %v895 = vmul.f32 %v839, %v292
    %v896 = vmul.f32 %v840, %v293
    %v897 = vmul.f32 %v841, %v294
    %v898 = vmul.f32 %v842, %v295
    %v899 = vmul.f32 %v835, %v296
    %v900 = vmul.f32 %v836, %v297
    %v901 = vmul.f32 %v837, %v298
    %v902 = vmul.f32 %v838, %v299
    %v903 = vmul.f32 %v839, %v300
    %v904 = vmul.f32 %v840, %v301
    %v905 = vmul.f32 %v841, %v302
    %v906 = vmul.f32 %v842, %v303
    %v907 = vld [vmem:[#allocation2 + $0x1c0] sm:$0xff]
    %v908 = vld [vmem:[#allocation2 + $0x1c8] sm:$0xff]
    %v909 = vld [vmem:[#allocation2 + $0x1d0] sm:$0xff]
    %v910 = vld [vmem:[#allocation2 + $0x1d8] sm:$0xff]
    %v911 = vld [vmem:[#allocation2 + $0x1e0] sm:$0xff]
    %v912 = vld [vmem:[#allocation2 + $0x1e8] sm:$0xff]
    %v913 = vld [vmem:[#allocation2 + $0x1f0] sm:$0xff]
    %v914 = vld [vmem:[#allocation2 + $0x1f8] sm:$0xff]
    %v915 = vmul.f32 %v907, %v240
    %v916 = vmul.f32 %v908, %v241
    %v917 = vmul.f32 %v909, %v242
    %v918 = vmul.f32 %v910, %v243
    %v919 = vmul.f32 %v911, %v244
    %v920 = vmul.f32 %v912, %v245
    %v921 = vmul.f32 %v913, %v246
    %v922 = vmul.f32 %v914, %v247
    %v923 = vmul.f32 %v907, %v248
    %v924 = vmul.f32 %v908, %v249
    %v925 = vmul.f32 %v909, %v250
    %v926 = vmul.f32 %v910, %v251
    %v927 = vmul.f32 %v911, %v252
    %v928 = vmul.f32 %v912, %v253
    %v929 = vmul.f32 %v913, %v254
    %v930 = vmul.f32 %v914, %v255
    %v931 = vmul.f32 %v907, %v256
    %v932 = vmul.f32 %v908, %v257
    %v933 = vmul.f32 %v909, %v258
    %v934 = vmul.f32 %v910, %v259
    %v935 = vmul.f32 %v911, %v260
    %v936 = vmul.f32 %v912, %v261
    %v937 = vmul.f32 %v913, %v262
    %v938 = vmul.f32 %v914, %v263
    %v939 = vmul.f32 %v907, %v264
    %v940 = vmul.f32 %v908, %v265
    %v941 = vmul.f32 %v909, %v266
    %v942 = vmul.f32 %v910, %v267
    %v943 = vmul.f32 %v911, %v268
    %v944 = vmul.f32 %v912, %v269
    %v945 = vmul.f32 %v913, %v270
    %v946 = vmul.f32 %v914, %v271
    %v947 = vmul.f32 %v907, %v272
    %v948 = vmul.f32 %v908, %v273
    %v949 = vmul.f32 %v909, %v274
    %v950 = vmul.f32 %v910, %v275
    %v951 = vmul.f32 %v911, %v276
    %v952 = vmul.f32 %v912, %v277
    %v953 = vmul.f32 %v913, %v278
    %v954 = vmul.f32 %v914, %v279
    %v955 = vmul.f32 %v907, %v280
    %v956 = vmul.f32 %v908, %v281
    %v957 = vmul.f32 %v909, %v282
    %v958 = vmul.f32 %v910, %v283
    %v959 = vmul.f32 %v911, %v284
    %v960 = vmul.f32 %v912, %v285
    %v961 = vmul.f32 %v913, %v286
    %v962 = vmul.f32 %v914, %v287
    %v963 = vmul.f32 %v907, %v288
    %v964 = vmul.f32 %v908, %v289
    %v965 = vmul.f32 %v909, %v290
    %v966 = vmul.f32 %v910, %v291
    %v967 = vmul.f32 %v911, %v292
    %v968 = vmul.f32 %v912, %v293
    %v969 = vmul.f32 %v913, %v294
    %v970 = vmul.f32 %v914, %v295
    %v971 = vmul.f32 %v907, %v296
    %v972 = vmul.f32 %v908, %v297
    %v973 = vmul.f32 %v909, %v298
    %v974 = vmul.f32 %v910, %v299
    %v975 = vmul.f32 %v911, %v300
    %v976 = vmul.f32 %v912, %v301
    %v977 = vmul.f32 %v913, %v302
    %v978 = vmul.f32 %v914, %v303
    %v979 = vld [vmem:[#allocation2 + $0x200] sm:$0xff]
    %v980 = vld [vmem:[#allocation2 + $0x208] sm:$0xff]
    %v981 = vld [vmem:[#allocation2 + $0x210] sm:$0xff]
    %v982 = vld [vmem:[#allocation2 + $0x218] sm:$0xff]
    %v983 = vld [vmem:[#allocation2 + $0x220] sm:$0xff]
    %v984 = vld [vmem:[#allocation2 + $0x228] sm:$0xff]
    %v985 = vld [vmem:[#allocation2 + $0x230] sm:$0xff]
    %v986 = vld [vmem:[#allocation2 + $0x238] sm:$0xff]
    %v987 = vmul.f32 %v979, %v240
    %v988 = vmul.f32 %v980, %v241
    %v989 = vmul.f32 %v981, %v242
    %v990 = vmul.f32 %v982, %v243
    %v991 = vmul.f32 %v983, %v244
    %v992 = vmul.f32 %v984, %v245
    %v993 = vmul.f32 %v985, %v246
    %v994 = vmul.f32 %v986, %v247
    %v995 = vmul.f32 %v979, %v248
    %v996 = vmul.f32 %v980, %v249
    %v997 = vmul.f32 %v981, %v250
    %v998 = vmul.f32 %v982, %v251
    %v999 = vmul.f32 %v983, %v252
    %v1000 = vmul.f32 %v984, %v253
    %v1001 = vmul.f32 %v985, %v254
    %v1002 = vmul.f32 %v986, %v255
    %v1003 = vmul.f32 %v979, %v256
    %v1004 = vmul.f32 %v980, %v257
    %v1005 = vmul.f32 %v981, %v258
    %v1006 = vmul.f32 %v982, %v259
    %v1007 = vmul.f32 %v983, %v260
    %v1008 = vmul.f32 %v984, %v261
    %v1009 = vmul.f32 %v985, %v262
    %v1010 = vmul.f32 %v986, %v263
    %v1011 = vmul.f32 %v979, %v264
    %v1012 = vmul.f32 %v980, %v265
    %v1013 = vmul.f32 %v981, %v266
    %v1014 = vmul.f32 %v982, %v267
    %v1015 = vmul.f32 %v983, %v268
    %v1016 = vmul.f32 %v984, %v269
    %v1017 = vmul.f32 %v985, %v270
    %v1018 = vmul.f32 %v986, %v271
    %v1019 = vmul.f32 %v979, %v272
    %v1020 = vmul.f32 %v980, %v273
    %v1021 = vmul.f32 %v981, %v274
    %v1022 = vmul.f32 %v982, %v275
    %v1023 = vmul.f32 %v983, %v276
    %v1024 = vmul.f32 %v984, %v277
    %v1025 = vmul.f32 %v985, %v278
    %v1026 = vmul.f32 %v986, %v279
    %v1027 = vmul.f32 %v979, %v280
    %v1028 = vmul.f32 %v980, %v281
    %v1029 = vmul.f32 %v981, %v282
    %v1030 = vmul.f32 %v982, %v283
    %v1031 = vmul.f32 %v983, %v284
    %v1032 = vmul.f32 %v984, %v285
    %v1033 = vmul.f32 %v985, %v286
    %v1034 = vmul.f32 %v986, %v287
    %v1035 = vmul.f32 %v979, %v288
    %v1036 = vmul.f32 %v980, %v289
    %v1037 = vmul.f32 %v981, %v290
    %v1038 = vmul.f32 %v982, %v291
    %v1039 = vmul.f32 %v983, %v292
    %v1040 = vmul.f32 %v984, %v293
    %v1041 = vmul.f32 %v985, %v294
    %v1042 = vmul.f32 %v986, %v295
    %v1043 = vmul.f32 %v979, %v296
    %v1044 = vmul.f32 %v980, %v297
    %v1045 = vmul.f32 %v981, %v298
    %v1046 = vmul.f32 %v982, %v299
    %v1047 = vmul.f32 %v983, %v300
    %v1048 = vmul.f32 %v984, %v301
    %v1049 = vmul.f32 %v985, %v302
    %v1050 = vmul.f32 %v986, %v303
    %v1051 = vld [vmem:[#allocation2 + $0x240] sm:$0xff]
    %v1052 = vld [vmem:[#allocation2 + $0x248] sm:$0xff]
    %v1053 = vld [vmem:[#allocation2 + $0x250] sm:$0xff]
    %v1054 = vld [vmem:[#allocation2 + $0x258] sm:$0xff]
    %v1055 = vld [vmem:[#allocation2 + $0x260] sm:$0xff]
    %v1056 = vld [vmem:[#allocation2 + $0x268] sm:$0xff]
    %v1057 = vld [vmem:[#allocation2 + $0x270] sm:$0xff]
    %v1058 = vld [vmem:[#allocation2 + $0x278] sm:$0xff]
    %v1059 = vmul.f32 %v1051, %v240
    %v1060 = vmul.f32 %v1052, %v241
    %v1061 = vmul.f32 %v1053, %v242
    %v1062 = vmul.f32 %v1054, %v243
    %v1063 = vmul.f32 %v1055, %v244
    %v1064 = vmul.f32 %v1056, %v245
    %v1065 = vmul.f32 %v1057, %v246
    %v1066 = vmul.f32 %v1058, %v247
    %v1067 = vmul.f32 %v1051, %v248
    %v1068 = vmul.f32 %v1052, %v249
    %v1069 = vmul.f32 %v1053, %v250
    %v1070 = vmul.f32 %v1054, %v251
    %v1071 = vmul.f32 %v1055, %v252
    %v1072 = vmul.f32 %v1056, %v253
    %v1073 = vmul.f32 %v1057, %v254
    %v1074 = vmul.f32 %v1058, %v255
    %v1075 = vmul.f32 %v1051, %v256
    %v1076 = vmul.f32 %v1052, %v257
    %v1077 = vmul.f32 %v1053, %v258
    %v1078 = vmul.f32 %v1054, %v259
    %v1079 = vmul.f32 %v1055, %v260
    %v1080 = vmul.f32 %v1056, %v261
    %v1081 = vmul.f32 %v1057, %v262
    %v1082 = vmul.f32 %v1058, %v263
    %v1083 = vmul.f32 %v1051, %v264
    %v1084 = vmul.f32 %v1052, %v265
    %v1085 = vmul.f32 %v1053, %v266
    %v1086 = vmul.f32 %v1054, %v267
    %v1087 = vmul.f32 %v1055, %v268
    %v1088 = vmul.f32 %v1056, %v269
    %v1089 = vmul.f32 %v1057, %v270
    %v1090 = vmul.f32 %v1058, %v271
    %v1091 = vmul.f32 %v1051, %v272
    %v1092 = vmul.f32 %v1052, %v273
    %v1093 = vmul.f32 %v1053, %v274
    %v1094 = vmul.f32 %v1054, %v275
    %v1095 = vmul.f32 %v1055, %v276
    %v1096 = vmul.f32 %v1056, %v277
    %v1097 = vmul.f32 %v1057, %v278
    %v1098 = vmul.f32 %v1058, %v279
    %v1099 = vmul.f32 %v1051, %v280
    %v1100 = vmul.f32 %v1052, %v281
    %v1101 = vmul.f32 %v1053, %v282
    %v1102 = vmul.f32 %v1054, %v283
    %v1103 = vmul.f32 %v1055, %v284
    %v1104 = vmul.f32 %v1056, %v285
    %v1105 = vmul.f32 %v1057, %v286
    %v1106 = vmul.f32 %v1058, %v287
    %v1107 = vmul.f32 %v1051, %v288
    %v1108 = vmul.f32 %v1052, %v289
    %v1109 = vmul.f32 %v1053, %v290
    %v1110 = vmul.f32 %v1054, %v291
    %v1111 = vmul.f32 %v1055, %v292
    %v1112 = vmul.f32 %v1056, %v293
    %v1113 = vmul.f32 %v1057, %v294
    %v1114 = vmul.f32 %v1058, %v295
    %v1115 = vmul.f32 %v1051, %v296
    %v1116 = vmul.f32 %v1052, %v297
    %v1117 = vmul.f32 %v1053, %v298
    %v1118 = vmul.f32 %v1054, %v299
    %v1119 = vmul.f32 %v1055, %v300
    %v1120 = vmul.f32 %v1056, %v301
    %v1121 = vmul.f32 %v1057, %v302
    %v1122 = vmul.f32 %v1058, %v303
    %v1123 = vld [vmem:[#allocation2 + $0x280] sm:$0xff]
    %v1124 = vld [vmem:[#allocation2 + $0x288] sm:$0xff]
    %v1125 = vld [vmem:[#allocation2 + $0x290] sm:$0xff]
    %v1126 = vld [vmem:[#allocation2 + $0x298] sm:$0xff]
    %v1127 = vld [vmem:[#allocation2 + $0x2a0] sm:$0xff]
    %v1128 = vld [vmem:[#allocation2 + $0x2a8] sm:$0xff]
    %v1129 = vld [vmem:[#allocation2 + $0x2b0] sm:$0xff]
    %v1130 = vld [vmem:[#allocation2 + $0x2b8] sm:$0xff]
    %v1131 = vmul.f32 %v1123, %v240
    %v1132 = vmul.f32 %v1124, %v241
    %v1133 = vmul.f32 %v1125, %v242
    %v1134 = vmul.f32 %v1126, %v243
    %v1135 = vmul.f32 %v1127, %v244
    %v1136 = vmul.f32 %v1128, %v245
    %v1137 = vmul.f32 %v1129, %v246
    %v1138 = vmul.f32 %v1130, %v247
    %v1139 = vmul.f32 %v1123, %v248
    %v1140 = vmul.f32 %v1124, %v249
    %v1141 = vmul.f32 %v1125, %v250
    %v1142 = vmul.f32 %v1126, %v251
    %v1143 = vmul.f32 %v1127, %v252
    %v1144 = vmul.f32 %v1128, %v253
    %v1145 = vmul.f32 %v1129, %v254
    %v1146 = vmul.f32 %v1130, %v255
    %v1147 = vmul.f32 %v1123, %v256
    %v1148 = vmul.f32 %v1124, %v257
    %v1149 = vmul.f32 %v1125, %v258
    %v1150 = vmul.f32 %v1126, %v259
    %v1151 = vmul.f32 %v1127, %v260
    %v1152 = vmul.f32 %v1128, %v261
    %v1153 = vmul.f32 %v1129, %v262
    %v1154 = vmul.f32 %v1130, %v263
    %v1155 = vmul.f32 %v1123, %v264
    %v1156 = vmul.f32 %v1124, %v265
    %v1157 = vmul.f32 %v1125, %v266
    %v1158 = vmul.f32 %v1126, %v267
    %v1159 = vmul.f32 %v1127, %v268
    %v1160 = vmul.f32 %v1128, %v269
    %v1161 = vmul.f32 %v1129, %v270
    %v1162 = vmul.f32 %v1130, %v271
    %v1163 = vmul.f32 %v1123, %v272
    %v1164 = vmul.f32 %v1124, %v273
    %v1165 = vmul.f32 %v1125, %v274
    %v1166 = vmul.f32 %v1126, %v275
    %v1167 = vmul.f32 %v1127, %v276
    %v1168 = vmul.f32 %v1128, %v277
    %v1169 = vmul.f32 %v1129, %v278
    %v1170 = vmul.f32 %v1130, %v279
    %v1171 = vmul.f32 %v1123, %v280
    %v1172 = vmul.f32 %v1124, %v281
    %v1173 = vmul.f32 %v1125, %v282
    %v1174 = vmul.f32 %v1126, %v283
    %v1175 = vmul.f32 %v1127, %v284
    %v1176 = vmul.f32 %v1128, %v285
    %v1177 = vmul.f32 %v1129, %v286
    %v1178 = vmul.f32 %v1130, %v287
    %v1179 = vmul.f32 %v1123, %v288
    %v1180 = vmul.f32 %v1124, %v289
    %v1181 = vmul.f32 %v1125, %v290
    %v1182 = vmul.f32 %v1126, %v291
    %v1183 = vmul.f32 %v1127, %v292
    %v1184 = vmul.f32 %v1128, %v293
    %v1185 = vmul.f32 %v1129, %v294
    %v1186 = vmul.f32 %v1130, %v295
    %v1187 = vmul.f32 %v1123, %v296
    %v1188 = vmul.f32 %v1124, %v297
    %v1189 = vmul.f32 %v1125, %v298
    %v1190 = vmul.f32 %v1126, %v299
    %v1191 = vmul.f32 %v1127, %v300
    %v1192 = vmul.f32 %v1128, %v301
    %v1193 = vmul.f32 %v1129, %v302
    %v1194 = vmul.f32 %v1130, %v303
    %v1195 = vld [vmem:[#allocation2 + $0x2c0] sm:$0xff]
    %v1196 = vld [vmem:[#allocation2 + $0x2c8] sm:$0xff]
    %v1197 = vld [vmem:[#allocation2 + $0x2d0] sm:$0xff]
    %v1198 = vld [vmem:[#allocation2 + $0x2d8] sm:$0xff]
    %v1199 = vld [vmem:[#allocation2 + $0x2e0] sm:$0xff]
    %v1200 = vld [vmem:[#allocation2 + $0x2e8] sm:$0xff]
    %v1201 = vld [vmem:[#allocation2 + $0x2f0] sm:$0xff]
    %v1202 = vld [vmem:[#allocation2 + $0x2f8] sm:$0xff]
    %v1203 = vmul.f32 %v1195, %v240
    %v1204 = vmul.f32 %v1196, %v241
    %v1205 = vmul.f32 %v1197, %v242
    %v1206 = vmul.f32 %v1198, %v243
    %v1207 = vmul.f32 %v1199, %v244
    %v1208 = vmul.f32 %v1200, %v245
    %v1209 = vmul.f32 %v1201, %v246
    %v1210 = vmul.f32 %v1202, %v247
    %v1211 = vmul.f32 %v1195, %v248
    %v1212 = vmul.f32 %v1196, %v249
    %v1213 = vmul.f32 %v1197, %v250
    %v1214 = vmul.f32 %v1198, %v251
    %v1215 = vmul.f32 %v1199, %v252
    %v1216 = vmul.f32 %v1200, %v253
    %v1217 = vmul.f32 %v1201, %v254
    %v1218 = vmul.f32 %v1202, %v255
    %v1219 = vmul.f32 %v1195, %v256
    %v1220 = vmul.f32 %v1196, %v257
    %v1221 = vmul.f32 %v1197, %v258
    %v1222 = vmul.f32 %v1198, %v259
    %v1223 = vmul.f32 %v1199, %v260
    %v1224 = vmul.f32 %v1200, %v261
    %v1225 = vmul.f32 %v1201, %v262
    %v1226 = vmul.f32 %v1202, %v263
    %v1227 = vmul.f32 %v1195, %v264
    %v1228 = vmul.f32 %v1196, %v265
    %v1229 = vmul.f32 %v1197, %v266
    %v1230 = vmul.f32 %v1198, %v267
    %v1231 = vmul.f32 %v1199, %v268
    %v1232 = vmul.f32 %v1200, %v269
    %v1233 = vmul.f32 %v1201, %v270
    %v1234 = vmul.f32 %v1202, %v271
    %v1235 = vmul.f32 %v1195, %v272
    %v1236 = vmul.f32 %v1196, %v273
    %v1237 = vmul.f32 %v1197, %v274
    %v1238 = vmul.f32 %v1198, %v275
    %v1239 = vmul.f32 %v1199, %v276
    %v1240 = vmul.f32 %v1200, %v277
    %v1241 = vmul.f32 %v1201, %v278
    %v1242 = vmul.f32 %v1202, %v279
    %v1243 = vmul.f32 %v1195, %v280
    %v1244 = vmul.f32 %v1196, %v281
    %v1245 = vmul.f32 %v1197, %v282
    %v1246 = vmul.f32 %v1198, %v283
    %v1247 = vmul.f32 %v1199, %v284
    %v1248 = vmul.f32 %v1200, %v285
    %v1249 = vmul.f32 %v1201, %v286
    %v1250 = vmul.f32 %v1202, %v287
    %v1251 = vmul.f32 %v1195, %v288
    %v1252 = vmul.f32 %v1196, %v289
    %v1253 = vmul.f32 %v1197, %v290
    %v1254 = vmul.f32 %v1198, %v291
    %v1255 = vmul.f32 %v1199, %v292
    %v1256 = vmul.f32 %v1200, %v293
    %v1257 = vmul.f32 %v1201, %v294
    %v1258 = vmul.f32 %v1202, %v295
    %v1259 = vmul.f32 %v1195, %v296
    %v1260 = vmul.f32 %v1196, %v297
    %v1261 = vmul.f32 %v1197, %v298
    %v1262 = vmul.f32 %v1198, %v299
    %v1263 = vmul.f32 %v1199, %v300
    %v1264 = vmul.f32 %v1200, %v301
    %v1265 = vmul.f32 %v1201, %v302
    %v1266 = vmul.f32 %v1202, %v303
    %v1267 = vld [vmem:[#allocation2 + $0x300] sm:$0xff]
    %v1268 = vld [vmem:[#allocation2 + $0x308] sm:$0xff]
    %v1269 = vld [vmem:[#allocation2 + $0x310] sm:$0xff]
    %v1270 = vld [vmem:[#allocation2 + $0x318] sm:$0xff]
    %v1271 = vld [vmem:[#allocation2 + $0x320] sm:$0xff]
    %v1272 = vld [vmem:[#allocation2 + $0x328] sm:$0xff]
    %v1273 = vld [vmem:[#allocation2 + $0x330] sm:$0xff]
    %v1274 = vld [vmem:[#allocation2 + $0x338] sm:$0xff]
    %v1275 = vmul.f32 %v1267, %v240
    %v1276 = vmul.f32 %v1268, %v241
    %v1277 = vmul.f32 %v1269, %v242
    %v1278 = vmul.f32 %v1270, %v243
    %v1279 = vmul.f32 %v1271, %v244
    %v1280 = vmul.f32 %v1272, %v245
    %v1281 = vmul.f32 %v1273, %v246
    %v1282 = vmul.f32 %v1274, %v247
    %v1283 = vmul.f32 %v1267, %v248
    %v1284 = vmul.f32 %v1268, %v249
    %v1285 = vmul.f32 %v1269, %v250
    %v1286 = vmul.f32 %v1270, %v251
    %v1287 = vmul.f32 %v1271, %v252
    %v1288 = vmul.f32 %v1272, %v253
    %v1289 = vmul.f32 %v1273, %v254
    %v1290 = vmul.f32 %v1274, %v255
    %v1291 = vmul.f32 %v1267, %v256
    %v1292 = vmul.f32 %v1268, %v257
    %v1293 = vmul.f32 %v1269, %v258
    %v1294 = vmul.f32 %v1270, %v259
    %v1295 = vmul.f32 %v1271, %v260
    %v1296 = vmul.f32 %v1272, %v261
    %v1297 = vmul.f32 %v1273, %v262
    %v1298 = vmul.f32 %v1274, %v263
    %v1299 = vmul.f32 %v1267, %v264
    %v1300 = vmul.f32 %v1268, %v265
    %v1301 = vmul.f32 %v1269, %v266
    %v1302 = vmul.f32 %v1270, %v267
    %v1303 = vmul.f32 %v1271, %v268
    %v1304 = vmul.f32 %v1272, %v269
    %v1305 = vmul.f32 %v1273, %v270
    %v1306 = vmul.f32 %v1274, %v271
    %v1307 = vmul.f32 %v1267, %v272
    %v1308 = vmul.f32 %v1268, %v273
    %v1309 = vmul.f32 %v1269, %v274
    %v1310 = vmul.f32 %v1270, %v275
    %v1311 = vmul.f32 %v1271, %v276
    %v1312 = vmul.f32 %v1272, %v277
    %v1313 = vmul.f32 %v1273, %v278
    %v1314 = vmul.f32 %v1274, %v279
    %v1315 = vmul.f32 %v1267, %v280
    %v1316 = vmul.f32 %v1268, %v281
    %v1317 = vmul.f32 %v1269, %v282
    %v1318 = vmul.f32 %v1270, %v283
    %v1319 = vmul.f32 %v1271, %v284
    %v1320 = vmul.f32 %v1272, %v285
    %v1321 = vmul.f32 %v1273, %v286
    %v1322 = vmul.f32 %v1274, %v287
    %v1323 = vmul.f32 %v1267, %v288
    %v1324 = vmul.f32 %v1268, %v289
    %v1325 = vmul.f32 %v1269, %v290
    %v1326 = vmul.f32 %v1270, %v291
    %v1327 = vmul.f32 %v1271, %v292
    %v1328 = vmul.f32 %v1272, %v293
    %v1329 = vmul.f32 %v1273, %v294
    %v1330 = vmul.f32 %v1274, %v295
    %v1331 = vmul.f32 %v1267, %v296
    %v1332 = vmul.f32 %v1268, %v297
    %v1333 = vmul.f32 %v1269, %v298
    %v1334 = vmul.f32 %v1270, %v299
    %v1335 = vmul.f32 %v1271, %v300
    %v1336 = vmul.f32 %v1272, %v301
    %v1337 = vmul.f32 %v1273, %v302
    %v1338 = vmul.f32 %v1274, %v303
    %v1339 = vld [vmem:[#allocation2 + $0x340] sm:$0xff]
    %v1340 = vld [vmem:[#allocation2 + $0x348] sm:$0xff]
    %v1341 = vld [vmem:[#allocation2 + $0x350] sm:$0xff]
    %v1342 = vld [vmem:[#allocation2 + $0x358] sm:$0xff]
    %v1343 = vld [vmem:[#allocation2 + $0x360] sm:$0xff]
    %v1344 = vld [vmem:[#allocation2 + $0x368] sm:$0xff]
    %v1345 = vld [vmem:[#allocation2 + $0x370] sm:$0xff]
    %v1346 = vld [vmem:[#allocation2 + $0x378] sm:$0xff]
    %v1347 = vmul.f32 %v1339, %v240
    %v1348 = vmul.f32 %v1340, %v241
    %v1349 = vmul.f32 %v1341, %v242
    %v1350 = vmul.f32 %v1342, %v243
    %v1351 = vmul.f32 %v1343, %v244
    %v1352 = vmul.f32 %v1344, %v245
    %v1353 = vmul.f32 %v1345, %v246
    %v1354 = vmul.f32 %v1346, %v247
    %v1355 = vmul.f32 %v1339, %v248
    %v1356 = vmul.f32 %v1340, %v249
    %v1357 = vmul.f32 %v1341, %v250
    %v1358 = vmul.f32 %v1342, %v251
    %v1359 = vmul.f32 %v1343, %v252
    %v1360 = vmul.f32 %v1344, %v253
    %v1361 = vmul.f32 %v1345, %v254
    %v1362 = vmul.f32 %v1346, %v255
    %v1363 = vmul.f32 %v1339, %v256
    %v1364 = vmul.f32 %v1340, %v257
    %v1365 = vmul.f32 %v1341, %v258
    %v1366 = vmul.f32 %v1342, %v259
    %v1367 = vmul.f32 %v1343, %v260
    %v1368 = vmul.f32 %v1344, %v261
    %v1369 = vmul.f32 %v1345, %v262
    %v1370 = vmul.f32 %v1346, %v263
    %v1371 = vmul.f32 %v1339, %v264
    %v1372 = vmul.f32 %v1340, %v265
    %v1373 = vmul.f32 %v1341, %v266
    %v1374 = vmul.f32 %v1342, %v267
    %v1375 = vmul.f32 %v1343, %v268
    %v1376 = vmul.f32 %v1344, %v269
    %v1377 = vmul.f32 %v1345, %v270
    %v1378 = vmul.f32 %v1346, %v271
    %v1379 = vmul.f32 %v1339, %v272
    %v1380 = vmul.f32 %v1340, %v273
    %v1381 = vmul.f32 %v1341, %v274
    %v1382 = vmul.f32 %v1342, %v275
    %v1383 = vmul.f32 %v1343, %v276
    %v1384 = vmul.f32 %v1344, %v277
    %v1385 = vmul.f32 %v1345, %v278
    %v1386 = vmul.f32 %v1346, %v279
    %v1387 = vmul.f32 %v1339, %v280
    %v1388 = vmul.f32 %v1340, %v281
    %v1389 = vmul.f32 %v1341, %v282
    %v1390 = vmul.f32 %v1342, %v283
    %v1391 = vmul.f32 %v1343, %v284
    %v1392 = vmul.f32 %v1344, %v285
    %v1393 = vmul.f32 %v1345, %v286
    %v1394 = vmul.f32 %v1346, %v287
    %v1395 = vmul.f32 %v1339, %v288
    %v1396 = vmul.f32 %v1340, %v289
    %v1397 = vmul.f32 %v1341, %v290
    %v1398 = vmul.f32 %v1342, %v291
    %v1399 = vmul.f32 %v1343, %v292
    %v1400 = vmul.f32 %v1344, %v293
    %v1401 = vmul.f32 %v1345, %v294
    %v1402 = vmul.f32 %v1346, %v295
    %v1403 = vmul.f32 %v1339, %v296
    %v1404 = vmul.f32 %v1340, %v297
    %v1405 = vmul.f32 %v1341, %v298
    %v1406 = vmul.f32 %v1342, %v299
    %v1407 = vmul.f32 %v1343, %v300
    %v1408 = vmul.f32 %v1344, %v301
    %v1409 = vmul.f32 %v1345, %v302
    %v1410 = vmul.f32 %v1346, %v303
    %v1411 = vld [vmem:[#allocation2 + $0x380] sm:$0xff]
    %v1412 = vld [vmem:[#allocation2 + $0x388] sm:$0xff]
    %v1413 = vld [vmem:[#allocation2 + $0x390] sm:$0xff]
    %v1414 = vld [vmem:[#allocation2 + $0x398] sm:$0xff]
    %v1415 = vld [vmem:[#allocation2 + $0x3a0] sm:$0xff]
    %v1416 = vld [vmem:[#allocation2 + $0x3a8] sm:$0xff]
    %v1417 = vld [vmem:[#allocation2 + $0x3b0] sm:$0xff]
    %v1418 = vld [vmem:[#allocation2 + $0x3b8] sm:$0xff]
    %v1419 = vmul.f32 %v1411, %v240
    %v1420 = vmul.f32 %v1412, %v241
    %v1421 = vmul.f32 %v1413, %v242
    %v1422 = vmul.f32 %v1414, %v243
    %v1423 = vmul.f32 %v1415, %v244
    %v1424 = vmul.f32 %v1416, %v245
    %v1425 = vmul.f32 %v1417, %v246
    %v1426 = vmul.f32 %v1418, %v247
    %v1427 = vmul.f32 %v1411, %v248
    %v1428 = vmul.f32 %v1412, %v249
    %v1429 = vmul.f32 %v1413, %v250
    %v1430 = vmul.f32 %v1414, %v251
    %v1431 = vmul.f32 %v1415, %v252
    %v1432 = vmul.f32 %v1416, %v253
    %v1433 = vmul.f32 %v1417, %v254
    %v1434 = vmul.f32 %v1418, %v255
    %v1435 = vmul.f32 %v1411, %v256
    %v1436 = vmul.f32 %v1412, %v257
    %v1437 = vmul.f32 %v1413, %v258
    %v1438 = vmul.f32 %v1414, %v259
    %v1439 = vmul.f32 %v1415, %v260
    %v1440 = vmul.f32 %v1416, %v261
    %v1441 = vmul.f32 %v1417, %v262
    %v1442 = vmul.f32 %v1418, %v263
    %v1443 = vmul.f32 %v1411, %v264
    %v1444 = vmul.f32 %v1412, %v265
    %v1445 = vmul.f32 %v1413, %v266
    %v1446 = vmul.f32 %v1414, %v267
    %v1447 = vmul.f32 %v1415, %v268
    %v1448 = vmul.f32 %v1416, %v269
    %v1449 = vmul.f32 %v1417, %v270
    %v1450 = vmul.f32 %v1418, %v271
    %v1451 = vmul.f32 %v1411, %v272
    %v1452 = vmul.f32 %v1412, %v273
    %v1453 = vmul.f32 %v1413, %v274
    %v1454 = vmul.f32 %v1414, %v275
    %v1455 = vmul.f32 %v1415, %v276
    %v1456 = vmul.f32 %v1416, %v277
    %v1457 = vmul.f32 %v1417, %v278
    %v1458 = vmul.f32 %v1418, %v279
    %v1459 = vmul.f32 %v1411, %v280
    %v1460 = vmul.f32 %v1412, %v281
    %v1461 = vmul.f32 %v1413, %v282
    %v1462 = vmul.f32 %v1414, %v283
    %v1463 = vmul.f32 %v1415, %v284
    %v1464 = vmul.f32 %v1416, %v285
    %v1465 = vmul.f32 %v1417, %v286
    %v1466 = vmul.f32 %v1418, %v287
    %v1467 = vmul.f32 %v1411, %v288
    %v1468 = vmul.f32 %v1412, %v289
    %v1469 = vmul.f32 %v1413, %v290
    %v1470 = vmul.f32 %v1414, %v291
    %v1471 = vmul.f32 %v1415, %v292
    %v1472 = vmul.f32 %v1416, %v293
    %v1473 = vmul.f32 %v1417, %v294
    %v1474 = vmul.f32 %v1418, %v295
    %v1475 = vmul.f32 %v1411, %v296
    %v1476 = vmul.f32 %v1412, %v297
    %v1477 = vmul.f32 %v1413, %v298
    %v1478 = vmul.f32 %v1414, %v299
    %v1479 = vmul.f32 %v1415, %v300
    %v1480 = vmul.f32 %v1416, %v301
    %v1481 = vmul.f32 %v1417, %v302
    %v1482 = vmul.f32 %v1418, %v303
    %v1483 = vmul.f32 %v240, 0.03125
    %v1484 = vmul.f32 %v241, 0.03125
    %v1485 = vmul.f32 %v242, 0.03125
    %v1486 = vmul.f32 %v243, 0.03125
    %v1487 = vmul.f32 %v244, 0.03125
    %v1488 = vmul.f32 %v245, 0.03125
    %v1489 = vmul.f32 %v246, 0.03125
    %v1490 = vmul.f32 %v247, 0.03125
    %v1491 = vmul.f32 %v248, 0.03125
    %v1492 = vmul.f32 %v249, 0.03125
    %v1493 = vmul.f32 %v250, 0.03125
    %v1494 = vmul.f32 %v251, 0.03125
    %v1495 = vmul.f32 %v252, 0.03125
    %v1496 = vmul.f32 %v253, 0.03125
    %v1497 = vmul.f32 %v254, 0.03125
    %v1498 = vmul.f32 %v255, 0.03125
    %v1499 = vmul.f32 %v256, 0.03125
    %v1500 = vmul.f32 %v257, 0.03125
    %v1501 = vmul.f32 %v258, 0.03125
    %v1502 = vmul.f32 %v259, 0.03125
    %v1503 = vmul.f32 %v260, 0.03125
    %v1504 = vmul.f32 %v261, 0.03125
    %v1505 = vmul.f32 %v262, 0.03125
    %v1506 = vmul.f32 %v263, 0.03125
    %v1507 = vmul.f32 %v264, 0.03125
    %v1508 = vmul.f32 %v265, 0.03125
    %v1509 = vmul.f32 %v266, 0.03125
    %v1510 = vmul.f32 %v267, 0.03125
    %v1511 = vmul.f32 %v268, 0.03125
    %v1512 = vmul.f32 %v269, 0.03125
    %v1513 = vmul.f32 %v270, 0.03125
    %v1514 = vmul.f32 %v271, 0.03125
    %v1515 = vmul.f32 %v272, 0.03125
    %v1516 = vmul.f32 %v273, 0.03125
    %v1517 = vmul.f32 %v274, 0.03125
    %v1518 = vmul.f32 %v275, 0.03125
    %v1519 = vmul.f32 %v276, 0.03125
    %v1520 = vmul.f32 %v277, 0.03125
    %v1521 = vmul.f32 %v278, 0.03125
    %v1522 = vmul.f32 %v279, 0.03125
    %v1523 = vmul.f32 %v280, 0.03125
    %v1524 = vmul.f32 %v281, 0.03125
    %v1525 = vmul.f32 %v282, 0.03125
    %v1526 = vmul.f32 %v283, 0.03125
    %v1527 = vmul.f32 %v284, 0.03125
    %v1528 = vmul.f32 %v285, 0.03125
    %v1529 = vmul.f32 %v286, 0.03125
    %v1530 = vmul.f32 %v287, 0.03125
    %v1531 = vmul.f32 %v288, 0.03125
    %v1532 = vmul.f32 %v289, 0.03125
    %v1533 = vmul.f32 %v290, 0.03125
    %v1534 = vmul.f32 %v291, 0.03125
    %v1535 = vmul.f32 %v292, 0.03125
    %v1536 = vmul.f32 %v293, 0.03125
    %v1537 = vmul.f32 %v294, 0.03125
    %v1538 = vmul.f32 %v295, 0.03125
    %v1539 = vmul.f32 %v296, 0.03125
    %v1540 = vmul.f32 %v297, 0.03125
    %v1541 = vmul.f32 %v298, 0.03125
    %v1542 = vmul.f32 %v299, 0.03125
    %v1543 = vmul.f32 %v300, 0.03125
    %v1544 = vmul.f32 %v301, 0.03125
    %v1545 = vmul.f32 %v302, 0.03125
    %v1546 = vmul.f32 %v303, 0.03125
    %s1547 = scalar_lea.vmem [#allocation4], 177
    %v1548 = vld [vmem:[%s1547] ss:$8 sm:$0x3]
    %s1549 = scalar_lea.vmem [#allocation4], 178
    %v1550 = vld [vmem:[%s1549] ss:$8 sm:$0x3]
    %s1551 = scalar_lea.vmem [#allocation4], 176
    %v1552 = vld [vmem:[%s1551] ss:$8 sm:$0x3]
    %v1553 = vld [vmem:[#allocation2] sm:$0xff]
    %v1554 = vld [vmem:[#allocation2 + $0x8] sm:$0xff]
    %v1555 = vld [vmem:[#allocation2 + $0x10] sm:$0xff]
    %v1556 = vld [vmem:[#allocation2 + $0x18] sm:$0xff]
    %v1557 = vld [vmem:[#allocation2 + $0x20] sm:$0xff]
    %v1558 = vld [vmem:[#allocation2 + $0x28] sm:$0xff]
    %v1559 = vld [vmem:[#allocation2 + $0x30] sm:$0xff]
    %v1560 = vld [vmem:[#allocation2 + $0x38] sm:$0xff]
    %v1561 = vmul.f32 %v1553, %v240
    %v1562 = vmul.f32 %v1554, %v241
    %v1563 = vmul.f32 %v1555, %v242
    %v1564 = vmul.f32 %v1556, %v243
    %v1565 = vmul.f32 %v1557, %v244
    %v1566 = vmul.f32 %v1558, %v245
    %v1567 = vmul.f32 %v1559, %v246
    %v1568 = vmul.f32 %v1560, %v247
    %v1569 = vmul.f32 %v1553, %v248
    %v1570 = vmul.f32 %v1554, %v249
    %v1571 = vmul.f32 %v1555, %v250
    %v1572 = vmul.f32 %v1556, %v251
    %v1573 = vmul.f32 %v1557, %v252
    %v1574 = vmul.f32 %v1558, %v253
    %v1575 = vmul.f32 %v1559, %v254
    %v1576 = vmul.f32 %v1560, %v255
    %v1577 = vmul.f32 %v1553, %v256
    %v1578 = vmul.f32 %v1554, %v257
    %v1579 = vmul.f32 %v1555, %v258
    %v1580 = vmul.f32 %v1556, %v259
    %v1581 = vmul.f32 %v1557, %v260
    %v1582 = vmul.f32 %v1558, %v261
    %v1583 = vmul.f32 %v1559, %v262
    %v1584 = vmul.f32 %v1560, %v263
    %v1585 = vmul.f32 %v1553, %v264
    %v1586 = vmul.f32 %v1554, %v265
    %v1587 = vmul.f32 %v1555, %v266
    %v1588 = vmul.f32 %v1556, %v267
    %v1589 = vmul.f32 %v1557, %v268
    %v1590 = vmul.f32 %v1558, %v269
    %v1591 = vmul.f32 %v1559, %v270
    %v1592 = vmul.f32 %v1560, %v271
    %v1593 = vmul.f32 %v1553, %v272
    %v1594 = vmul.f32 %v1554, %v273
    %v1595 = vmul.f32 %v1555, %v274
    %v1596 = vmul.f32 %v1556, %v275
    %v1597 = vmul.f32 %v1557, %v276
    %v1598 = vmul.f32 %v1558, %v277
    %v1599 = vmul.f32 %v1559, %v278
    %v1600 = vmul.f32 %v1560, %v279
    %v1601 = vmul.f32 %v1553, %v280
    %v1602 = vmul.f32 %v1554, %v281
    %v1603 = vmul.f32 %v1555, %v282
    %v1604 = vmul.f32 %v1556, %v283
    %v1605 = vmul.f32 %v1557, %v284
    %v1606 = vmul.f32 %v1558, %v285
    %v1607 = vmul.f32 %v1559, %v286
    %v1608 = vmul.f32 %v1560, %v287
    %v1609 = vmul.f32 %v1553, %v288
    %v1610 = vmul.f32 %v1554, %v289
    %v1611 = vmul.f32 %v1555, %v290
    %v1612 = vmul.f32 %v1556, %v291
    %v1613 = vmul.f32 %v1557, %v292
    %v1614 = vmul.f32 %v1558, %v293
    %v1615 = vmul.f32 %v1559, %v294
    %v1616 = vmul.f32 %v1560, %v295
    %v1617 = vmul.f32 %v1553, %v296
    %v1618 = vmul.f32 %v1554, %v297
    %v1619 = vmul.f32 %v1555, %v298
    %v1620 = vmul.f32 %v1556, %v299
    %v1621 = vmul.f32 %v1557, %v300
    %v1622 = vmul.f32 %v1558, %v301
    %v1623 = vmul.f32 %v1559, %v302
    %v1624 = vmul.f32 %v1560, %v303
    %s1625 = scalar_lea.vmem [#allocation4], 162
    %v1626 = vld [vmem:[%s1625] ss:$8 sm:$0x3]
    %v1628 = vlaneseq
    %v1629 = vshrl.u32 %v1628, 7
    %v1630 = vsub.s32 0, %v1629
    %v1631 = vrot.slane %v1626, %v1630
    %v1632 = vlaneseq
    %v1633 = vshrl.u32 %v1632, 7
    %v1634 = vsub.s32 1, %v1633
    %v1635 = vrot.slane %v1626, %v1634
    %1638 = vmatprep.subr.mxu0 %v1562
    %1639 = vmatpush1.msra.mxu0 %v1561
    %1640 = vmatprep.subr.mxu0 %v1564
    %1641 = vmatpush1.msra.mxu0 %v1563
    %1642 = vmatprep.subr.mxu0 %v1566
    %1643 = vmatpush1.msra.mxu0 %v1565
    %1644 = vmatprep.subr.mxu0 %v1568
    %1645 = vmatpush1.msra.mxu0 %v1567
    %1646 = vmatprep.subr.mxu0 %v1570
    %1647 = vmatpush1.msra.mxu0 %v1569
    %1648 = vmatprep.subr.mxu0 %v1572
    %1649 = vmatpush1.msra.mxu0 %v1571
    %1650 = vmatprep.subr.mxu0 %v1574
    %1651 = vmatpush1.msra.mxu0 %v1573
    %1652 = vmatprep.subr.mxu0 %v1576
    %1653 = vmatpush1.msra.mxu0 %v1575
    %1654 = vmatprep.subr.mxu0 %v1578
    %1655 = vmatpush1.msra.mxu0 %v1577
    %1656 = vmatprep.subr.mxu0 %v1580
    %1657 = vmatpush1.msra.mxu0 %v1579
    %1658 = vmatprep.subr.mxu0 %v1582
    %1659 = vmatpush1.msra.mxu0 %v1581
    %1660 = vmatprep.subr.mxu0 %v1584
    %1661 = vmatpush1.msra.mxu0 %v1583
    %1662 = vmatprep.subr.mxu0 %v1586
    %1663 = vmatpush1.msra.mxu0 %v1585
    %1664 = vmatprep.subr.mxu0 %v1588
    %1665 = vmatpush1.msra.mxu0 %v1587
    %1666 = vmatprep.subr.mxu0 %v1590
    %1667 = vmatpush1.msra.mxu0 %v1589
    %1668 = vmatprep.subr.mxu0 %v1592
    %1669 = vmatpush1.msra.mxu0 %v1591
    %1670 = vmatprep.subr.mxu0 %v1594
    %1671 = vmatpush1.msra.mxu0 %v1593
    %1672 = vmatprep.subr.mxu0 %v1596
    %1673 = vmatpush1.msra.mxu0 %v1595
    %1674 = vmatprep.subr.mxu0 %v1598
    %1675 = vmatpush1.msra.mxu0 %v1597
    %1676 = vmatprep.subr.mxu0 %v1600
    %1677 = vmatpush1.msra.mxu0 %v1599
    %1678 = vmatprep.subr.mxu0 %v1602
    %1679 = vmatpush1.msra.mxu0 %v1601
    %1680 = vmatprep.subr.mxu0 %v1604
    %1681 = vmatpush1.msra.mxu0 %v1603
    %1682 = vmatprep.subr.mxu0 %v1606
    %1683 = vmatpush1.msra.mxu0 %v1605
    %1684 = vmatprep.subr.mxu0 %v1608
    %1685 = vmatpush1.msra.mxu0 %v1607
    %1686 = vmatprep.subr.mxu0 %v1610
    %1687 = vmatpush1.msra.mxu0 %v1609
    %1688 = vmatprep.subr.mxu0 %v1612
    %1689 = vmatpush1.msra.mxu0 %v1611
    %1690 = vmatprep.subr.mxu0 %v1614
    %1691 = vmatpush1.msra.mxu0 %v1613
    %1692 = vmatprep.subr.mxu0 %v1616
    %1693 = vmatpush1.msra.mxu0 %v1615
    %1694 = vmatprep.subr.mxu0 %v1618
    %1695 = vmatpush1.msra.mxu0 %v1617
    %1696 = vmatprep.subr.mxu0 %v1620
    %1697 = vmatpush1.msra.mxu0 %v1619
    %1698 = vmatprep.subr.mxu0 %v1622
    %1699 = vmatpush1.msra.mxu0 %v1621
    %1700 = vmatprep.subr.mxu0 %v1624
    %1701 = vmatpush1.msra.mxu0 %v1623
    %1702 = vmatprep.mubr.f32.mxu0 %v815
    %1703 = vmatmul.mubr.f32.gmra.mrb[0].mxu0 %v813
    %v1704 = vpop.f32.mrb[0].mxu0
    %v1705 = vadd.f32 %v1631, %v1704
    %v1706 = vpop.f32.mrb[0].mxu0
    %v1707 = vadd.f32 %v1635, %v1706
    %1708 = vmatprep.mubr.f32.mxu0 %v821
    %1709 = vmatmul.mubr.f32.gmra.mrb[0].mxu0 %v819
    %v1710 = vpop.f32.mrb[0].mxu0
    %v1711 = vadd.f32 %v1631, %v1710
    %v1712 = vpop.f32.mrb[0].mxu0
    %v1713 = vadd.f32 %v1635, %v1712
    %1714 = vmatprep.mubr.f32.mxu0 %v827
    %1715 = vmatmul.mubr.f32.gmra.mrb[0].mxu0 %v825
    %v1716 = vpop.f32.mrb[0].mxu0
    %v1717 = vadd.f32 %v1631, %v1716
    %v1718 = vpop.f32.mrb[0].mxu0
    %v1719 = vadd.f32 %v1635, %v1718
    %1720 = vmatprep.mubr.f32.mxu0 %v833
    %1721 = vmatmul.mubr.f32.gmra.mrb[0].mxu0 %v831
    %v1722 = vpop.f32.mrb[0].mxu0
    %v1723 = vadd.f32 %v1631, %v1722
    %v1724 = vpop.f32.mrb[0].mxu0
    %v1725 = vadd.f32 %v1635, %v1724
    %1726 = vdwg.mxu0
    %v1727 = vtanh.pop %v1705
    %v1728 = vtanh.pop %v1707
    %v1729 = vtanh.pop %v1711
    %v1730 = vtanh.pop %v1713
    %v1731 = vtanh.pop %v1717
    %v1732 = vtanh.pop %v1719
    %v1733 = vtanh.pop %v1723
    %v1734 = vtanh.pop %v1725
    %v1735 = vld [vmem:[#allocation2 + $0x40] sm:$0xff]
    %v1736 = vld [vmem:[#allocation2 + $0x48] sm:$0xff]
    %v1737 = vld [vmem:[#allocation2 + $0x50] sm:$0xff]
    %v1738 = vld [vmem:[#allocation2 + $0x58] sm:$0xff]
    %v1739 = vld [vmem:[#allocation2 + $0x60] sm:$0xff]
    %v1740 = vld [vmem:[#allocation2 + $0x68] sm:$0xff]
    %v1741 = vld [vmem:[#allocation2 + $0x70] sm:$0xff]
    %v1742 = vld [vmem:[#allocation2 + $0x78] sm:$0xff]
    %v1743 = vmul.f32 %v1735, %v240
    %v1744 = vmul.f32 %v1736, %v241
    %v1745 = vmul.f32 %v1737, %v242
    %v1746 = vmul.f32 %v1738, %v243
    %v1747 = vmul.f32 %v1739, %v244
    %v1748 = vmul.f32 %v1740, %v245
    %v1749 = vmul.f32 %v1741, %v246
    %v1750 = vmul.f32 %v1742, %v247
    %v1751 = vmul.f32 %v1735, %v248
    %v1752 = vmul.f32 %v1736, %v249
    %v1753 = vmul.f32 %v1737, %v250
    %v1754 = vmul.f32 %v1738, %v251
    %v1755 = vmul.f32 %v1739, %v252
    %v1756 = vmul.f32 %v1740, %v253
    %v1757 = vmul.f32 %v1741, %v254
    %v1758 = vmul.f32 %v1742, %v255
    %v1759 = vmul.f32 %v1735, %v256
    %v1760 = vmul.f32 %v1736, %v257
    %v1761 = vmul.f32 %v1737, %v258
    %v1762 = vmul.f32 %v1738, %v259
    %v1763 = vmul.f32 %v1739, %v260
    %v1764 = vmul.f32 %v1740, %v261
    %v1765 = vmul.f32 %v1741, %v262
    %v1766 = vmul.f32 %v1742, %v263
    %v1767 = vmul.f32 %v1735, %v264
    %v1768 = vmul.f32 %v1736, %v265
    %v1769 = vmul.f32 %v1737, %v266
    %v1770 = vmul.f32 %v1738, %v267
    %v1771 = vmul.f32 %v1739, %v268
    %v1772 = vmul.f32 %v1740, %v269
    %v1773 = vmul.f32 %v1741, %v270
    %v1774 = vmul.f32 %v1742, %v271
    %v1775 = vmul.f32 %v1735, %v272
    %v1776 = vmul.f32 %v1736, %v273
    %v1777 = vmul.f32 %v1737, %v274
    %v1778 = vmul.f32 %v1738, %v275
    %v1779 = vmul.f32 %v1739, %v276
    %v1780 = vmul.f32 %v1740, %v277
    %v1781 = vmul.f32 %v1741, %v278
    %v1782 = vmul.f32 %v1742, %v279
    %v1783 = vmul.f32 %v1735, %v280
    %v1784 = vmul.f32 %v1736, %v281
    %v1785 = vmul.f32 %v1737, %v282
    %v1786 = vmul.f32 %v1738, %v283
    %v1787 = vmul.f32 %v1739, %v284
    %v1788 = vmul.f32 %v1740, %v285
    %v1789 = vmul.f32 %v1741, %v286
    %v1790 = vmul.f32 %v1742, %v287
    %v1791 = vmul.f32 %v1735, %v288
    %v1792 = vmul.f32 %v1736, %v289
    %v1793 = vmul.f32 %v1737, %v290
    %v1794 = vmul.f32 %v1738, %v291
    %v1795 = vmul.f32 %v1739, %v292
    %v1796 = vmul.f32 %v1740, %v293
    %v1797 = vmul.f32 %v1741, %v294
    %v1798 = vmul.f32 %v1742, %v295
    %v1799 = vmul.f32 %v1735, %v296
    %v1800 = vmul.f32 %v1736, %v297
    %v1801 = vmul.f32 %v1737, %v298
    %v1802 = vmul.f32 %v1738, %v299
    %v1803 = vmul.f32 %v1739, %v300
    %v1804 = vmul.f32 %v1740, %v301
    %v1805 = vmul.f32 %v1741, %v302
    %v1806 = vmul.f32 %v1742, %v303
    %s1807 = scalar_lea.vmem [#allocation4], 163
    %v1808 = vld [vmem:[%s1807] ss:$8 sm:$0x3]
    %v1810 = vlaneseq
    %v1811 = vshrl.u32 %v1810, 7
    %v1812 = vsub.s32 0, %v1811
    %v1813 = vrot.slane %v1808, %v1812
    %v1814 = vlaneseq
    %v1815 = vshrl.u32 %v1814, 7
    %v1816 = vsub.s32 1, %v1815
    %v1817 = vrot.slane %v1808, %v1816
    %1820 = vmatprep.subr.mxu0 %v1744
    %1821 = vmatpush1.msra.mxu0 %v1743
    %1822 = vmatprep.subr.mxu0 %v1746
    %1823 = vmatpush1.msra.mxu0 %v1745
    %1824 = vmatprep.subr.mxu0 %v1748
    %1825 = vmatpush1.msra.mxu0 %v1747
    %1826 = vmatprep.subr.mxu0 %v1750
    %1827 = vmatpush1.msra.mxu0 %v1749
    %1828 = vmatprep.subr.mxu0 %v1752
    %1829 = vmatpush1.msra.mxu0 %v1751
    %1830 = vmatprep.subr.mxu0 %v1754
    %1831 = vmatpush1.msra.mxu0 %v1753
    %1832 = vmatprep.subr.mxu0 %v1756
    %1833 = vmatpush1.msra.mxu0 %v1755
    %1834 = vmatprep.subr.mxu0 %v1758
    %1835 = vmatpush1.msra.mxu0 %v1757
    %1836 = vmatprep.subr.mxu0 %v1760
    %1837 = vmatpush1.msra.mxu0 %v1759
    %1838 = vmatprep.subr.mxu0 %v1762
    %1839 = vmatpush1.msra.mxu0 %v1761
    %1840 = vmatprep.subr.mxu0 %v1764
    %1841 = vmatpush1.msra.mxu0 %v1763
    %1842 = vmatprep.subr.mxu0 %v1766
    %1843 = vmatpush1.msra.mxu0 %v1765
    %1844 = vmatprep.subr.mxu0 %v1768
    %1845 = vmatpush1.msra.mxu0 %v1767
    %1846 = vmatprep.subr.mxu0 %v1770
    %1847 = vmatpush1.msra.mxu0 %v1769
    %1848 = vmatprep.subr.mxu0 %v1772
    %1849 = vmatpush1.msra.mxu0 %v1771
    %1850 = vmatprep.subr.mxu0 %v1774
    %1851 = vmatpush1.msra.mxu0 %v1773
    %1852 = vmatprep.subr.mxu0 %v1776
    %1853 = vmatpush1.msra.mxu0 %v1775
    %1854 = vmatprep.subr.mxu0 %v1778
    %1855 = vmatpush1.msra.mxu0 %v1777
    %1856 = vmatprep.subr.mxu0 %v1780
    %1857 = vmatpush1.msra.mxu0 %v1779
    %1858 = vmatprep.subr.mxu0 %v1782
    %1859 = vmatpush1.msra.mxu0 %v1781
    %1860 = vmatprep.subr.mxu0 %v1784
    %1861 = vmatpush1.msra.mxu0 %v1783
    %1862 = vmatprep.subr.mxu0 %v1786
    %1863 = vmatpush1.msra.mxu0 %v1785
    %1864 = vmatprep.subr.mxu0 %v1788
    %1865 = vmatpush1.msra.mxu0 %v1787
    %1866 = vmatprep.subr.mxu0 %v1790
    %1867 = vmatpush1.msra.mxu0 %v1789
    %1868 = vmatprep.subr.mxu0 %v1792
    %1869 = vmatpush1.msra.mxu0 %v1791
    %1870 = vmatprep.subr.mxu0 %v1794
    %1871 = vmatpush1.msra.mxu0 %v1793
    %1872 = vmatprep.subr.mxu0 %v1796
    %1873 = vmatpush1.msra.mxu0 %v1795
    %1874 = vmatprep.subr.mxu0 %v1798
    %1875 = vmatpush1.msra.mxu0 %v1797
    %1876 = vmatprep.subr.mxu0 %v1800
    %1877 = vmatpush1.msra.mxu0 %v1799
    %1878 = vmatprep.subr.mxu0 %v1802
    %1879 = vmatpush1.msra.mxu0 %v1801
    %1880 = vmatprep.subr.mxu0 %v1804
    %1881 = vmatpush1.msra.mxu0 %v1803
    %1882 = vmatprep.subr.mxu0 %v1806
    %1883 = vmatpush1.msra.mxu0 %v1805
    %1884 = vmatprep.mubr.f32.mxu0 %v815
    %1885 = vmatmul.mubr.f32.gmra.mrb[0].mxu0 %v813
    %v1886 = vpop.f32.mrb[0].mxu0
    %v1887 = vadd.f32 %v1813, %v1886
    %v1888 = vpop.f32.mrb[0].mxu0
    %v1889 = vadd.f32 %v1817, %v1888
    %1890 = vmatprep.mubr.f32.mxu0 %v821
    %1891 = vmatmul.mubr.f32.gmra.mrb[0].mxu0 %v819
    %v1892 = vpop.f32.mrb[0].mxu0
    %v1893 = vadd.f32 %v1813, %v1892
    %v1894 = vpop.f32.mrb[0].mxu0
    %v1895 = vadd.f32 %v1817, %v1894
    %1896 = vmatprep.mubr.f32.mxu0 %v827
    %1897 = vmatmul.mubr.f32.gmra.mrb[0].mxu0 %v825
    %v1898 = vpop.f32.mrb[0].mxu0
    %v1899 = vadd.f32 %v1813, %v1898
    %v1900 = vpop.f32.mrb[0].mxu0
    %v1901 = vadd.f32 %v1817, %v1900
    %1902 = vmatprep.mubr.f32.mxu0 %v833
    %1903 = vmatmul.mubr.f32.gmra.mrb[0].mxu0 %v831
    %v1904 = vpop.f32.mrb[0].mxu0
    %v1905 = vadd.f32 %v1813, %v1904
    %v1906 = vpop.f32.mrb[0].mxu0
    %v1907 = vadd.f32 %v1817, %v1906
    %1908 = vdwg.mxu0
    %v1909 = vxor.u32 %v1887, 2147483648
    %v1910 = vxor.u32 %v1889, 2147483648
    %v1911 = vxor.u32 %v1893, 2147483648
    %v1912 = vxor.u32 %v1895, 2147483648
    %v1913 = vxor.u32 %v1899, 2147483648
    %v1914 = vxor.u32 %v1901, 2147483648
    %v1915 = vxor.u32 %v1905, 2147483648
    %v1916 = vxor.u32 %v1907, 2147483648
    %v1917 = vmul.f32 %v1909, 1.442695
    %v1918 = vpow.pop %v1917
    %v1919 = vmul.f32 %v1910, 1.442695
    %v1920 = vpow.pop %v1919
    %v1921 = vmul.f32 %v1911, 1.442695
    %v1922 = vpow.pop %v1921
    %v1923 = vmul.f32 %v1912, 1.442695
    %v1924 = vpow.pop %v1923
    %v1925 = vmul.f32 %v1913, 1.442695
    %v1926 = vpow.pop %v1925
    %v1927 = vmul.f32 %v1914, 1.442695
    %v1928 = vpow.pop %v1927
    %v1929 = vmul.f32 %v1915, 1.442695
    %v1930 = vpow.pop %v1929
    %v1931 = vmul.f32 %v1916, 1.442695
    %v1932 = vpow.pop %v1931
    %v1933 = vadd.f32 %v1918, 1.0
    %v1934 = vadd.f32 %v1920, 1.0
    %v1935 = vadd.f32 %v1922, 1.0
    %v1936 = vadd.f32 %v1924, 1.0
    %v1937 = vadd.f32 %v1926, 1.0
    %v1938 = vadd.f32 %v1928, 1.0
    %v1939 = vadd.f32 %v1930, 1.0
    %v1940 = vadd.f32 %v1932, 1.0
    %v1941 = vrcp.pop %v1933
    %v1942 = vmul.f32 1.0, %v1941
    %v1943 = vrcp.pop %v1934
    %v1944 = vmul.f32 1.0, %v1943
    %v1945 = vrcp.pop %v1935
    %v1946 = vmul.f32 1.0, %v1945
    %v1947 = vrcp.pop %v1936
    %v1948 = vmul.f32 1.0, %v1947
    %v1949 = vrcp.pop %v1937
    %v1950 = vmul.f32 1.0, %v1949
    %v1951 = vrcp.pop %v1938
    %v1952 = vmul.f32 1.0, %v1951
    %v1953 = vrcp.pop %v1939
    %v1954 = vmul.f32 1.0, %v1953
    %v1955 = vrcp.pop %v1940
    %v1956 = vmul.f32 1.0, %v1955
    %v1957 = vmul.f32 %v1727, %v1942
    %v1958 = vmul.f32 %v1728, %v1944
    %v1959 = vmul.f32 %v1729, %v1946
    %v1960 = vmul.f32 %v1730, %v1948
    %v1961 = vmul.f32 %v1731, %v1950
    %v1962 = vmul.f32 %v1732, %v1952
    %v1963 = vmul.f32 %v1733, %v1954
    %v1964 = vmul.f32 %v1734, %v1956
    %v1965 = vld [vmem:[#allocation2 + $0x80] sm:$0xff]
    %v1966 = vld [vmem:[#allocation2 + $0x88] sm:$0xff]
    %v1967 = vld [vmem:[#allocation2 + $0x90] sm:$0xff]
    %v1968 = vld [vmem:[#allocation2 + $0x98] sm:$0xff]
    %v1969 = vld [vmem:[#allocation2 + $0xa0] sm:$0xff]
    %v1970 = vld [vmem:[#allocation2 + $0xa8] sm:$0xff]
    %v1971 = vld [vmem:[#allocation2 + $0xb0] sm:$0xff]
    %v1972 = vld [vmem:[#allocation2 + $0xb8] sm:$0xff]
    %v1973 = vmul.f32 %v1965, %v240
    %v1974 = vmul.f32 %v1966, %v241
    %v1975 = vmul.f32 %v1967, %v242
    %v1976 = vmul.f32 %v1968, %v243
    %v1977 = vmul.f32 %v1969, %v244
    %v1978 = vmul.f32 %v1970, %v245
    %v1979 = vmul.f32 %v1971, %v246
    %v1980 = vmul.f32 %v1972, %v247
    %v1981 = vmul.f32 %v1965, %v248
    %v1982 = vmul.f32 %v1966, %v249
    %v1983 = vmul.f32 %v1967, %v250
    %v1984 = vmul.f32 %v1968, %v251
    %v1985 = vmul.f32 %v1969, %v252
    %v1986 = vmul.f32 %v1970, %v253
    %v1987 = vmul.f32 %v1971, %v254
    %v1988 = vmul.f32 %v1972, %v255
    %v1989 = vmul.f32 %v1965, %v256
    %v1990 = vmul.f32 %v1966, %v257
    %v1991 = vmul.f32 %v1967, %v258
    %v1992 = vmul.f32 %v1968, %v259
    %v1993 = vmul.f32 %v1969, %v260
    %v1994 = vmul.f32 %v1970, %v261
    %v1995 = vmul.f32 %v1971, %v262
    %v1996 = vmul.f32 %v1972, %v263
    %v1997 = vmul.f32 %v1965, %v264
    %v1998 = vmul.f32 %v1966, %v265
    %v1999 = vmul.f32 %v1967, %v266
    %v2000 = vmul.f32 %v1968, %v267
    %v2001 = vmul.f32 %v1969, %v268
    %v2002 = vmul.f32 %v1970, %v269
    %v2003 = vmul.f32 %v1971, %v270
    %v2004 = vmul.f32 %v1972, %v271
    %v2005 = vmul.f32 %v1965, %v272
    %v2006 = vmul.f32 %v1966, %v273
    %v2007 = vmul.f32 %v1967, %v274
    %v2008 = vmul.f32 %v1968, %v275
    %v2009 = vmul.f32 %v1969, %v276
    %v2010 = vmul.f32 %v1970, %v277
    %v2011 = vmul.f32 %v1971, %v278
    %v2012 = vmul.f32 %v1972, %v279
    %v2013 = vmul.f32 %v1965, %v280
    %v2014 = vmul.f32 %v1966, %v281
    %v2015 = vmul.f32 %v1967, %v282
    %v2016 = vmul.f32 %v1968, %v283
    %v2017 = vmul.f32 %v1969, %v284
    %v2018 = vmul.f32 %v1970, %v285
    %v2019 = vmul.f32 %v1971, %v286
    %v2020 = vmul.f32 %v1972, %v287
    %v2021 = vmul.f32 %v1965, %v288
    %v2022 = vmul.f32 %v1966, %v289
    %v2023 = vmul.f32 %v1967, %v290
    %v2024 = vmul.f32 %v1968, %v291
    %v2025 = vmul.f32 %v1969, %v292
    %v2026 = vmul.f32 %v1970, %v293
    %v2027 = vmul.f32 %v1971, %v294
    %v2028 = vmul.f32 %v1972, %v295
    %v2029 = vmul.f32 %v1965, %v296
    %v2030 = vmul.f32 %v1966, %v297
    %v2031 = vmul.f32 %v1967, %v298
    %v2032 = vmul.f32 %v1968, %v299
    %v2033 = vmul.f32 %v1969, %v300
    %v2034 = vmul.f32 %v1970, %v301
    %v2035 = vmul.f32 %v1971, %v302
    %v2036 = vmul.f32 %v1972, %v303
    %s2037 = scalar_lea.vmem [#allocation4], 164
    %v2038 = vld [vmem:[%s2037] ss:$8 sm:$0x3]
    %v2040 = vlaneseq
    %v2041 = vshrl.u32 %v2040, 7
    %v2042 = vsub.s32 0, %v2041
    %v2043 = vrot.slane %v2038, %v2042
    %v2044 = vlaneseq
    %v2045 = vshrl.u32 %v2044, 7
    %v2046 = vsub.s32 1, %v2045
    %v2047 = vrot.slane %v2038, %v2046
    %2050 = vmatprep.subr.mxu0 %v1974
    %2051 = vmatpush1.msra.mxu0 %v1973
    %2052 = vmatprep.subr.mxu0 %v1976
    %2053 = vmatpush1.msra.mxu0 %v1975
    %2054 = vmatprep.subr.mxu0 %v1978
    %2055 = vmatpush1.msra.mxu0 %v1977
    %2056 = vmatprep.subr.mxu0 %v1980
    %2057 = vmatpush1.msra.mxu0 %v1979
    %2058 = vmatprep.subr.mxu0 %v1982
    %2059 = vmatpush1.msra.mxu0 %v1981
    %2060 = vmatprep.subr.mxu0 %v1984
    %2061 = vmatpush1.msra.mxu0 %v1983
    %2062 = vmatprep.subr.mxu0 %v1986
    %2063 = vmatpush1.msra.mxu0 %v1985
    %2064 = vmatprep.subr.mxu0 %v1988
    %2065 = vmatpush1.msra.mxu0 %v1987
    %2066 = vmatprep.subr.mxu0 %v1990
    %2067 = vmatpush1.msra.mxu0 %v1989
    %2068 = vmatprep.subr.mxu0 %v1992
    %2069 = vmatpush1.msra.mxu0 %v1991
    %2070 = vmatprep.subr.mxu0 %v1994
    %2071 = vmatpush1.msra.mxu0 %v1993
    %2072 = vmatprep.subr.mxu0 %v1996
    %2073 = vmatpush1.msra.mxu0 %v1995
    %2074 = vmatprep.subr.mxu0 %v1998
    %2075 = vmatpush1.msra.mxu0 %v1997
    %2076 = vmatprep.subr.mxu0 %v2000
    %2077 = vmatpush1.msra.mxu0 %v1999
    %2078 = vmatprep.subr.mxu0 %v2002
    %2079 = vmatpush1.msra.mxu0 %v2001
    %2080 = vmatprep.subr.mxu0 %v2004
    %2081 = vmatpush1.msra.mxu0 %v2003
    %2082 = vmatprep.subr.mxu0 %v2006
    %2083 = vmatpush1.msra.mxu0 %v2005
    %2084 = vmatprep.subr.mxu0 %v2008
    %2085 = vmatpush1.msra.mxu0 %v2007
    %2086 = vmatprep.subr.mxu0 %v2010
    %2087 = vmatpush1.msra.mxu0 %v2009
    %2088 = vmatprep.subr.mxu0 %v2012
    %2089 = vmatpush1.msra.mxu0 %v2011
    %2090 = vmatprep.subr.mxu0 %v2014
    %2091 = vmatpush1.msra.mxu0 %v2013
    %2092 = vmatprep.subr.mxu0 %v2016
    %2093 = vmatpush1.msra.mxu0 %v2015
    %2094 = vmatprep.subr.mxu0 %v2018
    %2095 = vmatpush1.msra.mxu0 %v2017
    %2096 = vmatprep.subr.mxu0 %v2020
    %2097 = vmatpush1.msra.mxu0 %v2019
    %2098 = vmatprep.subr.mxu0 %v2022
    %2099 = vmatpush1.msra.mxu0 %v2021
    %2100 = vmatprep.subr.mxu0 %v2024
    %2101 = vmatpush1.msra.mxu0 %v2023
    %2102 = vmatprep.subr.mxu0 %v2026
    %2103 = vmatpush1.msra.mxu0 %v2025
    %2104 = vmatprep.subr.mxu0 %v2028
    %2105 = vmatpush1.msra.mxu0 %v2027
    %2106 = vmatprep.subr.mxu0 %v2030
    %2107 = vmatpush1.msra.mxu0 %v2029
    %2108 = vmatprep.subr.mxu0 %v2032
    %2109 = vmatpush1.msra.mxu0 %v2031
    %2110 = vmatprep.subr.mxu0 %v2034
    %2111 = vmatpush1.msra.mxu0 %v2033
    %2112 = vmatprep.subr.mxu0 %v2036
    %2113 = vmatpush1.msra.mxu0 %v2035
    %2114 = vmatprep.mubr.f32.mxu0 %v1958
    %2115 = vmatmul.mubr.f32.gmra.mrb[0].mxu0 %v1957
    %v2116 = vpop.f32.mrb[0].mxu0
    %v2117 = vadd.f32 %v2043, %v2116
    %v2118 = vpop.f32.mrb[0].mxu0
    %v2119 = vadd.f32 %v2047, %v2118
    %2120 = vmatprep.mubr.f32.mxu0 %v1960
    %2121 = vmatmul.mubr.f32.gmra.mrb[0].mxu0 %v1959
    %v2122 = vpop.f32.mrb[0].mxu0
    %v2123 = vadd.f32 %v2043, %v2122
    %v2124 = vpop.f32.mrb[0].mxu0
    %v2125 = vadd.f32 %v2047, %v2124
    %2126 = vmatprep.mubr.f32.mxu0 %v1962
    %2127 = vmatmul.mubr.f32.gmra.mrb[0].mxu0 %v1961
    %v2128 = vpop.f32.mrb[0].mxu0
    %v2129 = vadd.f32 %v2043, %v2128
    %v2130 = vpop.f32.mrb[0].mxu0
    %v2131 = vadd.f32 %v2047, %v2130
    %2132 = vmatprep.mubr.f32.mxu0 %v1964
    %2133 = vmatmul.mubr.f32.gmra.mrb[0].mxu0 %v1963
    %v2134 = vpop.f32.mrb[0].mxu0
    %v2135 = vadd.f32 %v2043, %v2134
    %v2136 = vpop.f32.mrb[0].mxu0
    %v2137 = vadd.f32 %v2047, %v2136
    %2138 = vdwg.mxu0
    %v2139 = vadd.f32 %v813, %v2117
    %v2140 = vadd.f32 %v815, %v2119
    %v2141 = vadd.f32 %v819, %v2123
    %v2142 = vadd.f32 %v821, %v2125
    %v2143 = vadd.f32 %v825, %v2129
    %v2144 = vadd.f32 %v827, %v2131
    %v2145 = vadd.f32 %v831, %v2135
    %v2146 = vadd.f32 %v833, %v2137
    %v2148 = vsel %vm492, %v727, 0
    %v2151 = vsel %vm492, %v728, 0
    %v2154 = vsel %vm492, %v729, 0
    %v2157 = vsel %vm492, %v730, 0
    %2159 = vmatprep.subr.mxu0 %v1958
    %2160 = vmatpush1.msra.mxu0 %v1957
    %2161 = vmatprep.subr.mxu0 %v1960
    %2162 = vmatpush1.msra.mxu0 %v1959
    %2163 = vmatprep.subr.mxu0 %v1962
    %2164 = vmatpush1.msra.mxu0 %v1961
    %2165 = vmatprep.subr.mxu0 %v1964
    %2166 = vmatpush1.msra.mxu0 %v1963
    %2167 = vmatprep.subr.mxu0 0.0
    %2168 = vmatpush1.msra.mxu0 0.0
    %2169 = vmatprep.subr.mxu0 0.0
    %2170 = vmatpush1.msra.mxu0 0.0
    %2171 = vmatprep.subr.mxu0 0.0
    %2172 = vmatpush1.msra.mxu0 0.0
    %2173 = vmatprep.subr.mxu0 0.0
    %2174 = vmatpush1.msra.mxu0 0.0
    %2175 = vmatprep.subr.mxu0 0.0
    %2176 = vmatpush1.msra.mxu0 0.0
    %2177 = vmatprep.subr.mxu0 0.0
    %2178 = vmatpush1.msra.mxu0 0.0
    %2179 = vmatprep.subr.mxu0 0.0
    %2180 = vmatpush1.msra.mxu0 0.0
    %2181 = vmatprep.subr.mxu0 0.0
    %2182 = vmatpush1.msra.mxu0 0.0
    %2183 = vmatprep.subr.mxu0 0.0
    %2184 = vmatpush1.msra.mxu0 0.0
    %2185 = vmatprep.subr.mxu0 0.0
    %2186 = vmatpush1.msra.mxu0 0.0
    %2187 = vmatprep.subr.mxu0 0.0
    %2188 = vmatpush1.msra.mxu0 0.0
    %2189 = vmatprep.subr.mxu0 0.0
    %2190 = vmatpush1.msra.mxu0 0.0
    %2191 = vmatprep.subr.mxu0 0.0
    %2192 = vmatpush1.msra.mxu0 0.0
    %2193 = vmatprep.subr.mxu0 0.0
    %2194 = vmatpush1.msra.mxu0 0.0
    %2195 = vmatprep.subr.mxu0 0.0
    %2196 = vmatpush1.msra.mxu0 0.0
    %2197 = vmatprep.subr.mxu0 0.0
    %2198 = vmatpush1.msra.mxu0 0.0
    %2199 = vmatprep.subr.mxu0 0.0
    %2200 = vmatpush1.msra.mxu0 0.0
    %2201 = vmatprep.subr.mxu0 0.0
    %2202 = vmatpush1.msra.mxu0 0.0
    %2203 = vmatprep.subr.mxu0 0.0
    %2204 = vmatpush1.msra.mxu0 0.0
    %2205 = vmatprep.subr.mxu0 0.0
    %2206 = vmatpush1.msra.mxu0 0.0
    %2207 = vmatprep.subr.mxu0 0.0
    %2208 = vmatpush1.msra.mxu0 0.0
    %2209 = vmatprep.subr.mxu0 0.0
    %2210 = vmatpush1.msra.mxu0 0.0
    %2211 = vmatprep.subr.mxu0 0.0
    %2212 = vmatpush1.msra.mxu0 0.0
    %2213 = vmatprep.subr.mxu0 0.0
    %2214 = vmatpush1.msra.mxu0 0.0
    %2215 = vmatprep.subr.mxu0 0.0
    %2216 = vmatpush1.msra.mxu0 0.0
    %2217 = vmatprep.subr.mxu0 0.0
    %2218 = vmatpush1.msra.mxu0 0.0
    %2219 = vmatprep.subr.mxu0 0.0
    %2220 = vmatpush1.msra.mxu0 0.0
    %2221 = vmatprep.subr.mxu0 0.0
    %2222 = vmatpush1.msra.mxu0 0.0
    %2223 = vmatprep.mubr.f32.mxu0 0.0
    %2224 = vmatmul.mubr.f32.gmra.mrb[0].mxu0 %v2148
    %v2225 = vpop.f32.mrb[0].mxu0
    %v2226 = vadd.f32 0.0, %v2225
    %v2227 = vpop.f32.mrb[0].mxu0
    %v2228 = vadd.f32 0.0, %v2227
    %2229 = vmatprep.mubr.f32.mxu0 0.0
    %2230 = vmatmul.mubr.f32.gmra.mrb[0].mxu0 %v2151
    %v2231 = vpop.f32.mrb[0].mxu0
    %v2232 = vadd.f32 0.0, %v2231
    %v2233 = vpop.f32.mrb[0].mxu0
    %v2234 = vadd.f32 0.0, %v2233
    %2235 = vmatprep.mubr.f32.mxu0 0.0
    %2236 = vmatmul.mubr.f32.gmra.mrb[0].mxu0 %v2154
    %v2237 = vpop.f32.mrb[0].mxu0
    %v2238 = vadd.f32 0.0, %v2237
    %v2239 = vpop.f32.mrb[0].mxu0
    %v2240 = vadd.f32 0.0, %v2239
    %2241 = vmatprep.mubr.f32.mxu0 0.0
    %2242 = vmatmul.mubr.f32.gmra.mrb[0].mxu0 %v2157
    %v2243 = vpop.f32.mrb[0].mxu0
    %v2244 = vadd.f32 0.0, %v2243
    %v2245 = vpop.f32.mrb[0].mxu0
    %v2246 = vadd.f32 0.0, %v2245
    %2247 = vdwg.mxu0
    %2248 = vmatprep.subr.mxu0 %v844
    %2249 = vmatpush1.msra.mxu0 %v843
    %2250 = vmatprep.subr.mxu0 %v846
    %2251 = vmatpush1.msra.mxu0 %v845
    %2252 = vmatprep.subr.mxu0 %v848
    %2253 = vmatpush1.msra.mxu0 %v847
    %2254 = vmatprep.subr.mxu0 %v850
    %2255 = vmatpush1.msra.mxu0 %v849
    %2256 = vmatprep.subr.mxu0 %v852
    %2257 = vmatpush1.msra.mxu0 %v851
    %2258 = vmatprep.subr.mxu0 %v854
    %2259 = vmatpush1.msra.mxu0 %v853
    %2260 = vmatprep.subr.mxu0 %v856
    %2261 = vmatpush1.msra.mxu0 %v855
    %2262 = vmatprep.subr.mxu0 %v858
    %2263 = vmatpush1.msra.mxu0 %v857
    %2264 = vmatprep.subr.mxu0 %v860
    %2265 = vmatpush1.msra.mxu0 %v859
    %2266 = vmatprep.subr.mxu0 %v862
    %2267 = vmatpush1.msra.mxu0 %v861
    %2268 = vmatprep.subr.mxu0 %v864
    %2269 = vmatpush1.msra.mxu0 %v863
    %2270 = vmatprep.subr.mxu0 %v866
    %2271 = vmatpush1.msra.mxu0 %v865
    %2272 = vmatprep.subr.mxu0 %v868
    %2273 = vmatpush1.msra.mxu0 %v867
    %2274 = vmatprep.subr.mxu0 %v870
    %2275 = vmatpush1.msra.mxu0 %v869
    %2276 = vmatprep.subr.mxu0 %v872
    %2277 = vmatpush1.msra.mxu0 %v871
    %2278 = vmatprep.subr.mxu0 %v874
    %2279 = vmatpush1.msra.mxu0 %v873
    %2280 = vmatprep.subr.mxu0 %v876
    %2281 = vmatpush1.msra.mxu0 %v875
    %2282 = vmatprep.subr.mxu0 %v878
    %2283 = vmatpush1.msra.mxu0 %v877
    %2284 = vmatprep.subr.mxu0 %v880
    %2285 = vmatpush1.msra.mxu0 %v879
    %2286 = vmatprep.subr.mxu0 %v882
    %2287 = vmatpush1.msra.mxu0 %v881
    %2288 = vmatprep.subr.mxu0 %v884
    %2289 = vmatpush1.msra.mxu0 %v883
    %2290 = vmatprep.subr.mxu0 %v886
    %2291 = vmatpush1.msra.mxu0 %v885
    %2292 = vmatprep.subr.mxu0 %v888
    %2293 = vmatpush1.msra.mxu0 %v887
    %2294 = vmatprep.subr.mxu0 %v890
    %2295 = vmatpush1.msra.mxu0 %v889
    %2296 = vmatprep.subr.mxu0 %v892
    %2297 = vmatpush1.msra.mxu0 %v891
    %2298 = vmatprep.subr.mxu0 %v894
    %2299 = vmatpush1.msra.mxu0 %v893
    %2300 = vmatprep.subr.mxu0 %v896
    %2301 = vmatpush1.msra.mxu0 %v895
    %2302 = vmatprep.subr.mxu0 %v898
    %2303 = vmatpush1.msra.mxu0 %v897
    %2304 = vmatprep.subr.mxu0 %v900
    %2305 = vmatpush1.msra.mxu0 %v899
    %2306 = vmatprep.subr.mxu0 %v902
    %2307 = vmatpush1.msra.mxu0 %v901
    %2308 = vmatprep.subr.mxu0 %v904
    %2309 = vmatpush1.msra.mxu0 %v903
    %2310 = vmatprep.subr.mxu0 %v906
    %2311 = vmatpush1.msra.mxu0 %v905
    %2312 = vmatprep.mubr.f32.mxu0 %v2228
    %2313 = vmatmul.mubr.f32.gmra.mrb[0].mxu0 %v2226
    %v2314 = vpop.f32.mrb[0].mxu0
    %v2315 = vadd.f32 0.0, %v2314
    %v2316 = vpop.f32.mrb[0].mxu0
    %v2317 = vadd.f32 0.0, %v2316
    %2318 = vmatprep.mubr.f32.mxu0 %v2234
    %2319 = vmatmul.mubr.f32.gmra.mrb[0].mxu0 %v2232
    %v2320 = vpop.f32.mrb[0].mxu0
    %v2321 = vadd.f32 0.0, %v2320
    %v2322 = vpop.f32.mrb[0].mxu0
    %v2323 = vadd.f32 0.0, %v2322
    %2324 = vmatprep.mubr.f32.mxu0 %v2240
    %2325 = vmatmul.mubr.f32.gmra.mrb[0].mxu0 %v2238
    %v2326 = vpop.f32.mrb[0].mxu0
    %v2327 = vadd.f32 0.0, %v2326
    %v2328 = vpop.f32.mrb[0].mxu0
    %v2329 = vadd.f32 0.0, %v2328
    %2330 = vmatprep.mubr.f32.mxu0 %v2246
    %2331 = vmatmul.mubr.f32.gmra.mrb[0].mxu0 %v2244
    %v2332 = vpop.f32.mrb[0].mxu0
    %v2333 = vadd.f32 0.0, %v2332
    %v2334 = vpop.f32.mrb[0].mxu0
    %v2335 = vadd.f32 0.0, %v2334
    %2336 = vdwg.mxu0
    %v2338 = vsel %vm492, %v456, 0
    %v2341 = vsel %vm492, %v457, 0
    %v2344 = vsel %vm492, %v458, 0
    %v2347 = vsel %vm492, %v459, 0
    %2349 = vmatprep.subr.mxu0 %v1958
    %2350 = vmatpush1.msra.mxu0 %v1957
    %2351 = vmatprep.subr.mxu0 %v1960
    %2352 = vmatpush1.msra.mxu0 %v1959
    %2353 = vmatprep.subr.mxu0 %v1962
    %2354 = vmatpush1.msra.mxu0 %v1961
    %2355 = vmatprep.subr.mxu0 %v1964
    %2356 = vmatpush1.msra.mxu0 %v1963
    %2357 = vmatprep.subr.mxu0 0.0
    %2358 = vmatpush1.msra.mxu0 0.0
    %2359 = vmatprep.subr.mxu0 0.0
    %2360 = vmatpush1.msra.mxu0 0.0
    %2361 = vmatprep.subr.mxu0 0.0
    %2362 = vmatpush1.msra.mxu0 0.0
    %2363 = vmatprep.subr.mxu0 0.0
    %2364 = vmatpush1.msra.mxu0 0.0
    %2365 = vmatprep.subr.mxu0 0.0
    %2366 = vmatpush1.msra.mxu0 0.0
    %2367 = vmatprep.subr.mxu0 0.0
    %2368 = vmatpush1.msra.mxu0 0.0
    %2369 = vmatprep.subr.mxu0 0.0
    %2370 = vmatpush1.msra.mxu0 0.0
    %2371 = vmatprep.subr.mxu0 0.0
    %2372 = vmatpush1.msra.mxu0 0.0
    %2373 = vmatprep.subr.mxu0 0.0
    %2374 = vmatpush1.msra.mxu0 0.0
    %2375 = vmatprep.subr.mxu0 0.0
    %2376 = vmatpush1.msra.mxu0 0.0
    %2377 = vmatprep.subr.mxu0 0.0
    %2378 = vmatpush1.msra.mxu0 0.0
    %2379 = vmatprep.subr.mxu0 0.0
    %2380 = vmatpush1.msra.mxu0 0.0
    %2381 = vmatprep.subr.mxu0 0.0
    %2382 = vmatpush1.msra.mxu0 0.0
    %2383 = vmatprep.subr.mxu0 0.0
    %2384 = vmatpush1.msra.mxu0 0.0
    %2385 = vmatprep.subr.mxu0 0.0
    %2386 = vmatpush1.msra.mxu0 0.0
    %2387 = vmatprep.subr.mxu0 0.0
    %2388 = vmatpush1.msra.mxu0 0.0
    %2389 = vmatprep.subr.mxu0 0.0
    %2390 = vmatpush1.msra.mxu0 0.0
    %2391 = vmatprep.subr.mxu0 0.0
    %2392 = vmatpush1.msra.mxu0 0.0
    %2393 = vmatprep.subr.mxu0 0.0
    %2394 = vmatpush1.msra.mxu0 0.0
    %2395 = vmatprep.subr.mxu0 0.0
    %2396 = vmatpush1.msra.mxu0 0.0
    %2397 = vmatprep.subr.mxu0 0.0
    %2398 = vmatpush1.msra.mxu0 0.0
    %2399 = vmatprep.subr.mxu0 0.0
    %2400 = vmatpush1.msra.mxu0 0.0
    %2401 = vmatprep.subr.mxu0 0.0
    %2402 = vmatpush1.msra.mxu0 0.0
    %2403 = vmatprep.subr.mxu0 0.0
    %2404 = vmatpush1.msra.mxu0 0.0
    %2405 = vmatprep.subr.mxu0 0.0
    %2406 = vmatpush1.msra.mxu0 0.0
    %2407 = vmatprep.subr.mxu0 0.0
    %2408 = vmatpush1.msra.mxu0 0.0
    %2409 = vmatprep.subr.mxu0 0.0
    %2410 = vmatpush1.msra.mxu0 0.0
    %2411 = vmatprep.subr.mxu0 0.0
    %2412 = vmatpush1.msra.mxu0 0.0
    %2413 = vmatprep.mubr.f32.mxu0 0.0
    %2414 = vmatmul.mubr.f32.gmra.mrb[0].mxu0 %v2338
    %v2415 = vpop.f32.mrb[0].mxu0
    %v2416 = vadd.f32 0.0, %v2415
    %v2417 = vpop.f32.mrb[0].mxu0
    %v2418 = vadd.f32 0.0, %v2417
    %2419 = vmatprep.mubr.f32.mxu0 0.0
    %2420 = vmatmul.mubr.f32.gmra.mrb[0].mxu0 %v2341
    %v2421 = vpop.f32.mrb[0].mxu0
    %v2422 = vadd.f32 0.0, %v2421
    %v2423 = vpop.f32.mrb[0].mxu0
    %v2424 = vadd.f32 0.0, %v2423
    %2425 = vmatprep.mubr.f32.mxu0 0.0
    %2426 = vmatmul.mubr.f32.gmra.mrb[0].mxu0 %v2344
    %v2427 = vpop.f32.mrb[0].mxu0
    %v2428 = vadd.f32 0.0, %v2427
    %v2429 = vpop.f32.mrb[0].mxu0
    %v2430 = vadd.f32 0.0, %v2429
    %2431 = vmatprep.mubr.f32.mxu0 0.0
    %2432 = vmatmul.mubr.f32.gmra.mrb[0].mxu0 %v2347
    %v2433 = vpop.f32.mrb[0].mxu0
    %v2434 = vadd.f32 0.0, %v2433
    %v2435 = vpop.f32.mrb[0].mxu0
    %v2436 = vadd.f32 0.0, %v2435
    %2437 = vdwg.mxu0
    %2438 = vmatprep.subr.mxu0 %v988
    %2439 = vmatpush1.msra.mxu0 %v987
    %2440 = vmatprep.subr.mxu0 %v990
    %2441 = vmatpush1.msra.mxu0 %v989
    %2442 = vmatprep.subr.mxu0 %v992
    %2443 = vmatpush1.msra.mxu0 %v991
    %2444 = vmatprep.subr.mxu0 %v994
    %2445 = vmatpush1.msra.mxu0 %v993
    %2446 = vmatprep.subr.mxu0 %v996
    %2447 = vmatpush1.msra.mxu0 %v995
    %2448 = vmatprep.subr.mxu0 %v998
    %2449 = vmatpush1.msra.mxu0 %v997
    %2450 = vmatprep.subr.mxu0 %v1000
    %2451 = vmatpush1.msra.mxu0 %v999
    %2452 = vmatprep.subr.mxu0 %v1002
    %2453 = vmatpush1.msra.mxu0 %v1001
    %2454 = vmatprep.subr.mxu0 %v1004
    %2455 = vmatpush1.msra.mxu0 %v1003
    %2456 = vmatprep.subr.mxu0 %v1006
    %2457 = vmatpush1.msra.mxu0 %v1005
    %2458 = vmatprep.subr.mxu0 %v1008
    %2459 = vmatpush1.msra.mxu0 %v1007
    %2460 = vmatprep.subr.mxu0 %v1010
    %2461 = vmatpush1.msra.mxu0 %v1009
    %2462 = vmatprep.subr.mxu0 %v1012
    %2463 = vmatpush1.msra.mxu0 %v1011
    %2464 = vmatprep.subr.mxu0 %v1014
    %2465 = vmatpush1.msra.mxu0 %v1013
    %2466 = vmatprep.subr.mxu0 %v1016
    %2467 = vmatpush1.msra.mxu0 %v1015
    %2468 = vmatprep.subr.mxu0 %v1018
    %2469 = vmatpush1.msra.mxu0 %v1017
    %2470 = vmatprep.subr.mxu0 %v1020
    %2471 = vmatpush1.msra.mxu0 %v1019
    %2472 = vmatprep.subr.mxu0 %v1022
    %2473 = vmatpush1.msra.mxu0 %v1021
    %2474 = vmatprep.subr.mxu0 %v1024
    %2475 = vmatpush1.msra.mxu0 %v1023
    %2476 = vmatprep.subr.mxu0 %v1026
    %2477 = vmatpush1.msra.mxu0 %v1025
    %2478 = vmatprep.subr.mxu0 %v1028
    %2479 = vmatpush1.msra.mxu0 %v1027
    %2480 = vmatprep.subr.mxu0 %v1030
    %2481 = vmatpush1.msra.mxu0 %v1029
    %2482 = vmatprep.subr.mxu0 %v1032
    %2483 = vmatpush1.msra.mxu0 %v1031
    %2484 = vmatprep.subr.mxu0 %v1034
    %2485 = vmatpush1.msra.mxu0 %v1033
    %2486 = vmatprep.subr.mxu0 %v1036
    %2487 = vmatpush1.msra.mxu0 %v1035
    %2488 = vmatprep.subr.mxu0 %v1038
    %2489 = vmatpush1.msra.mxu0 %v1037
    %2490 = vmatprep.subr.mxu0 %v1040
    %2491 = vmatpush1.msra.mxu0 %v1039
    %2492 = vmatprep.subr.mxu0 %v1042
    %2493 = vmatpush1.msra.mxu0 %v1041
    %2494 = vmatprep.subr.mxu0 %v1044
    %2495 = vmatpush1.msra.mxu0 %v1043
    %2496 = vmatprep.subr.mxu0 %v1046
    %2497 = vmatpush1.msra.mxu0 %v1045
    %2498 = vmatprep.subr.mxu0 %v1048
    %2499 = vmatpush1.msra.mxu0 %v1047
    %2500 = vmatprep.subr.mxu0 %v1050
    %2501 = vmatpush1.msra.mxu0 %v1049
    %2502 = vmatprep.mubr.f32.mxu0 %v2418
    %2503 = vmatmul.mubr.f32.gmra.mrb[0].mxu0 %v2416
    %v2504 = vpop.f32.mrb[0].mxu0
    %v2505 = vadd.f32 0.0, %v2504
    %v2506 = vpop.f32.mrb[0].mxu0
    %v2507 = vadd.f32 0.0, %v2506
    %2508 = vmatprep.mubr.f32.mxu0 %v2424
    %2509 = vmatmul.mubr.f32.gmra.mrb[0].mxu0 %v2422
    %v2510 = vpop.f32.mrb[0].mxu0
    %v2511 = vadd.f32 0.0, %v2510
    %v2512 = vpop.f32.mrb[0].mxu0
    %v2513 = vadd.f32 0.0, %v2512
    %2514 = vmatprep.mubr.f32.mxu0 %v2430
    %2515 = vmatmul.mubr.f32.gmra.mrb[0].mxu0 %v2428
    %v2516 = vpop.f32.mrb[0].mxu0
    %v2517 = vadd.f32 0.0, %v2516
    %v2518 = vpop.f32.mrb[0].mxu0
    %v2519 = vadd.f32 0.0, %v2518
    %2520 = vmatprep.mubr.f32.mxu0 %v2436
    %2521 = vmatmul.mubr.f32.gmra.mrb[0].mxu0 %v2434
    %v2522 = vpop.f32.mrb[0].mxu0
    %v2523 = vadd.f32 0.0, %v2522
    %v2524 = vpop.f32.mrb[0].mxu0
    %v2525 = vadd.f32 0.0, %v2524
    %2526 = vdwg.mxu0
    %2527 = vmatprep.subr.mxu0 %v1204
    %2528 = vmatpush1.msra.mxu0 %v1203
    %2529 = vmatprep.subr.mxu0 %v1206
    %2530 = vmatpush1.msra.mxu0 %v1205
    %2531 = vmatprep.subr.mxu0 %v1208
    %2532 = vmatpush1.msra.mxu0 %v1207
    %2533 = vmatprep.subr.mxu0 %v1210
    %2534 = vmatpush1.msra.mxu0 %v1209
    %2535 = vmatprep.subr.mxu0 %v1212
    %2536 = vmatpush1.msra.mxu0 %v1211
    %2537 = vmatprep.subr.mxu0 %v1214
    %2538 = vmatpush1.msra.mxu0 %v1213
    %2539 = vmatprep.subr.mxu0 %v1216
    %2540 = vmatpush1.msra.mxu0 %v1215
    %2541 = vmatprep.subr.mxu0 %v1218
    %2542 = vmatpush1.msra.mxu0 %v1217
    %2543 = vmatprep.subr.mxu0 %v1220
    %2544 = vmatpush1.msra.mxu0 %v1219
    %2545 = vmatprep.subr.mxu0 %v1222
    %2546 = vmatpush1.msra.mxu0 %v1221
    %2547 = vmatprep.subr.mxu0 %v1224
    %2548 = vmatpush1.msra.mxu0 %v1223
    %2549 = vmatprep.subr.mxu0 %v1226
    %2550 = vmatpush1.msra.mxu0 %v1225
    %2551 = vmatprep.subr.mxu0 %v1228
    %2552 = vmatpush1.msra.mxu0 %v1227
    %2553 = vmatprep.subr.mxu0 %v1230
    %2554 = vmatpush1.msra.mxu0 %v1229
    %2555 = vmatprep.subr.mxu0 %v1232
    %2556 = vmatpush1.msra.mxu0 %v1231
    %2557 = vmatprep.subr.mxu0 %v1234
    %2558 = vmatpush1.msra.mxu0 %v1233
    %2559 = vmatprep.subr.mxu0 %v1236
    %2560 = vmatpush1.msra.mxu0 %v1235
    %2561 = vmatprep.subr.mxu0 %v1238
    %2562 = vmatpush1.msra.mxu0 %v1237
    %2563 = vmatprep.subr.mxu0 %v1240
    %2564 = vmatpush1.msra.mxu0 %v1239
    %2565 = vmatprep.subr.mxu0 %v1242
    %2566 = vmatpush1.msra.mxu0 %v1241
    %2567 = vmatprep.subr.mxu0 %v1244
    %2568 = vmatpush1.msra.mxu0 %v1243
    %2569 = vmatprep.subr.mxu0 %v1246
    %2570 = vmatpush1.msra.mxu0 %v1245
    %2571 = vmatprep.subr.mxu0 %v1248
    %2572 = vmatpush1.msra.mxu0 %v1247
    %2573 = vmatprep.subr.mxu0 %v1250
    %2574 = vmatpush1.msra.mxu0 %v1249
    %2575 = vmatprep.subr.mxu0 %v1252
    %2576 = vmatpush1.msra.mxu0 %v1251
    %2577 = vmatprep.subr.mxu0 %v1254
    %2578 = vmatpush1.msra.mxu0 %v1253
    %2579 = vmatprep.subr.mxu0 %v1256
    %2580 = vmatpush1.msra.mxu0 %v1255
    %2581 = vmatprep.subr.mxu0 %v1258
    %2582 = vmatpush1.msra.mxu0 %v1257
    %2583 = vmatprep.subr.mxu0 %v1260
    %2584 = vmatpush1.msra.mxu0 %v1259
    %2585 = vmatprep.subr.mxu0 %v1262
    %2586 = vmatpush1.msra.mxu0 %v1261
    %2587 = vmatprep.subr.mxu0 %v1264
    %2588 = vmatpush1.msra.mxu0 %v1263
    %2589 = vmatprep.subr.mxu0 %v1266
    %2590 = vmatpush1.msra.mxu0 %v1265
    %2591 = vmatprep.mubr.f32.mxu0 %v1958
    %2592 = vmatmul.mubr.f32.gmra.mrb[0].mxu0 %v1957
    %v2593 = vpop.f32.mrb[0].mxu0
    %v2594 = vadd.f32 0.0, %v2593
    %v2595 = vpop.f32.mrb[0].mxu0
    %v2596 = vadd.f32 0.0, %v2595
    %2597 = vmatprep.mubr.f32.mxu0 %v1960
    %2598 = vmatmul.mubr.f32.gmra.mrb[0].mxu0 %v1959
    %v2599 = vpop.f32.mrb[0].mxu0
    %v2600 = vadd.f32 0.0, %v2599
    %v2601 = vpop.f32.mrb[0].mxu0
    %v2602 = vadd.f32 0.0, %v2601
    %2603 = vmatprep.mubr.f32.mxu0 %v1962
    %2604 = vmatmul.mubr.f32.gmra.mrb[0].mxu0 %v1961
    %v2605 = vpop.f32.mrb[0].mxu0
    %v2606 = vadd.f32 0.0, %v2605
    %v2607 = vpop.f32.mrb[0].mxu0
    %v2608 = vadd.f32 0.0, %v2607
    %2609 = vmatprep.mubr.f32.mxu0 %v1964
    %2610 = vmatmul.mubr.f32.gmra.mrb[0].mxu0 %v1963
    %v2611 = vpop.f32.mrb[0].mxu0
    %v2612 = vadd.f32 0.0, %v2611
    %v2613 = vpop.f32.mrb[0].mxu0
    %v2614 = vadd.f32 0.0, %v2613
    %2615 = vdwg.mxu0
    %2616 = vmatprep.subr.mxu0 %v1132
    %2617 = vmatpush1.msra.mxu0 %v1131
    %2618 = vmatprep.subr.mxu0 %v1134
    %2619 = vmatpush1.msra.mxu0 %v1133
    %2620 = vmatprep.subr.mxu0 %v1136
    %2621 = vmatpush1.msra.mxu0 %v1135
    %2622 = vmatprep.subr.mxu0 %v1138
    %2623 = vmatpush1.msra.mxu0 %v1137
    %2624 = vmatprep.subr.mxu0 %v1140
    %2625 = vmatpush1.msra.mxu0 %v1139
    %2626 = vmatprep.subr.mxu0 %v1142
    %2627 = vmatpush1.msra.mxu0 %v1141
    %2628 = vmatprep.subr.mxu0 %v1144
    %2629 = vmatpush1.msra.mxu0 %v1143
    %2630 = vmatprep.subr.mxu0 %v1146
    %2631 = vmatpush1.msra.mxu0 %v1145
    %2632 = vmatprep.subr.mxu0 %v1148
    %2633 = vmatpush1.msra.mxu0 %v1147
    %2634 = vmatprep.subr.mxu0 %v1150
    %2635 = vmatpush1.msra.mxu0 %v1149
    %2636 = vmatprep.subr.mxu0 %v1152
    %2637 = vmatpush1.msra.mxu0 %v1151
    %2638 = vmatprep.subr.mxu0 %v1154
    %2639 = vmatpush1.msra.mxu0 %v1153
    %2640 = vmatprep.subr.mxu0 %v1156
    %2641 = vmatpush1.msra.mxu0 %v1155
    %2642 = vmatprep.subr.mxu0 %v1158
    %2643 = vmatpush1.msra.mxu0 %v1157
    %2644 = vmatprep.subr.mxu0 %v1160
    %2645 = vmatpush1.msra.mxu0 %v1159
    %2646 = vmatprep.subr.mxu0 %v1162
    %2647 = vmatpush1.msra.mxu0 %v1161
    %2648 = vmatprep.subr.mxu0 %v1164
    %2649 = vmatpush1.msra.mxu0 %v1163
    %2650 = vmatprep.subr.mxu0 %v1166
    %2651 = vmatpush1.msra.mxu0 %v1165
    %2652 = vmatprep.subr.mxu0 %v1168
    %2653 = vmatpush1.msra.mxu0 %v1167
    %2654 = vmatprep.subr.mxu0 %v1170
    %2655 = vmatpush1.msra.mxu0 %v1169
    %2656 = vmatprep.subr.mxu0 %v1172
    %2657 = vmatpush1.msra.mxu0 %v1171
    %2658 = vmatprep.subr.mxu0 %v1174
    %2659 = vmatpush1.msra.mxu0 %v1173
    %2660 = vmatprep.subr.mxu0 %v1176
    %2661 = vmatpush1.msra.mxu0 %v1175
    %2662 = vmatprep.subr.mxu0 %v1178
    %2663 = vmatpush1.msra.mxu0 %v1177
    %2664 = vmatprep.subr.mxu0 %v1180
    %2665 = vmatpush1.msra.mxu0 %v1179
    %2666 = vmatprep.subr.mxu0 %v1182
    %2667 = vmatpush1.msra.mxu0 %v1181
    %2668 = vmatprep.subr.mxu0 %v1184
    %2669 = vmatpush1.msra.mxu0 %v1183
    %2670 = vmatprep.subr.mxu0 %v1186
    %2671 = vmatpush1.msra.mxu0 %v1185
    %2672 = vmatprep.subr.mxu0 %v1188
    %2673 = vmatpush1.msra.mxu0 %v1187
    %2674 = vmatprep.subr.mxu0 %v1190
    %2675 = vmatpush1.msra.mxu0 %v1189
    %2676 = vmatprep.subr.mxu0 %v1192
    %2677 = vmatpush1.msra.mxu0 %v1191
    %2678 = vmatprep.subr.mxu0 %v1194
    %2679 = vmatpush1.msra.mxu0 %v1193
    %2680 = vmatprep.mubr.f32.mxu0 %v2317
    %2681 = vmatmul.mubr.f32.gmra.mrb[0].mxu0 %v2315
    %v2682 = vpop.f32.mrb[0].mxu0
    %v2683 = vadd.f32 %v2594, %v2682
    %v2684 = vpop.f32.mrb[0].mxu0
    %v2685 = vadd.f32 %v2596, %v2684
    %2686 = vmatprep.mubr.f32.mxu0 %v2323
    %2687 = vmatmul.mubr.f32.gmra.mrb[0].mxu0 %v2321
    %v2688 = vpop.f32.mrb[0].mxu0
    %v2689 = vadd.f32 %v2600, %v2688
    %v2690 = vpop.f32.mrb[0].mxu0
    %v2691 = vadd.f32 %v2602, %v2690
    %2692 = vmatprep.mubr.f32.mxu0 %v2329
    %2693 = vmatmul.mubr.f32.gmra.mrb[0].mxu0 %v2327
    %v2694 = vpop.f32.mrb[0].mxu0
    %v2695 = vadd.f32 %v2606, %v2694
    %v2696 = vpop.f32.mrb[0].mxu0
    %v2697 = vadd.f32 %v2608, %v2696
    %2698 = vmatprep.mubr.f32.mxu0 %v2335
    %2699 = vmatmul.mubr.f32.gmra.mrb[0].mxu0 %v2333
    %v2700 = vpop.f32.mrb[0].mxu0
    %v2701 = vadd.f32 %v2612, %v2700
    %v2702 = vpop.f32.mrb[0].mxu0
    %v2703 = vadd.f32 %v2614, %v2702
    %2704 = vdwg.mxu0
    %2705 = vmatprep.subr.mxu0 %v1276
    %2706 = vmatpush1.msra.mxu0 %v1275
    %2707 = vmatprep.subr.mxu0 %v1278
    %2708 = vmatpush1.msra.mxu0 %v1277
    %2709 = vmatprep.subr.mxu0 %v1280
    %2710 = vmatpush1.msra.mxu0 %v1279
    %2711 = vmatprep.subr.mxu0 %v1282
    %2712 = vmatpush1.msra.mxu0 %v1281
    %2713 = vmatprep.subr.mxu0 %v1284
    %2714 = vmatpush1.msra.mxu0 %v1283
    %2715 = vmatprep.subr.mxu0 %v1286
    %2716 = vmatpush1.msra.mxu0 %v1285
    %2717 = vmatprep.subr.mxu0 %v1288
    %2718 = vmatpush1.msra.mxu0 %v1287
    %2719 = vmatprep.subr.mxu0 %v1290
    %2720 = vmatpush1.msra.mxu0 %v1289
    %2721 = vmatprep.subr.mxu0 %v1292
    %2722 = vmatpush1.msra.mxu0 %v1291
    %2723 = vmatprep.subr.mxu0 %v1294
    %2724 = vmatpush1.msra.mxu0 %v1293
    %2725 = vmatprep.subr.mxu0 %v1296
    %2726 = vmatpush1.msra.mxu0 %v1295
    %2727 = vmatprep.subr.mxu0 %v1298
    %2728 = vmatpush1.msra.mxu0 %v1297
    %2729 = vmatprep.subr.mxu0 %v1300
    %2730 = vmatpush1.msra.mxu0 %v1299
    %2731 = vmatprep.subr.mxu0 %v1302
    %2732 = vmatpush1.msra.mxu0 %v1301
    %2733 = vmatprep.subr.mxu0 %v1304
    %2734 = vmatpush1.msra.mxu0 %v1303
    %2735 = vmatprep.subr.mxu0 %v1306
    %2736 = vmatpush1.msra.mxu0 %v1305
    %2737 = vmatprep.subr.mxu0 %v1308
    %2738 = vmatpush1.msra.mxu0 %v1307
    %2739 = vmatprep.subr.mxu0 %v1310
    %2740 = vmatpush1.msra.mxu0 %v1309
    %2741 = vmatprep.subr.mxu0 %v1312
    %2742 = vmatpush1.msra.mxu0 %v1311
    %2743 = vmatprep.subr.mxu0 %v1314
    %2744 = vmatpush1.msra.mxu0 %v1313
    %2745 = vmatprep.subr.mxu0 %v1316
    %2746 = vmatpush1.msra.mxu0 %v1315
    %2747 = vmatprep.subr.mxu0 %v1318
    %2748 = vmatpush1.msra.mxu0 %v1317
    %2749 = vmatprep.subr.mxu0 %v1320
    %2750 = vmatpush1.msra.mxu0 %v1319
    %2751 = vmatprep.subr.mxu0 %v1322
    %2752 = vmatpush1.msra.mxu0 %v1321
    %2753 = vmatprep.subr.mxu0 %v1324
    %2754 = vmatpush1.msra.mxu0 %v1323
    %2755 = vmatprep.subr.mxu0 %v1326
    %2756 = vmatpush1.msra.mxu0 %v1325
    %2757 = vmatprep.subr.mxu0 %v1328
    %2758 = vmatpush1.msra.mxu0 %v1327
    %2759 = vmatprep.subr.mxu0 %v1330
    %2760 = vmatpush1.msra.mxu0 %v1329
    %2761 = vmatprep.subr.mxu0 %v1332
    %2762 = vmatpush1.msra.mxu0 %v1331
    %2763 = vmatprep.subr.mxu0 %v1334
    %2764 = vmatpush1.msra.mxu0 %v1333
    %2765 = vmatprep.subr.mxu0 %v1336
    %2766 = vmatpush1.msra.mxu0 %v1335
    %2767 = vmatprep.subr.mxu0 %v1338
    %2768 = vmatpush1.msra.mxu0 %v1337
    %2769 = vmatprep.mubr.f32.mxu0 %v2507
    %2770 = vmatmul.mubr.f32.gmra.mrb[0].mxu0 %v2505
    %v2771 = vpop.f32.mrb[0].mxu0
    %v2772 = vadd.f32 0.0, %v2771
    %v2773 = vpop.f32.mrb[0].mxu0
    %v2774 = vadd.f32 0.0, %v2773
    %2775 = vmatprep.mubr.f32.mxu0 %v2513
    %2776 = vmatmul.mubr.f32.gmra.mrb[0].mxu0 %v2511
    %v2777 = vpop.f32.mrb[0].mxu0
    %v2778 = vadd.f32 0.0, %v2777
    %v2779 = vpop.f32.mrb[0].mxu0
    %v2780 = vadd.f32 0.0, %v2779
    %2781 = vmatprep.mubr.f32.mxu0 %v2519
    %2782 = vmatmul.mubr.f32.gmra.mrb[0].mxu0 %v2517
    %v2783 = vpop.f32.mrb[0].mxu0
    %v2784 = vadd.f32 0.0, %v2783
    %v2785 = vpop.f32.mrb[0].mxu0
    %v2786 = vadd.f32 0.0, %v2785
    %2787 = vmatprep.mubr.f32.mxu0 %v2525
    %2788 = vmatmul.mubr.f32.gmra.mrb[0].mxu0 %v2523
    %v2789 = vpop.f32.mrb[0].mxu0
    %v2790 = vadd.f32 0.0, %v2789
    %v2791 = vpop.f32.mrb[0].mxu0
    %v2792 = vadd.f32 0.0, %v2791
    %2793 = vdwg.mxu0
    %v2794 = vadd.f32 %v2683, %v2772
    %v2795 = vadd.f32 %v2685, %v2774
    %v2796 = vadd.f32 %v2689, %v2778
    %v2797 = vadd.f32 %v2691, %v2780
    %v2798 = vadd.f32 %v2695, %v2784
    %v2799 = vadd.f32 %v2697, %v2786
    %v2800 = vadd.f32 %v2701, %v2790
    %v2801 = vadd.f32 %v2703, %v2792
    %v2802 = vxor.u32 %v2794, 2147483648
    %v2803 = vxor.u32 %v2795, 2147483648
    %v2804 = vxor.u32 %v2796, 2147483648
    %v2805 = vxor.u32 %v2797, 2147483648
    %v2806 = vxor.u32 %v2798, 2147483648
    %v2807 = vxor.u32 %v2799, 2147483648
    %v2808 = vxor.u32 %v2800, 2147483648
    %v2809 = vxor.u32 %v2801, 2147483648
    %v2810 = vmul.f32 %v2802, 1.442695
    %v2811 = vpow.pop %v2810
    %v2812 = vmul.f32 %v2803, 1.442695
    %v2813 = vpow.pop %v2812
    %v2814 = vmul.f32 %v2804, 1.442695
    %v2815 = vpow.pop %v2814
    %v2816 = vmul.f32 %v2805, 1.442695
    %v2817 = vpow.pop %v2816
    %v2818 = vmul.f32 %v2806, 1.442695
    %v2819 = vpow.pop %v2818
    %v2820 = vmul.f32 %v2807, 1.442695
    %v2821 = vpow.pop %v2820
    %v2822 = vmul.f32 %v2808, 1.442695
    %v2823 = vpow.pop %v2822
    %v2824 = vmul.f32 %v2809, 1.442695
    %v2825 = vpow.pop %v2824
    %v2826 = vadd.f32 %v2811, 1.0
    %v2827 = vadd.f32 %v2813, 1.0
    %v2828 = vadd.f32 %v2815, 1.0
    %v2829 = vadd.f32 %v2817, 1.0
    %v2830 = vadd.f32 %v2819, 1.0
    %v2831 = vadd.f32 %v2821, 1.0
    %v2832 = vadd.f32 %v2823, 1.0
    %v2833 = vadd.f32 %v2825, 1.0
    %v2834 = vrcp.pop %v2826
    %v2835 = vmul.f32 1.0, %v2834
    %v2836 = vrcp.pop %v2827
    %v2837 = vmul.f32 1.0, %v2836
    %v2838 = vrcp.pop %v2828
    %v2839 = vmul.f32 1.0, %v2838
    %v2840 = vrcp.pop %v2829
    %v2841 = vmul.f32 1.0, %v2840
    %v2842 = vrcp.pop %v2830
    %v2843 = vmul.f32 1.0, %v2842
    %v2844 = vrcp.pop %v2831
    %v2845 = vmul.f32 1.0, %v2844
    %v2846 = vrcp.pop %v2832
    %v2847 = vmul.f32 1.0, %v2846
    %v2848 = vrcp.pop %v2833
    %v2849 = vmul.f32 1.0, %v2848
    %v2850 = vsub.f32 %v2315, %v2505
    %v2851 = vsub.f32 %v2317, %v2507
    %v2852 = vsub.f32 %v2321, %v2511
    %v2853 = vsub.f32 %v2323, %v2513
    %v2854 = vsub.f32 %v2327, %v2517
    %v2855 = vsub.f32 %v2329, %v2519
    %v2856 = vsub.f32 %v2333, %v2523
    %v2857 = vsub.f32 %v2335, %v2525
    %v2858 = vmul.f32 %v2835, %v2850
    %v2859 = vmul.f32 %v2837, %v2851
    %v2860 = vmul.f32 %v2839, %v2852
    %v2861 = vmul.f32 %v2841, %v2853
    %v2862 = vmul.f32 %v2843, %v2854
    %v2863 = vmul.f32 %v2845, %v2855
    %v2864 = vmul.f32 %v2847, %v2856
    %v2865 = vmul.f32 %v2849, %v2857
    %v2866 = vadd.f32 %v2505, %v2858
    %v2867 = vadd.f32 %v2507, %v2859
    %v2868 = vadd.f32 %v2511, %v2860
    %v2869 = vadd.f32 %v2513, %v2861
    %v2870 = vadd.f32 %v2517, %v2862
    %v2871 = vadd.f32 %v2519, %v2863
    %v2872 = vadd.f32 %v2523, %v2864
    %v2873 = vadd.f32 %v2525, %v2865
    %2874 = vmatprep.subr.mxu0 %v2317
    %2875 = vmatpush1.msra.mxu0 %v2315
    %2876 = vmatprep.subr.mxu0 %v2323
    %2877 = vmatpush1.msra.mxu0 %v2321
    %2878 = vmatprep.subr.mxu0 %v2329
    %2879 = vmatpush1.msra.mxu0 %v2327
    %2880 = vmatprep.subr.mxu0 %v2335
    %2881 = vmatpush1.msra.mxu0 %v2333
    %2882 = vmatprep.subr.mxu0 0.0
    %2883 = vmatpush1.msra.mxu0 0.0
    %2884 = vmatprep.subr.mxu0 0.0
    %2885 = vmatpush1.msra.mxu0 0.0
    %2886 = vmatprep.subr.mxu0 0.0
    %2887 = vmatpush1.msra.mxu0 0.0
    %2888 = vmatprep.subr.mxu0 0.0
    %2889 = vmatpush1.msra.mxu0 0.0
    %2890 = vmatprep.subr.mxu0 0.0
    %2891 = vmatpush1.msra.mxu0 0.0
    %2892 = vmatprep.subr.mxu0 0.0
    %2893 = vmatpush1.msra.mxu0 0.0
    %2894 = vmatprep.subr.mxu0 0.0
    %2895 = vmatpush1.msra.mxu0 0.0
    %2896 = vmatprep.subr.mxu0 0.0
    %2897 = vmatpush1.msra.mxu0 0.0
    %2898 = vmatprep.subr.mxu0 0.0
    %2899 = vmatpush1.msra.mxu0 0.0
    %2900 = vmatprep.subr.mxu0 0.0
    %2901 = vmatpush1.msra.mxu0 0.0
    %2902 = vmatprep.subr.mxu0 0.0
    %2903 = vmatpush1.msra.mxu0 0.0
    %2904 = vmatprep.subr.mxu0 0.0
    %2905 = vmatpush1.msra.mxu0 0.0
    %2906 = vmatprep.subr.mxu0 0.0
    %2907 = vmatpush1.msra.mxu0 0.0
    %2908 = vmatprep.subr.mxu0 0.0
    %2909 = vmatpush1.msra.mxu0 0.0
    %2910 = vmatprep.subr.mxu0 0.0
    %2911 = vmatpush1.msra.mxu0 0.0
    %2912 = vmatprep.subr.mxu0 0.0
    %2913 = vmatpush1.msra.mxu0 0.0
    %2914 = vmatprep.subr.mxu0 0.0
    %2915 = vmatpush1.msra.mxu0 0.0
    %2916 = vmatprep.subr.mxu0 0.0
    %2917 = vmatpush1.msra.mxu0 0.0
    %2918 = vmatprep.subr.mxu0 0.0
    %2919 = vmatpush1.msra.mxu0 0.0
    %2920 = vmatprep.subr.mxu0 0.0
    %2921 = vmatpush1.msra.mxu0 0.0
    %2922 = vmatprep.subr.mxu0 0.0
    %2923 = vmatpush1.msra.mxu0 0.0
    %2924 = vmatprep.subr.mxu0 0.0
    %2925 = vmatpush1.msra.mxu0 0.0
    %2926 = vmatprep.subr.mxu0 0.0
    %2927 = vmatpush1.msra.mxu0 0.0
    %2928 = vmatprep.subr.mxu0 0.0
    %2929 = vmatpush1.msra.mxu0 0.0
    %2930 = vmatprep.subr.mxu0 0.0
    %2931 = vmatpush1.msra.mxu0 0.0
    %2932 = vmatprep.subr.mxu0 0.0
    %2933 = vmatpush1.msra.mxu0 0.0
    %2934 = vmatprep.subr.mxu0 0.0
    %2935 = vmatpush1.msra.mxu0 0.0
    %2936 = vmatprep.subr.mxu0 0.0
    %2937 = vmatpush1.msra.mxu0 0.0
    %2938 = vmatprep.mubr.f32.mxu0 0.0
    %2939 = vmatmul.mubr.f32.gmra.mrb[0].mxu0 %v2148
    %v2940 = vpop.f32.mrb[0].mxu0
    %v2941 = vadd.f32 0.0, %v2940
    %v2942 = vpop.f32.mrb[0].mxu0
    %v2943 = vadd.f32 0.0, %v2942
    %2944 = vmatprep.mubr.f32.mxu0 0.0
    %2945 = vmatmul.mubr.f32.gmra.mrb[0].mxu0 %v2151
    %v2946 = vpop.f32.mrb[0].mxu0
    %v2947 = vadd.f32 0.0, %v2946
    %v2948 = vpop.f32.mrb[0].mxu0
    %v2949 = vadd.f32 0.0, %v2948
    %2950 = vmatprep.mubr.f32.mxu0 0.0
    %2951 = vmatmul.mubr.f32.gmra.mrb[0].mxu0 %v2154
    %v2952 = vpop.f32.mrb[0].mxu0
    %v2953 = vadd.f32 0.0, %v2952
    %v2954 = vpop.f32.mrb[0].mxu0
    %v2955 = vadd.f32 0.0, %v2954
    %2956 = vmatprep.mubr.f32.mxu0 0.0
    %2957 = vmatmul.mubr.f32.gmra.mrb[0].mxu0 %v2157
    %v2958 = vpop.f32.mrb[0].mxu0
    %v2959 = vadd.f32 0.0, %v2958
    %v2960 = vpop.f32.mrb[0].mxu0
    %v2961 = vadd.f32 0.0, %v2960
    %2962 = vdwg.mxu0
    %2963 = vmatprep.subr.mxu0 %v916
    %2964 = vmatpush1.msra.mxu0 %v915
    %2965 = vmatprep.subr.mxu0 %v918
    %2966 = vmatpush1.msra.mxu0 %v917
    %2967 = vmatprep.subr.mxu0 %v920
    %2968 = vmatpush1.msra.mxu0 %v919
    %2969 = vmatprep.subr.mxu0 %v922
    %2970 = vmatpush1.msra.mxu0 %v921
    %2971 = vmatprep.subr.mxu0 %v924
    %2972 = vmatpush1.msra.mxu0 %v923
    %2973 = vmatprep.subr.mxu0 %v926
    %2974 = vmatpush1.msra.mxu0 %v925
    %2975 = vmatprep.subr.mxu0 %v928
    %2976 = vmatpush1.msra.mxu0 %v927
    %2977 = vmatprep.subr.mxu0 %v930
    %2978 = vmatpush1.msra.mxu0 %v929
    %2979 = vmatprep.subr.mxu0 %v932
    %2980 = vmatpush1.msra.mxu0 %v931
    %2981 = vmatprep.subr.mxu0 %v934
    %2982 = vmatpush1.msra.mxu0 %v933
    %2983 = vmatprep.subr.mxu0 %v936
    %2984 = vmatpush1.msra.mxu0 %v935
    %2985 = vmatprep.subr.mxu0 %v938
    %2986 = vmatpush1.msra.mxu0 %v937
    %2987 = vmatprep.subr.mxu0 %v940
    %2988 = vmatpush1.msra.mxu0 %v939
    %2989 = vmatprep.subr.mxu0 %v942
    %2990 = vmatpush1.msra.mxu0 %v941
    %2991 = vmatprep.subr.mxu0 %v944
    %2992 = vmatpush1.msra.mxu0 %v943
    %2993 = vmatprep.subr.mxu0 %v946
    %2994 = vmatpush1.msra.mxu0 %v945
    %2995 = vmatprep.subr.mxu0 %v948
    %2996 = vmatpush1.msra.mxu0 %v947
    %2997 = vmatprep.subr.mxu0 %v950
    %2998 = vmatpush1.msra.mxu0 %v949
    %2999 = vmatprep.subr.mxu0 %v952
    %3000 = vmatpush1.msra.mxu0 %v951
    %3001 = vmatprep.subr.mxu0 %v954
    %3002 = vmatpush1.msra.mxu0 %v953
    %3003 = vmatprep.subr.mxu0 %v956
    %3004 = vmatpush1.msra.mxu0 %v955
    %3005 = vmatprep.subr.mxu0 %v958
    %3006 = vmatpush1.msra.mxu0 %v957
    %3007 = vmatprep.subr.mxu0 %v960
    %3008 = vmatpush1.msra.mxu0 %v959
    %3009 = vmatprep.subr.mxu0 %v962
    %3010 = vmatpush1.msra.mxu0 %v961
    %3011 = vmatprep.subr.mxu0 %v964
    %3012 = vmatpush1.msra.mxu0 %v963
    %3013 = vmatprep.subr.mxu0 %v966
    %3014 = vmatpush1.msra.mxu0 %v965
    %3015 = vmatprep.subr.mxu0 %v968
    %3016 = vmatpush1.msra.mxu0 %v967
    %3017 = vmatprep.subr.mxu0 %v970
    %3018 = vmatpush1.msra.mxu0 %v969
    %3019 = vmatprep.subr.mxu0 %v972
    %3020 = vmatpush1.msra.mxu0 %v971
    %3021 = vmatprep.subr.mxu0 %v974
    %3022 = vmatpush1.msra.mxu0 %v973
    %3023 = vmatprep.subr.mxu0 %v976
    %3024 = vmatpush1.msra.mxu0 %v975
    %3025 = vmatprep.subr.mxu0 %v978
    %3026 = vmatpush1.msra.mxu0 %v977
    %3027 = vmatprep.mubr.f32.mxu0 %v2943
    %3028 = vmatmul.mubr.f32.gmra.mrb[0].mxu0 %v2941
    %v3029 = vpop.f32.mrb[0].mxu0
    %v3030 = vadd.f32 0.0, %v3029
    %v3031 = vpop.f32.mrb[0].mxu0
    %v3032 = vadd.f32 0.0, %v3031
    %3033 = vmatprep.mubr.f32.mxu0 %v2949
    %3034 = vmatmul.mubr.f32.gmra.mrb[0].mxu0 %v2947
    %v3035 = vpop.f32.mrb[0].mxu0
    %v3036 = vadd.f32 0.0, %v3035
    %v3037 = vpop.f32.mrb[0].mxu0
    %v3038 = vadd.f32 0.0, %v3037
    %3039 = vmatprep.mubr.f32.mxu0 %v2955
    %3040 = vmatmul.mubr.f32.gmra.mrb[0].mxu0 %v2953
    %v3041 = vpop.f32.mrb[0].mxu0
    %v3042 = vadd.f32 0.0, %v3041
    %v3043 = vpop.f32.mrb[0].mxu0
    %v3044 = vadd.f32 0.0, %v3043
    %3045 = vmatprep.mubr.f32.mxu0 %v2961
    %3046 = vmatmul.mubr.f32.gmra.mrb[0].mxu0 %v2959
    %v3047 = vpop.f32.mrb[0].mxu0
    %v3048 = vadd.f32 0.0, %v3047
    %v3049 = vpop.f32.mrb[0].mxu0
    %v3050 = vadd.f32 0.0, %v3049
    %3051 = vdwg.mxu0
    %3052 = vmatprep.subr.mxu0 %v2507
    %3053 = vmatpush1.msra.mxu0 %v2505
    %3054 = vmatprep.subr.mxu0 %v2513
    %3055 = vmatpush1.msra.mxu0 %v2511
    %3056 = vmatprep.subr.mxu0 %v2519
    %3057 = vmatpush1.msra.mxu0 %v2517
    %3058 = vmatprep.subr.mxu0 %v2525
    %3059 = vmatpush1.msra.mxu0 %v2523
    %3060 = vmatprep.subr.mxu0 0.0
    %3061 = vmatpush1.msra.mxu0 0.0
    %3062 = vmatprep.subr.mxu0 0.0
    %3063 = vmatpush1.msra.mxu0 0.0
    %3064 = vmatprep.subr.mxu0 0.0
    %3065 = vmatpush1.msra.mxu0 0.0
    %3066 = vmatprep.subr.mxu0 0.0
    %3067 = vmatpush1.msra.mxu0 0.0
    %3068 = vmatprep.subr.mxu0 0.0
    %3069 = vmatpush1.msra.mxu0 0.0
    %3070 = vmatprep.subr.mxu0 0.0
    %3071 = vmatpush1.msra.mxu0 0.0
    %3072 = vmatprep.subr.mxu0 0.0
    %3073 = vmatpush1.msra.mxu0 0.0
    %3074 = vmatprep.subr.mxu0 0.0
    %3075 = vmatpush1.msra.mxu0 0.0
    %3076 = vmatprep.subr.mxu0 0.0
    %3077 = vmatpush1.msra.mxu0 0.0
    %3078 = vmatprep.subr.mxu0 0.0
    %3079 = vmatpush1.msra.mxu0 0.0
    %3080 = vmatprep.subr.mxu0 0.0
    %3081 = vmatpush1.msra.mxu0 0.0
    %3082 = vmatprep.subr.mxu0 0.0
    %3083 = vmatpush1.msra.mxu0 0.0
    %3084 = vmatprep.subr.mxu0 0.0
    %3085 = vmatpush1.msra.mxu0 0.0
    %3086 = vmatprep.subr.mxu0 0.0
    %3087 = vmatpush1.msra.mxu0 0.0
    %3088 = vmatprep.subr.mxu0 0.0
    %3089 = vmatpush1.msra.mxu0 0.0
    %3090 = vmatprep.subr.mxu0 0.0
    %3091 = vmatpush1.msra.mxu0 0.0
    %3092 = vmatprep.subr.mxu0 0.0
    %3093 = vmatpush1.msra.mxu0 0.0
    %3094 = vmatprep.subr.mxu0 0.0
    %3095 = vmatpush1.msra.mxu0 0.0
    %3096 = vmatprep.subr.mxu0 0.0
    %3097 = vmatpush1.msra.mxu0 0.0
    %3098 = vmatprep.subr.mxu0 0.0
    %3099 = vmatpush1.msra.mxu0 0.0
    %3100 = vmatprep.subr.mxu0 0.0
    %3101 = vmatpush1.msra.mxu0 0.0
    %3102 = vmatprep.subr.mxu0 0.0
    %3103 = vmatpush1.msra.mxu0 0.0
    %3104 = vmatprep.subr.mxu0 0.0
    %3105 = vmatpush1.msra.mxu0 0.0
    %3106 = vmatprep.subr.mxu0 0.0
    %3107 = vmatpush1.msra.mxu0 0.0
    %3108 = vmatprep.subr.mxu0 0.0
    %3109 = vmatpush1.msra.mxu0 0.0
    %3110 = vmatprep.subr.mxu0 0.0
    %3111 = vmatpush1.msra.mxu0 0.0
    %3112 = vmatprep.subr.mxu0 0.0
    %3113 = vmatpush1.msra.mxu0 0.0
    %3114 = vmatprep.subr.mxu0 0.0
    %3115 = vmatpush1.msra.mxu0 0.0
    %3116 = vmatprep.mubr.f32.mxu0 0.0
    %3117 = vmatmul.mubr.f32.gmra.mrb[0].mxu0 %v2338
    %v3118 = vpop.f32.mrb[0].mxu0
    %v3119 = vadd.f32 0.0, %v3118
    %v3120 = vpop.f32.mrb[0].mxu0
    %v3121 = vadd.f32 0.0, %v3120
    %3122 = vmatprep.mubr.f32.mxu0 0.0
    %3123 = vmatmul.mubr.f32.gmra.mrb[0].mxu0 %v2341
    %v3124 = vpop.f32.mrb[0].mxu0
    %v3125 = vadd.f32 0.0, %v3124
    %v3126 = vpop.f32.mrb[0].mxu0
    %v3127 = vadd.f32 0.0, %v3126
    %3128 = vmatprep.mubr.f32.mxu0 0.0
    %3129 = vmatmul.mubr.f32.gmra.mrb[0].mxu0 %v2344
    %v3130 = vpop.f32.mrb[0].mxu0
    %v3131 = vadd.f32 0.0, %v3130
    %v3132 = vpop.f32.mrb[0].mxu0
    %v3133 = vadd.f32 0.0, %v3132
    %3134 = vmatprep.mubr.f32.mxu0 0.0
    %3135 = vmatmul.mubr.f32.gmra.mrb[0].mxu0 %v2347
    %v3136 = vpop.f32.mrb[0].mxu0
    %v3137 = vadd.f32 0.0, %v3136
    %v3138 = vpop.f32.mrb[0].mxu0
    %v3139 = vadd.f32 0.0, %v3138
    %3140 = vdwg.mxu0
    %3141 = vmatprep.subr.mxu0 %v1060
    %3142 = vmatpush1.msra.mxu0 %v1059
    %3143 = vmatprep.subr.mxu0 %v1062
    %3144 = vmatpush1.msra.mxu0 %v1061
    %3145 = vmatprep.subr.mxu0 %v1064
    %3146 = vmatpush1.msra.mxu0 %v1063
    %3147 = vmatprep.subr.mxu0 %v1066
    %3148 = vmatpush1.msra.mxu0 %v1065
    %3149 = vmatprep.subr.mxu0 %v1068
    %3150 = vmatpush1.msra.mxu0 %v1067
    %3151 = vmatprep.subr.mxu0 %v1070
    %3152 = vmatpush1.msra.mxu0 %v1069
    %3153 = vmatprep.subr.mxu0 %v1072
    %3154 = vmatpush1.msra.mxu0 %v1071
    %3155 = vmatprep.subr.mxu0 %v1074
    %3156 = vmatpush1.msra.mxu0 %v1073
    %3157 = vmatprep.subr.mxu0 %v1076
    %3158 = vmatpush1.msra.mxu0 %v1075
    %3159 = vmatprep.subr.mxu0 %v1078
    %3160 = vmatpush1.msra.mxu0 %v1077
    %3161 = vmatprep.subr.mxu0 %v1080
    %3162 = vmatpush1.msra.mxu0 %v1079
    %3163 = vmatprep.subr.mxu0 %v1082
    %3164 = vmatpush1.msra.mxu0 %v1081
    %3165 = vmatprep.subr.mxu0 %v1084
    %3166 = vmatpush1.msra.mxu0 %v1083
    %3167 = vmatprep.subr.mxu0 %v1086
    %3168 = vmatpush1.msra.mxu0 %v1085
    %3169 = vmatprep.subr.mxu0 %v1088
    %3170 = vmatpush1.msra.mxu0 %v1087
    %3171 = vmatprep.subr.mxu0 %v1090
    %3172 = vmatpush1.msra.mxu0 %v1089
    %3173 = vmatprep.subr.mxu0 %v1092
    %3174 = vmatpush1.msra.mxu0 %v1091
    %3175 = vmatprep.subr.mxu0 %v1094
    %3176 = vmatpush1.msra.mxu0 %v1093
    %3177 = vmatprep.subr.mxu0 %v1096
    %3178 = vmatpush1.msra.mxu0 %v1095
    %3179 = vmatprep.subr.mxu0 %v1098
    %3180 = vmatpush1.msra.mxu0 %v1097
    %3181 = vmatprep.subr.mxu0 %v1100
    %3182 = vmatpush1.msra.mxu0 %v1099
    %3183 = vmatprep.subr.mxu0 %v1102
    %3184 = vmatpush1.msra.mxu0 %v1101
    %3185 = vmatprep.subr.mxu0 %v1104
    %3186 = vmatpush1.msra.mxu0 %v1103
    %3187 = vmatprep.subr.mxu0 %v1106
    %3188 = vmatpush1.msra.mxu0 %v1105
    %3189 = vmatprep.subr.mxu0 %v1108
    %3190 = vmatpush1.msra.mxu0 %v1107
    %3191 = vmatprep.subr.mxu0 %v1110
    %3192 = vmatpush1.msra.mxu0 %v1109
    %3193 = vmatprep.subr.mxu0 %v1112
    %3194 = vmatpush1.msra.mxu0 %v1111
    %3195 = vmatprep.subr.mxu0 %v1114
    %3196 = vmatpush1.msra.mxu0 %v1113
    %3197 = vmatprep.subr.mxu0 %v1116
    %3198 = vmatpush1.msra.mxu0 %v1115
    %3199 = vmatprep.subr.mxu0 %v1118
    %3200 = vmatpush1.msra.mxu0 %v1117
    %3201 = vmatprep.subr.mxu0 %v1120
    %3202 = vmatpush1.msra.mxu0 %v1119
    %3203 = vmatprep.subr.mxu0 %v1122
    %3204 = vmatpush1.msra.mxu0 %v1121
    %3205 = vmatprep.mubr.f32.mxu0 %v3121
    %3206 = vmatmul.mubr.f32.gmra.mrb[0].mxu0 %v3119
    %v3207 = vpop.f32.mrb[0].mxu0
    %v3208 = vadd.f32 0.0, %v3207
    %v3209 = vpop.f32.mrb[0].mxu0
    %v3210 = vadd.f32 0.0, %v3209
    %3211 = vmatprep.mubr.f32.mxu0 %v3127
    %3212 = vmatmul.mubr.f32.gmra.mrb[0].mxu0 %v3125
    %v3213 = vpop.f32.mrb[0].mxu0
    %v3214 = vadd.f32 0.0, %v3213
    %v3215 = vpop.f32.mrb[0].mxu0
    %v3216 = vadd.f32 0.0, %v3215
    %3217 = vmatprep.mubr.f32.mxu0 %v3133
    %3218 = vmatmul.mubr.f32.gmra.mrb[0].mxu0 %v3131
    %v3219 = vpop.f32.mrb[0].mxu0
    %v3220 = vadd.f32 0.0, %v3219
    %v3221 = vpop.f32.mrb[0].mxu0
    %v3222 = vadd.f32 0.0, %v3221
    %3223 = vmatprep.mubr.f32.mxu0 %v3139
    %3224 = vmatmul.mubr.f32.gmra.mrb[0].mxu0 %v3137
    %v3225 = vpop.f32.mrb[0].mxu0
    %v3226 = vadd.f32 0.0, %v3225
    %v3227 = vpop.f32.mrb[0].mxu0
    %v3228 = vadd.f32 0.0, %v3227
    %3229 = vdwg.mxu0
    %3230 = vmatprep.subr.mxu0 %v1132
    %3231 = vmatpush1.msra.mxu0 %v1131
    %3232 = vmatprep.subr.mxu0 %v1134
    %3233 = vmatpush1.msra.mxu0 %v1133
    %3234 = vmatprep.subr.mxu0 %v1136
    %3235 = vmatpush1.msra.mxu0 %v1135
    %3236 = vmatprep.subr.mxu0 %v1138
    %3237 = vmatpush1.msra.mxu0 %v1137
    %3238 = vmatprep.subr.mxu0 %v1140
    %3239 = vmatpush1.msra.mxu0 %v1139
    %3240 = vmatprep.subr.mxu0 %v1142
    %3241 = vmatpush1.msra.mxu0 %v1141
    %3242 = vmatprep.subr.mxu0 %v1144
    %3243 = vmatpush1.msra.mxu0 %v1143
    %3244 = vmatprep.subr.mxu0 %v1146
    %3245 = vmatpush1.msra.mxu0 %v1145
    %3246 = vmatprep.subr.mxu0 %v1148
    %3247 = vmatpush1.msra.mxu0 %v1147
    %3248 = vmatprep.subr.mxu0 %v1150
    %3249 = vmatpush1.msra.mxu0 %v1149
    %3250 = vmatprep.subr.mxu0 %v1152
    %3251 = vmatpush1.msra.mxu0 %v1151
    %3252 = vmatprep.subr.mxu0 %v1154
    %3253 = vmatpush1.msra.mxu0 %v1153
    %3254 = vmatprep.subr.mxu0 %v1156
    %3255 = vmatpush1.msra.mxu0 %v1155
    %3256 = vmatprep.subr.mxu0 %v1158
    %3257 = vmatpush1.msra.mxu0 %v1157
    %3258 = vmatprep.subr.mxu0 %v1160
    %3259 = vmatpush1.msra.mxu0 %v1159
    %3260 = vmatprep.subr.mxu0 %v1162
    %3261 = vmatpush1.msra.mxu0 %v1161
    %3262 = vmatprep.subr.mxu0 %v1164
    %3263 = vmatpush1.msra.mxu0 %v1163
    %3264 = vmatprep.subr.mxu0 %v1166
    %3265 = vmatpush1.msra.mxu0 %v1165
    %3266 = vmatprep.subr.mxu0 %v1168
    %3267 = vmatpush1.msra.mxu0 %v1167
    %3268 = vmatprep.subr.mxu0 %v1170
    %3269 = vmatpush1.msra.mxu0 %v1169
    %3270 = vmatprep.subr.mxu0 %v1172
    %3271 = vmatpush1.msra.mxu0 %v1171
    %3272 = vmatprep.subr.mxu0 %v1174
    %3273 = vmatpush1.msra.mxu0 %v1173
    %3274 = vmatprep.subr.mxu0 %v1176
    %3275 = vmatpush1.msra.mxu0 %v1175
    %3276 = vmatprep.subr.mxu0 %v1178
    %3277 = vmatpush1.msra.mxu0 %v1177
    %3278 = vmatprep.subr.mxu0 %v1180
    %3279 = vmatpush1.msra.mxu0 %v1179
    %3280 = vmatprep.subr.mxu0 %v1182
    %3281 = vmatpush1.msra.mxu0 %v1181
    %3282 = vmatprep.subr.mxu0 %v1184
    %3283 = vmatpush1.msra.mxu0 %v1183
    %3284 = vmatprep.subr.mxu0 %v1186
    %3285 = vmatpush1.msra.mxu0 %v1185
    %3286 = vmatprep.subr.mxu0 %v1188
    %3287 = vmatpush1.msra.mxu0 %v1187
    %3288 = vmatprep.subr.mxu0 %v1190
    %3289 = vmatpush1.msra.mxu0 %v1189
    %3290 = vmatprep.subr.mxu0 %v1192
    %3291 = vmatpush1.msra.mxu0 %v1191
    %3292 = vmatprep.subr.mxu0 %v1194
    %3293 = vmatpush1.msra.mxu0 %v1193
    %3294 = vmatprep.mubr.f32.mxu0 %v3032
    %3295 = vmatmul.mubr.f32.gmra.mrb[0].mxu0 %v3030
    %v3296 = vpop.f32.mrb[0].mxu0
    %v3297 = vadd.f32 %v2594, %v3296
    %v3298 = vpop.f32.mrb[0].mxu0
    %v3299 = vadd.f32 %v2596, %v3298
    %3300 = vmatprep.mubr.f32.mxu0 %v3038
    %3301 = vmatmul.mubr.f32.gmra.mrb[0].mxu0 %v3036
    %v3302 = vpop.f32.mrb[0].mxu0
    %v3303 = vadd.f32 %v2600, %v3302
    %v3304 = vpop.f32.mrb[0].mxu0
    %v3305 = vadd.f32 %v2602, %v3304
    %3306 = vmatprep.mubr.f32.mxu0 %v3044
    %3307 = vmatmul.mubr.f32.gmra.mrb[0].mxu0 %v3042
    %v3308 = vpop.f32.mrb[0].mxu0
    %v3309 = vadd.f32 %v2606, %v3308
    %v3310 = vpop.f32.mrb[0].mxu0
    %v3311 = vadd.f32 %v2608, %v3310
    %3312 = vmatprep.mubr.f32.mxu0 %v3050
    %3313 = vmatmul.mubr.f32.gmra.mrb[0].mxu0 %v3048
    %v3314 = vpop.f32.mrb[0].mxu0
    %v3315 = vadd.f32 %v2612, %v3314
    %v3316 = vpop.f32.mrb[0].mxu0
    %v3317 = vadd.f32 %v2614, %v3316
    %3318 = vdwg.mxu0
    %3319 = vmatprep.subr.mxu0 %v1276
    %3320 = vmatpush1.msra.mxu0 %v1275
    %3321 = vmatprep.subr.mxu0 %v1278
    %3322 = vmatpush1.msra.mxu0 %v1277
    %3323 = vmatprep.subr.mxu0 %v1280
    %3324 = vmatpush1.msra.mxu0 %v1279
    %3325 = vmatprep.subr.mxu0 %v1282
    %3326 = vmatpush1.msra.mxu0 %v1281
    %3327 = vmatprep.subr.mxu0 %v1284
    %3328 = vmatpush1.msra.mxu0 %v1283
    %3329 = vmatprep.subr.mxu0 %v1286
    %3330 = vmatpush1.msra.mxu0 %v1285
    %3331 = vmatprep.subr.mxu0 %v1288
    %3332 = vmatpush1.msra.mxu0 %v1287
    %3333 = vmatprep.subr.mxu0 %v1290
    %3334 = vmatpush1.msra.mxu0 %v1289
    %3335 = vmatprep.subr.mxu0 %v1292
    %3336 = vmatpush1.msra.mxu0 %v1291
    %3337 = vmatprep.subr.mxu0 %v1294
    %3338 = vmatpush1.msra.mxu0 %v1293
    %3339 = vmatprep.subr.mxu0 %v1296
    %3340 = vmatpush1.msra.mxu0 %v1295
    %3341 = vmatprep.subr.mxu0 %v1298
    %3342 = vmatpush1.msra.mxu0 %v1297
    %3343 = vmatprep.subr.mxu0 %v1300
    %3344 = vmatpush1.msra.mxu0 %v1299
    %3345 = vmatprep.subr.mxu0 %v1302
    %3346 = vmatpush1.msra.mxu0 %v1301
    %3347 = vmatprep.subr.mxu0 %v1304
    %3348 = vmatpush1.msra.mxu0 %v1303
    %3349 = vmatprep.subr.mxu0 %v1306
    %3350 = vmatpush1.msra.mxu0 %v1305
    %3351 = vmatprep.subr.mxu0 %v1308
    %3352 = vmatpush1.msra.mxu0 %v1307
    %3353 = vmatprep.subr.mxu0 %v1310
    %3354 = vmatpush1.msra.mxu0 %v1309
    %3355 = vmatprep.subr.mxu0 %v1312
    %3356 = vmatpush1.msra.mxu0 %v1311
    %3357 = vmatprep.subr.mxu0 %v1314
    %3358 = vmatpush1.msra.mxu0 %v1313
    %3359 = vmatprep.subr.mxu0 %v1316
    %3360 = vmatpush1.msra.mxu0 %v1315
    %3361 = vmatprep.subr.mxu0 %v1318
    %3362 = vmatpush1.msra.mxu0 %v1317
    %3363 = vmatprep.subr.mxu0 %v1320
    %3364 = vmatpush1.msra.mxu0 %v1319
    %3365 = vmatprep.subr.mxu0 %v1322
    %3366 = vmatpush1.msra.mxu0 %v1321
    %3367 = vmatprep.subr.mxu0 %v1324
    %3368 = vmatpush1.msra.mxu0 %v1323
    %3369 = vmatprep.subr.mxu0 %v1326
    %3370 = vmatpush1.msra.mxu0 %v1325
    %3371 = vmatprep.subr.mxu0 %v1328
    %3372 = vmatpush1.msra.mxu0 %v1327
    %3373 = vmatprep.subr.mxu0 %v1330
    %3374 = vmatpush1.msra.mxu0 %v1329
    %3375 = vmatprep.subr.mxu0 %v1332
    %3376 = vmatpush1.msra.mxu0 %v1331
    %3377 = vmatprep.subr.mxu0 %v1334
    %3378 = vmatpush1.msra.mxu0 %v1333
    %3379 = vmatprep.subr.mxu0 %v1336
    %3380 = vmatpush1.msra.mxu0 %v1335
    %3381 = vmatprep.subr.mxu0 %v1338
    %3382 = vmatpush1.msra.mxu0 %v1337
    %3383 = vmatprep.mubr.f32.mxu0 %v3210
    %3384 = vmatmul.mubr.f32.gmra.mrb[0].mxu0 %v3208
    %v3385 = vpop.f32.mrb[0].mxu0
    %v3386 = vadd.f32 0.0, %v3385
    %v3387 = vpop.f32.mrb[0].mxu0
    %v3388 = vadd.f32 0.0, %v3387
    %3389 = vmatprep.mubr.f32.mxu0 %v3216
    %3390 = vmatmul.mubr.f32.gmra.mrb[0].mxu0 %v3214
    %v3391 = vpop.f32.mrb[0].mxu0
    %v3392 = vadd.f32 0.0, %v3391
    %v3393 = vpop.f32.mrb[0].mxu0
    %v3394 = vadd.f32 0.0, %v3393
    %3395 = vmatprep.mubr.f32.mxu0 %v3222
    %3396 = vmatmul.mubr.f32.gmra.mrb[0].mxu0 %v3220
    %v3397 = vpop.f32.mrb[0].mxu0
    %v3398 = vadd.f32 0.0, %v3397
    %v3399 = vpop.f32.mrb[0].mxu0
    %v3400 = vadd.f32 0.0, %v3399
    %3401 = vmatprep.mubr.f32.mxu0 %v3228
    %3402 = vmatmul.mubr.f32.gmra.mrb[0].mxu0 %v3226
    %v3403 = vpop.f32.mrb[0].mxu0
    %v3404 = vadd.f32 0.0, %v3403
    %v3405 = vpop.f32.mrb[0].mxu0
    %v3406 = vadd.f32 0.0, %v3405
    %3407 = vdwg.mxu0
    %v3408 = vadd.f32 %v3297, %v3386
    %v3409 = vadd.f32 %v3299, %v3388
    %v3410 = vadd.f32 %v3303, %v3392
    %v3411 = vadd.f32 %v3305, %v3394
    %v3412 = vadd.f32 %v3309, %v3398
    %v3413 = vadd.f32 %v3311, %v3400
    %v3414 = vadd.f32 %v3315, %v3404
    %v3415 = vadd.f32 %v3317, %v3406
    %v3416 = vxor.u32 %v3408, 2147483648
    %v3417 = vxor.u32 %v3409, 2147483648
    %v3418 = vxor.u32 %v3410, 2147483648
    %v3419 = vxor.u32 %v3411, 2147483648
    %v3420 = vxor.u32 %v3412, 2147483648
    %v3421 = vxor.u32 %v3413, 2147483648
    %v3422 = vxor.u32 %v3414, 2147483648
    %v3423 = vxor.u32 %v3415, 2147483648
    %v3424 = vmul.f32 %v3416, 1.442695
    %v3425 = vpow.pop %v3424
    %v3426 = vmul.f32 %v3417, 1.442695
    %v3427 = vpow.pop %v3426
    %v3428 = vmul.f32 %v3418, 1.442695
    %v3429 = vpow.pop %v3428
    %v3430 = vmul.f32 %v3419, 1.442695
    %v3431 = vpow.pop %v3430
    %v3432 = vmul.f32 %v3420, 1.442695
    %v3433 = vpow.pop %v3432
    %v3434 = vmul.f32 %v3421, 1.442695
    %v3435 = vpow.pop %v3434
    %v3436 = vmul.f32 %v3422, 1.442695
    %v3437 = vpow.pop %v3436
    %v3438 = vmul.f32 %v3423, 1.442695
    %v3439 = vpow.pop %v3438
    %v3440 = vadd.f32 %v3425, 1.0
    %v3441 = vadd.f32 %v3427, 1.0
    %v3442 = vadd.f32 %v3429, 1.0
    %v3443 = vadd.f32 %v3431, 1.0
    %v3444 = vadd.f32 %v3433, 1.0
    %v3445 = vadd.f32 %v3435, 1.0
    %v3446 = vadd.f32 %v3437, 1.0
    %v3447 = vadd.f32 %v3439, 1.0
    %v3448 = vrcp.pop %v3440
    %v3449 = vmul.f32 1.0, %v3448
    %v3450 = vrcp.pop %v3441
    %v3451 = vmul.f32 1.0, %v3450
    %v3452 = vrcp.pop %v3442
    %v3453 = vmul.f32 1.0, %v3452
    %v3454 = vrcp.pop %v3443
    %v3455 = vmul.f32 1.0, %v3454
    %v3456 = vrcp.pop %v3444
    %v3457 = vmul.f32 1.0, %v3456
    %v3458 = vrcp.pop %v3445
    %v3459 = vmul.f32 1.0, %v3458
    %v3460 = vrcp.pop %v3446
    %v3461 = vmul.f32 1.0, %v3460
    %v3462 = vrcp.pop %v3447
    %v3463 = vmul.f32 1.0, %v3462
    %v3464 = vsub.f32 %v3030, %v3208
    %v3465 = vsub.f32 %v3032, %v3210
    %v3466 = vsub.f32 %v3036, %v3214
    %v3467 = vsub.f32 %v3038, %v3216
    %v3468 = vsub.f32 %v3042, %v3220
    %v3469 = vsub.f32 %v3044, %v3222
    %v3470 = vsub.f32 %v3048, %v3226
    %v3471 = vsub.f32 %v3050, %v3228
    %v3472 = vmul.f32 %v3449, %v3464
    %v3473 = vmul.f32 %v3451, %v3465
    %v3474 = vmul.f32 %v3453, %v3466
    %v3475 = vmul.f32 %v3455, %v3467
    %v3476 = vmul.f32 %v3457, %v3468
    %v3477 = vmul.f32 %v3459, %v3469
    %v3478 = vmul.f32 %v3461, %v3470
    %v3479 = vmul.f32 %v3463, %v3471
    %v3480 = vadd.f32 %v3208, %v3472
    %v3481 = vadd.f32 %v3210, %v3473
    %v3482 = vadd.f32 %v3214, %v3474
    %v3483 = vadd.f32 %v3216, %v3475
    %v3484 = vadd.f32 %v3220, %v3476
    %v3485 = vadd.f32 %v3222, %v3477
    %v3486 = vadd.f32 %v3226, %v3478
    %v3487 = vadd.f32 %v3228, %v3479
    %3488 = vmatprep.subr.mxu0 %v1420
    %3489 = vmatpush1.msra.mxu0 %v1419
    %3490 = vmatprep.subr.mxu0 %v1422
    %3491 = vmatpush1.msra.mxu0 %v1421
    %3492 = vmatprep.subr.mxu0 %v1424
    %3493 = vmatpush1.msra.mxu0 %v1423
    %3494 = vmatprep.subr.mxu0 %v1426
    %3495 = vmatpush1.msra.mxu0 %v1425
    %3496 = vmatprep.subr.mxu0 %v1428
    %3497 = vmatpush1.msra.mxu0 %v1427
    %3498 = vmatprep.subr.mxu0 %v1430
    %3499 = vmatpush1.msra.mxu0 %v1429
    %3500 = vmatprep.subr.mxu0 %v1432
    %3501 = vmatpush1.msra.mxu0 %v1431
    %3502 = vmatprep.subr.mxu0 %v1434
    %3503 = vmatpush1.msra.mxu0 %v1433
    %3504 = vmatprep.subr.mxu0 %v1436
    %3505 = vmatpush1.msra.mxu0 %v1435
    %3506 = vmatprep.subr.mxu0 %v1438
    %3507 = vmatpush1.msra.mxu0 %v1437
    %3508 = vmatprep.subr.mxu0 %v1440
    %3509 = vmatpush1.msra.mxu0 %v1439
    %3510 = vmatprep.subr.mxu0 %v1442
    %3511 = vmatpush1.msra.mxu0 %v1441
    %3512 = vmatprep.subr.mxu0 %v1444
    %3513 = vmatpush1.msra.mxu0 %v1443
    %3514 = vmatprep.subr.mxu0 %v1446
    %3515 = vmatpush1.msra.mxu0 %v1445
    %3516 = vmatprep.subr.mxu0 %v1448
    %3517 = vmatpush1.msra.mxu0 %v1447
    %3518 = vmatprep.subr.mxu0 %v1450
    %3519 = vmatpush1.msra.mxu0 %v1449
    %3520 = vmatprep.subr.mxu0 %v1452
    %3521 = vmatpush1.msra.mxu0 %v1451
    %3522 = vmatprep.subr.mxu0 %v1454
    %3523 = vmatpush1.msra.mxu0 %v1453
    %3524 = vmatprep.subr.mxu0 %v1456
    %3525 = vmatpush1.msra.mxu0 %v1455
    %3526 = vmatprep.subr.mxu0 %v1458
    %3527 = vmatpush1.msra.mxu0 %v1457
    %3528 = vmatprep.subr.mxu0 %v1460
    %3529 = vmatpush1.msra.mxu0 %v1459
    %3530 = vmatprep.subr.mxu0 %v1462
    %3531 = vmatpush1.msra.mxu0 %v1461
    %3532 = vmatprep.subr.mxu0 %v1464
    %3533 = vmatpush1.msra.mxu0 %v1463
    %3534 = vmatprep.subr.mxu0 %v1466
    %3535 = vmatpush1.msra.mxu0 %v1465
    %3536 = vmatprep.subr.mxu0 %v1468
    %3537 = vmatpush1.msra.mxu0 %v1467
    %3538 = vmatprep.subr.mxu0 %v1470
    %3539 = vmatpush1.msra.mxu0 %v1469
    %3540 = vmatprep.subr.mxu0 %v1472
    %3541 = vmatpush1.msra.mxu0 %v1471
    %3542 = vmatprep.subr.mxu0 %v1474
    %3543 = vmatpush1.msra.mxu0 %v1473
    %3544 = vmatprep.subr.mxu0 %v1476
    %3545 = vmatpush1.msra.mxu0 %v1475
    %3546 = vmatprep.subr.mxu0 %v1478
    %3547 = vmatpush1.msra.mxu0 %v1477
    %3548 = vmatprep.subr.mxu0 %v1480
    %3549 = vmatpush1.msra.mxu0 %v1479
    %3550 = vmatprep.subr.mxu0 %v1482
    %3551 = vmatpush1.msra.mxu0 %v1481
    %3552 = vmatprep.mubr.f32.mxu0 %v3481
    %3553 = vmatmul.mubr.f32.gmra.mrb[0].mxu0 %v3480
    %v3554 = vpop.f32.mrb[0].mxu0
    %v3555 = vadd.f32 0.0, %v3554
    %v3556 = vpop.f32.mrb[0].mxu0
    %v3557 = vadd.f32 0.0, %v3556
    %3558 = vmatprep.mubr.f32.mxu0 %v3483
    %3559 = vmatmul.mubr.f32.gmra.mrb[0].mxu0 %v3482
    %v3560 = vpop.f32.mrb[0].mxu0
    %v3561 = vadd.f32 0.0, %v3560
    %v3562 = vpop.f32.mrb[0].mxu0
    %v3563 = vadd.f32 0.0, %v3562
    %3564 = vmatprep.mubr.f32.mxu0 %v3485
    %3565 = vmatmul.mubr.f32.gmra.mrb[0].mxu0 %v3484
    %v3566 = vpop.f32.mrb[0].mxu0
    %v3567 = vadd.f32 0.0, %v3566
    %v3568 = vpop.f32.mrb[0].mxu0
    %v3569 = vadd.f32 0.0, %v3568
    %3570 = vmatprep.mubr.f32.mxu0 %v3487
    %3571 = vmatmul.mubr.f32.gmra.mrb[0].mxu0 %v3486
    %v3572 = vpop.f32.mrb[0].mxu0
    %v3573 = vadd.f32 0.0, %v3572
    %v3574 = vpop.f32.mrb[0].mxu0
    %v3575 = vadd.f32 0.0, %v3574
    %3576 = vdwg.mxu0
    %3577 = vmatprep.subr.mxu0 %v1348
    %3578 = vmatpush1.msra.mxu0 %v1347
    %3579 = vmatprep.subr.mxu0 %v1350
    %3580 = vmatpush1.msra.mxu0 %v1349
    %3581 = vmatprep.subr.mxu0 %v1352
    %3582 = vmatpush1.msra.mxu0 %v1351
    %3583 = vmatprep.subr.mxu0 %v1354
    %3584 = vmatpush1.msra.mxu0 %v1353
    %3585 = vmatprep.subr.mxu0 %v1356
    %3586 = vmatpush1.msra.mxu0 %v1355
    %3587 = vmatprep.subr.mxu0 %v1358
    %3588 = vmatpush1.msra.mxu0 %v1357
    %3589 = vmatprep.subr.mxu0 %v1360
    %3590 = vmatpush1.msra.mxu0 %v1359
    %3591 = vmatprep.subr.mxu0 %v1362
    %3592 = vmatpush1.msra.mxu0 %v1361
    %3593 = vmatprep.subr.mxu0 %v1364
    %3594 = vmatpush1.msra.mxu0 %v1363
    %3595 = vmatprep.subr.mxu0 %v1366
    %3596 = vmatpush1.msra.mxu0 %v1365
    %3597 = vmatprep.subr.mxu0 %v1368
    %3598 = vmatpush1.msra.mxu0 %v1367
    %3599 = vmatprep.subr.mxu0 %v1370
    %3600 = vmatpush1.msra.mxu0 %v1369
    %3601 = vmatprep.subr.mxu0 %v1372
    %3602 = vmatpush1.msra.mxu0 %v1371
    %3603 = vmatprep.subr.mxu0 %v1374
    %3604 = vmatpush1.msra.mxu0 %v1373
    %3605 = vmatprep.subr.mxu0 %v1376
    %3606 = vmatpush1.msra.mxu0 %v1375
    %3607 = vmatprep.subr.mxu0 %v1378
    %3608 = vmatpush1.msra.mxu0 %v1377
    %3609 = vmatprep.subr.mxu0 %v1380
    %3610 = vmatpush1.msra.mxu0 %v1379
    %3611 = vmatprep.subr.mxu0 %v1382
    %3612 = vmatpush1.msra.mxu0 %v1381
    %3613 = vmatprep.subr.mxu0 %v1384
    %3614 = vmatpush1.msra.mxu0 %v1383
    %3615 = vmatprep.subr.mxu0 %v1386
    %3616 = vmatpush1.msra.mxu0 %v1385
    %3617 = vmatprep.subr.mxu0 %v1388
    %3618 = vmatpush1.msra.mxu0 %v1387
    %3619 = vmatprep.subr.mxu0 %v1390
    %3620 = vmatpush1.msra.mxu0 %v1389
    %3621 = vmatprep.subr.mxu0 %v1392
    %3622 = vmatpush1.msra.mxu0 %v1391
    %3623 = vmatprep.subr.mxu0 %v1394
    %3624 = vmatpush1.msra.mxu0 %v1393
    %3625 = vmatprep.subr.mxu0 %v1396
    %3626 = vmatpush1.msra.mxu0 %v1395
    %3627 = vmatprep.subr.mxu0 %v1398
    %3628 = vmatpush1.msra.mxu0 %v1397
    %3629 = vmatprep.subr.mxu0 %v1400
    %3630 = vmatpush1.msra.mxu0 %v1399
    %3631 = vmatprep.subr.mxu0 %v1402
    %3632 = vmatpush1.msra.mxu0 %v1401
    %3633 = vmatprep.subr.mxu0 %v1404
    %3634 = vmatpush1.msra.mxu0 %v1403
    %3635 = vmatprep.subr.mxu0 %v1406
    %3636 = vmatpush1.msra.mxu0 %v1405
    %3637 = vmatprep.subr.mxu0 %v1408
    %3638 = vmatpush1.msra.mxu0 %v1407
    %3639 = vmatprep.subr.mxu0 %v1410
    %3640 = vmatpush1.msra.mxu0 %v1409
    %3641 = vmatprep.mubr.f32.mxu0 %v2867
    %3642 = vmatmul.mubr.f32.gmra.mrb[0].mxu0 %v2866
    %v3643 = vpop.f32.mrb[0].mxu0
    %v3644 = vadd.f32 %v3555, %v3643
    %v3645 = vpop.f32.mrb[0].mxu0
    %v3646 = vadd.f32 %v3557, %v3645
    %3647 = vmatprep.mubr.f32.mxu0 %v2869
    %3648 = vmatmul.mubr.f32.gmra.mrb[0].mxu0 %v2868
    %v3649 = vpop.f32.mrb[0].mxu0
    %v3650 = vadd.f32 %v3561, %v3649
    %v3651 = vpop.f32.mrb[0].mxu0
    %v3652 = vadd.f32 %v3563, %v3651
    %3653 = vmatprep.mubr.f32.mxu0 %v2871
    %3654 = vmatmul.mubr.f32.gmra.mrb[0].mxu0 %v2870
    %v3655 = vpop.f32.mrb[0].mxu0
    %v3656 = vadd.f32 %v3567, %v3655
    %v3657 = vpop.f32.mrb[0].mxu0
    %v3658 = vadd.f32 %v3569, %v3657
    %3659 = vmatprep.mubr.f32.mxu0 %v2873
    %3660 = vmatmul.mubr.f32.gmra.mrb[0].mxu0 %v2872
    %v3661 = vpop.f32.mrb[0].mxu0
    %v3662 = vadd.f32 %v3573, %v3661
    %v3663 = vpop.f32.mrb[0].mxu0
    %v3664 = vadd.f32 %v3575, %v3663
    %3665 = vdwg.mxu0
    %v3667 = vlaneseq
    %v3668 = vshrl.u32 %v3667, 7
    %v3669 = vsub.s32 0, %v3668
    %v3670 = vrot.slane %v1552, %v3669
    %v3671 = vlaneseq
    %v3672 = vshrl.u32 %v3671, 7
    %v3673 = vsub.s32 1, %v3672
    %v3674 = vrot.slane %v1552, %v3673
    %v3677 = vadd.f32 %v3644, %v3670
    %v3678 = vadd.f32 %v3646, %v3674
    %v3679 = vadd.f32 %v3650, %v3670
    %v3680 = vadd.f32 %v3652, %v3674
    %v3681 = vadd.f32 %v3656, %v3670
    %v3682 = vadd.f32 %v3658, %v3674
    %v3683 = vadd.f32 %v3662, %v3670
    %v3684 = vadd.f32 %v3664, %v3674
    %3685 = vmatprep.subr.mxu0 %v1484
    %3686 = vmatpush1.msra.mxu0 %v1483
    %3687 = vmatprep.subr.mxu0 %v1486
    %3688 = vmatpush1.msra.mxu0 %v1485
    %3689 = vmatprep.subr.mxu0 %v1488
    %3690 = vmatpush1.msra.mxu0 %v1487
    %3691 = vmatprep.subr.mxu0 %v1490
    %3692 = vmatpush1.msra.mxu0 %v1489
    %3693 = vmatprep.subr.mxu0 %v1492
    %3694 = vmatpush1.msra.mxu0 %v1491
    %3695 = vmatprep.subr.mxu0 %v1494
    %3696 = vmatpush1.msra.mxu0 %v1493
    %3697 = vmatprep.subr.mxu0 %v1496
    %3698 = vmatpush1.msra.mxu0 %v1495
    %3699 = vmatprep.subr.mxu0 %v1498
    %3700 = vmatpush1.msra.mxu0 %v1497
    %3701 = vmatprep.subr.mxu0 %v1500
    %3702 = vmatpush1.msra.mxu0 %v1499
    %3703 = vmatprep.subr.mxu0 %v1502
    %3704 = vmatpush1.msra.mxu0 %v1501
    %3705 = vmatprep.subr.mxu0 %v1504
    %3706 = vmatpush1.msra.mxu0 %v1503
    %3707 = vmatprep.subr.mxu0 %v1506
    %3708 = vmatpush1.msra.mxu0 %v1505
    %3709 = vmatprep.subr.mxu0 %v1508
    %3710 = vmatpush1.msra.mxu0 %v1507
    %3711 = vmatprep.subr.mxu0 %v1510
    %3712 = vmatpush1.msra.mxu0 %v1509
    %3713 = vmatprep.subr.mxu0 %v1512
    %3714 = vmatpush1.msra.mxu0 %v1511
    %3715 = vmatprep.subr.mxu0 %v1514
    %3716 = vmatpush1.msra.mxu0 %v1513
    %3717 = vmatprep.subr.mxu0 %v1516
    %3718 = vmatpush1.msra.mxu0 %v1515
    %3719 = vmatprep.subr.mxu0 %v1518
    %3720 = vmatpush1.msra.mxu0 %v1517
    %3721 = vmatprep.subr.mxu0 %v1520
    %3722 = vmatpush1.msra.mxu0 %v1519
    %3723 = vmatprep.subr.mxu0 %v1522
    %3724 = vmatpush1.msra.mxu0 %v1521
    %3725 = vmatprep.subr.mxu0 %v1524
    %3726 = vmatpush1.msra.mxu0 %v1523
    %3727 = vmatprep.subr.mxu0 %v1526
    %3728 = vmatpush1.msra.mxu0 %v1525
    %3729 = vmatprep.subr.mxu0 %v1528
    %3730 = vmatpush1.msra.mxu0 %v1527
    %3731 = vmatprep.subr.mxu0 %v1530
    %3732 = vmatpush1.msra.mxu0 %v1529
    %3733 = vmatprep.subr.mxu0 %v1532
    %3734 = vmatpush1.msra.mxu0 %v1531
    %3735 = vmatprep.subr.mxu0 %v1534
    %3736 = vmatpush1.msra.mxu0 %v1533
    %3737 = vmatprep.subr.mxu0 %v1536
    %3738 = vmatpush1.msra.mxu0 %v1535
    %3739 = vmatprep.subr.mxu0 %v1538
    %3740 = vmatpush1.msra.mxu0 %v1537
    %3741 = vmatprep.subr.mxu0 %v1540
    %3742 = vmatpush1.msra.mxu0 %v1539
    %3743 = vmatprep.subr.mxu0 %v1542
    %3744 = vmatpush1.msra.mxu0 %v1541
    %3745 = vmatprep.subr.mxu0 %v1544
    %3746 = vmatpush1.msra.mxu0 %v1543
    %3747 = vmatprep.subr.mxu0 %v1546
    %3748 = vmatpush1.msra.mxu0 %v1545
    %3749 = vmatprep.mubr.f32.mxu0 %v3678
    %3750 = vmatmul.mubr.f32.gmra.mrb[0].mxu0 %v3677
    %v3751 = vpop.f32.mrb[0].mxu0
    %v3752 = vadd.f32 0.0, %v3751
    %v3753 = vpop.f32.mrb[0].mxu0
    %v3754 = vadd.f32 0.0, %v3753
    %3755 = vmatprep.mubr.f32.mxu0 %v3680
    %3756 = vmatmul.mubr.f32.gmra.mrb[0].mxu0 %v3679
    %v3757 = vpop.f32.mrb[0].mxu0
    %v3758 = vadd.f32 0.0, %v3757
    %v3759 = vpop.f32.mrb[0].mxu0
    %v3760 = vadd.f32 0.0, %v3759
    %3761 = vmatprep.mubr.f32.mxu0 %v3682
    %3762 = vmatmul.mubr.f32.gmra.mrb[0].mxu0 %v3681
    %v3763 = vpop.f32.mrb[0].mxu0
    %v3764 = vadd.f32 0.0, %v3763
    %v3765 = vpop.f32.mrb[0].mxu0
    %v3766 = vadd.f32 0.0, %v3765
    %3767 = vmatprep.mubr.f32.mxu0 %v3684
    %3768 = vmatmul.mubr.f32.gmra.mrb[0].mxu0 %v3683
    %v3769 = vpop.f32.mrb[0].mxu0
    %v3770 = vadd.f32 0.0, %v3769
    %v3771 = vpop.f32.mrb[0].mxu0
    %v3772 = vadd.f32 0.0, %v3771
    %3773 = vdwg.mxu0
    %v3774 = vsub.f32 %v3677, %v3752
    %v3775 = vsub.f32 %v3678, %v3754
    %v3776 = vsub.f32 %v3679, %v3758
    %v3777 = vsub.f32 %v3680, %v3760
    %v3778 = vsub.f32 %v3681, %v3764
    %v3779 = vsub.f32 %v3682, %v3766
    %v3780 = vsub.f32 %v3683, %v3770
    %v3781 = vsub.f32 %v3684, %v3772
    %v3782 = vmul.f32 %v3774, %v3774
    %v3783 = vmul.f32 %v3775, %v3775
    %v3784 = vmul.f32 %v3776, %v3776
    %v3785 = vmul.f32 %v3777, %v3777
    %v3786 = vmul.f32 %v3778, %v3778
    %v3787 = vmul.f32 %v3779, %v3779
    %v3788 = vmul.f32 %v3780, %v3780
    %v3789 = vmul.f32 %v3781, %v3781
    %3790 = vmatprep.subr.mxu0 %v1484
    %3791 = vmatpush1.msra.mxu0 %v1483
    %3792 = vmatprep.subr.mxu0 %v1486
    %3793 = vmatpush1.msra.mxu0 %v1485
    %3794 = vmatprep.subr.mxu0 %v1488
    %3795 = vmatpush1.msra.mxu0 %v1487
    %3796 = vmatprep.subr.mxu0 %v1490
    %3797 = vmatpush1.msra.mxu0 %v1489
    %3798 = vmatprep.subr.mxu0 %v1492
    %3799 = vmatpush1.msra.mxu0 %v1491
    %3800 = vmatprep.subr.mxu0 %v1494
    %3801 = vmatpush1.msra.mxu0 %v1493
    %3802 = vmatprep.subr.mxu0 %v1496
    %3803 = vmatpush1.msra.mxu0 %v1495
    %3804 = vmatprep.subr.mxu0 %v1498
    %3805 = vmatpush1.msra.mxu0 %v1497
    %3806 = vmatprep.subr.mxu0 %v1500
    %3807 = vmatpush1.msra.mxu0 %v1499
    %3808 = vmatprep.subr.mxu0 %v1502
    %3809 = vmatpush1.msra.mxu0 %v1501
    %3810 = vmatprep.subr.mxu0 %v1504
    %3811 = vmatpush1.msra.mxu0 %v1503
    %3812 = vmatprep.subr.mxu0 %v1506
    %3813 = vmatpush1.msra.mxu0 %v1505
    %3814 = vmatprep.subr.mxu0 %v1508
    %3815 = vmatpush1.msra.mxu0 %v1507
    %3816 = vmatprep.subr.mxu0 %v1510
    %3817 = vmatpush1.msra.mxu0 %v1509
    %3818 = vmatprep.subr.mxu0 %v1512
    %3819 = vmatpush1.msra.mxu0 %v1511
    %3820 = vmatprep.subr.mxu0 %v1514
    %3821 = vmatpush1.msra.mxu0 %v1513
    %3822 = vmatprep.subr.mxu0 %v1516
    %3823 = vmatpush1.msra.mxu0 %v1515
    %3824 = vmatprep.subr.mxu0 %v1518
    %3825 = vmatpush1.msra.mxu0 %v1517
    %3826 = vmatprep.subr.mxu0 %v1520
    %3827 = vmatpush1.msra.mxu0 %v1519
    %3828 = vmatprep.subr.mxu0 %v1522
    %3829 = vmatpush1.msra.mxu0 %v1521
    %3830 = vmatprep.subr.mxu0 %v1524
    %3831 = vmatpush1.msra.mxu0 %v1523
    %3832 = vmatprep.subr.mxu0 %v1526
    %3833 = vmatpush1.msra.mxu0 %v1525
    %3834 = vmatprep.subr.mxu0 %v1528
    %3835 = vmatpush1.msra.mxu0 %v1527
    %3836 = vmatprep.subr.mxu0 %v1530
    %3837 = vmatpush1.msra.mxu0 %v1529
    %3838 = vmatprep.subr.mxu0 %v1532
    %3839 = vmatpush1.msra.mxu0 %v1531
    %3840 = vmatprep.subr.mxu0 %v1534
    %3841 = vmatpush1.msra.mxu0 %v1533
    %3842 = vmatprep.subr.mxu0 %v1536
    %3843 = vmatpush1.msra.mxu0 %v1535
    %3844 = vmatprep.subr.mxu0 %v1538
    %3845 = vmatpush1.msra.mxu0 %v1537
    %3846 = vmatprep.subr.mxu0 %v1540
    %3847 = vmatpush1.msra.mxu0 %v1539
    %3848 = vmatprep.subr.mxu0 %v1542
    %3849 = vmatpush1.msra.mxu0 %v1541
    %3850 = vmatprep.subr.mxu0 %v1544
    %3851 = vmatpush1.msra.mxu0 %v1543
    %3852 = vmatprep.subr.mxu0 %v1546
    %3853 = vmatpush1.msra.mxu0 %v1545
    %3854 = vmatprep.mubr.f32.mxu0 %v3783
    %3855 = vmatmul.mubr.f32.gmra.mrb[0].mxu0 %v3782
    %v3856 = vpop.f32.mrb[0].mxu0
    %v3857 = vadd.f32 1e-05, %v3856
    %v3858 = vpop.f32.mrb[0].mxu0
    %v3859 = vadd.f32 1e-05, %v3858
    %3860 = vmatprep.mubr.f32.mxu0 %v3785
    %3861 = vmatmul.mubr.f32.gmra.mrb[0].mxu0 %v3784
    %v3862 = vpop.f32.mrb[0].mxu0
    %v3863 = vadd.f32 1e-05, %v3862
    %v3864 = vpop.f32.mrb[0].mxu0
    %v3865 = vadd.f32 1e-05, %v3864
    %3866 = vmatprep.mubr.f32.mxu0 %v3787
    %3867 = vmatmul.mubr.f32.gmra.mrb[0].mxu0 %v3786
    %v3868 = vpop.f32.mrb[0].mxu0
    %v3869 = vadd.f32 1e-05, %v3868
    %v3870 = vpop.f32.mrb[0].mxu0
    %v3871 = vadd.f32 1e-05, %v3870
    %3872 = vmatprep.mubr.f32.mxu0 %v3789
    %3873 = vmatmul.mubr.f32.gmra.mrb[0].mxu0 %v3788
    %v3874 = vpop.f32.mrb[0].mxu0
    %v3875 = vadd.f32 1e-05, %v3874
    %v3876 = vpop.f32.mrb[0].mxu0
    %v3877 = vadd.f32 1e-05, %v3876
    %3878 = vdwg.mxu0
    %v3879 = vrsqrt.pop %v3857
    %v3880 = vrsqrt.pop %v3859
    %v3881 = vrsqrt.pop %v3863
    %v3882 = vrsqrt.pop %v3865
    %v3883 = vrsqrt.pop %v3869
    %v3884 = vrsqrt.pop %v3871
    %v3885 = vrsqrt.pop %v3875
    %v3886 = vrsqrt.pop %v3877
    %v3887 = vmul.f32 %v3774, %v3879
    %v3888 = vmul.f32 %v3775, %v3880
    %v3889 = vmul.f32 %v3776, %v3881
    %v3890 = vmul.f32 %v3777, %v3882
    %v3891 = vmul.f32 %v3778, %v3883
    %v3892 = vmul.f32 %v3779, %v3884
    %v3893 = vmul.f32 %v3780, %v3885
    %v3894 = vmul.f32 %v3781, %v3886
    %v3896 = vlaneseq
    %v3897 = vshrl.u32 %v3896, 7
    %v3898 = vsub.s32 0, %v3897
    %v3899 = vrot.slane %v1548, %v3898
    %v3900 = vlaneseq
    %v3901 = vshrl.u32 %v3900, 7
    %v3902 = vsub.s32 1, %v3901
    %v3903 = vrot.slane %v1548, %v3902
    %v3906 = vmul.f32 %v3887, %v3899
    %v3907 = vmul.f32 %v3888, %v3903
    %v3908 = vmul.f32 %v3889, %v3899
    %v3909 = vmul.f32 %v3890, %v3903
    %v3910 = vmul.f32 %v3891, %v3899
    %v3911 = vmul.f32 %v3892, %v3903
    %v3912 = vmul.f32 %v3893, %v3899
    %v3913 = vmul.f32 %v3894, %v3903
    %v3915 = vlaneseq
    %v3916 = vshrl.u32 %v3915, 7
    %v3917 = vsub.s32 0, %v3916
    %v3918 = vrot.slane %v1550, %v3917
    %v3919 = vlaneseq
    %v3920 = vshrl.u32 %v3919, 7
    %v3921 = vsub.s32 1, %v3920
    %v3922 = vrot.slane %v1550, %v3921
    %v3925 = vadd.f32 %v3906, %v3918
    %v3926 = vadd.f32 %v3907, %v3922
    %v3927 = vadd.f32 %v3908, %v3918
    %v3928 = vadd.f32 %v3909, %v3922
    %v3929 = vadd.f32 %v3910, %v3918
    %v3930 = vadd.f32 %v3911, %v3922
    %v3931 = vadd.f32 %v3912, %v3918
    %v3932 = vadd.f32 %v3913, %v3922
    %v3933 = vld [vmem:[#allocation2 + $0xc0] sm:$0xff]
    %v3934 = vld [vmem:[#allocation2 + $0xc8] sm:$0xff]
    %v3935 = vld [vmem:[#allocation2 + $0xd0] sm:$0xff]
    %v3936 = vld [vmem:[#allocation2 + $0xd8] sm:$0xff]
    %v3937 = vld [vmem:[#allocation2 + $0xe0] sm:$0xff]
    %v3938 = vld [vmem:[#allocation2 + $0xe8] sm:$0xff]
    %v3939 = vld [vmem:[#allocation2 + $0xf0] sm:$0xff]
    %v3940 = vld [vmem:[#allocation2 + $0xf8] sm:$0xff]
    %v3941 = vmul.f32 %v3933, %v240
    %v3942 = vmul.f32 %v3934, %v241
    %v3943 = vmul.f32 %v3935, %v242
    %v3944 = vmul.f32 %v3936, %v243
    %v3945 = vmul.f32 %v3937, %v244
    %v3946 = vmul.f32 %v3938, %v245
    %v3947 = vmul.f32 %v3939, %v246
    %v3948 = vmul.f32 %v3940, %v247
    %v3949 = vmul.f32 %v3933, %v248
    %v3950 = vmul.f32 %v3934, %v249
    %v3951 = vmul.f32 %v3935, %v250
    %v3952 = vmul.f32 %v3936, %v251
    %v3953 = vmul.f32 %v3937, %v252
    %v3954 = vmul.f32 %v3938, %v253
    %v3955 = vmul.f32 %v3939, %v254
    %v3956 = vmul.f32 %v3940, %v255
    %v3957 = vmul.f32 %v3933, %v256
    %v3958 = vmul.f32 %v3934, %v257
    %v3959 = vmul.f32 %v3935, %v258
    %v3960 = vmul.f32 %v3936, %v259
    %v3961 = vmul.f32 %v3937, %v260
    %v3962 = vmul.f32 %v3938, %v261
    %v3963 = vmul.f32 %v3939, %v262
    %v3964 = vmul.f32 %v3940, %v263
    %v3965 = vmul.f32 %v3933, %v264
    %v3966 = vmul.f32 %v3934, %v265
    %v3967 = vmul.f32 %v3935, %v266
    %v3968 = vmul.f32 %v3936, %v267
    %v3969 = vmul.f32 %v3937, %v268
    %v3970 = vmul.f32 %v3938, %v269
    %v3971 = vmul.f32 %v3939, %v270
    %v3972 = vmul.f32 %v3940, %v271
    %v3973 = vmul.f32 %v3933, %v272
    %v3974 = vmul.f32 %v3934, %v273
    %v3975 = vmul.f32 %v3935, %v274
    %v3976 = vmul.f32 %v3936, %v275
    %v3977 = vmul.f32 %v3937, %v276
    %v3978 = vmul.f32 %v3938, %v277
    %v3979 = vmul.f32 %v3939, %v278
    %v3980 = vmul.f32 %v3940, %v279
    %v3981 = vmul.f32 %v3933, %v280
    %v3982 = vmul.f32 %v3934, %v281
    %v3983 = vmul.f32 %v3935, %v282
    %v3984 = vmul.f32 %v3936, %v283
    %v3985 = vmul.f32 %v3937, %v284
    %v3986 = vmul.f32 %v3938, %v285
    %v3987 = vmul.f32 %v3939, %v286
    %v3988 = vmul.f32 %v3940, %v287
    %v3989 = vmul.f32 %v3933, %v288
    %v3990 = vmul.f32 %v3934, %v289
    %v3991 = vmul.f32 %v3935, %v290
    %v3992 = vmul.f32 %v3936, %v291
    %v3993 = vmul.f32 %v3937, %v292
    %v3994 = vmul.f32 %v3938, %v293
    %v3995 = vmul.f32 %v3939, %v294
    %v3996 = vmul.f32 %v3940, %v295
    %v3997 = vmul.f32 %v3933, %v296
    %v3998 = vmul.f32 %v3934, %v297
    %v3999 = vmul.f32 %v3935, %v298
    %v4000 = vmul.f32 %v3936, %v299
    %v4001 = vmul.f32 %v3937, %v300
    %v4002 = vmul.f32 %v3938, %v301
    %v4003 = vmul.f32 %v3939, %v302
    %v4004 = vmul.f32 %v3940, %v303
    %s4005 = scalar_lea.vmem [#allocation4], 165
    %v4006 = vld [vmem:[%s4005] ss:$8 sm:$0x3]
    %v4008 = vlaneseq
    %v4009 = vshrl.u32 %v4008, 7
    %v4010 = vsub.s32 0, %v4009
    %v4011 = vrot.slane %v4006, %v4010
    %v4012 = vlaneseq
    %v4013 = vshrl.u32 %v4012, 7
    %v4014 = vsub.s32 1, %v4013
    %v4015 = vrot.slane %v4006, %v4014
    %4018 = vmatprep.subr.mxu0 %v3942
    %4019 = vmatpush1.msra.mxu0 %v3941
    %4020 = vmatprep.subr.mxu0 %v3944
    %4021 = vmatpush1.msra.mxu0 %v3943
    %4022 = vmatprep.subr.mxu0 %v3946
    %4023 = vmatpush1.msra.mxu0 %v3945
    %4024 = vmatprep.subr.mxu0 %v3948
    %4025 = vmatpush1.msra.mxu0 %v3947
    %4026 = vmatprep.subr.mxu0 %v3950
    %4027 = vmatpush1.msra.mxu0 %v3949
    %4028 = vmatprep.subr.mxu0 %v3952
    %4029 = vmatpush1.msra.mxu0 %v3951
    %4030 = vmatprep.subr.mxu0 %v3954
    %4031 = vmatpush1.msra.mxu0 %v3953
    %4032 = vmatprep.subr.mxu0 %v3956
    %4033 = vmatpush1.msra.mxu0 %v3955
    %4034 = vmatprep.subr.mxu0 %v3958
    %4035 = vmatpush1.msra.mxu0 %v3957
    %4036 = vmatprep.subr.mxu0 %v3960
    %4037 = vmatpush1.msra.mxu0 %v3959
    %4038 = vmatprep.subr.mxu0 %v3962
    %4039 = vmatpush1.msra.mxu0 %v3961
    %4040 = vmatprep.subr.mxu0 %v3964
    %4041 = vmatpush1.msra.mxu0 %v3963
    %4042 = vmatprep.subr.mxu0 %v3966
    %4043 = vmatpush1.msra.mxu0 %v3965
    %4044 = vmatprep.subr.mxu0 %v3968
    %4045 = vmatpush1.msra.mxu0 %v3967
    %4046 = vmatprep.subr.mxu0 %v3970
    %4047 = vmatpush1.msra.mxu0 %v3969
    %4048 = vmatprep.subr.mxu0 %v3972
    %4049 = vmatpush1.msra.mxu0 %v3971
    %4050 = vmatprep.subr.mxu0 %v3974
    %4051 = vmatpush1.msra.mxu0 %v3973
    %4052 = vmatprep.subr.mxu0 %v3976
    %4053 = vmatpush1.msra.mxu0 %v3975
    %4054 = vmatprep.subr.mxu0 %v3978
    %4055 = vmatpush1.msra.mxu0 %v3977
    %4056 = vmatprep.subr.mxu0 %v3980
    %4057 = vmatpush1.msra.mxu0 %v3979
    %4058 = vmatprep.subr.mxu0 %v3982
    %4059 = vmatpush1.msra.mxu0 %v3981
    %4060 = vmatprep.subr.mxu0 %v3984
    %4061 = vmatpush1.msra.mxu0 %v3983
    %4062 = vmatprep.subr.mxu0 %v3986
    %4063 = vmatpush1.msra.mxu0 %v3985
    %4064 = vmatprep.subr.mxu0 %v3988
    %4065 = vmatpush1.msra.mxu0 %v3987
    %4066 = vmatprep.subr.mxu0 %v3990
    %4067 = vmatpush1.msra.mxu0 %v3989
    %4068 = vmatprep.subr.mxu0 %v3992
    %4069 = vmatpush1.msra.mxu0 %v3991
    %4070 = vmatprep.subr.mxu0 %v3994
    %4071 = vmatpush1.msra.mxu0 %v3993
    %4072 = vmatprep.subr.mxu0 %v3996
    %4073 = vmatpush1.msra.mxu0 %v3995
    %4074 = vmatprep.subr.mxu0 %v3998
    %4075 = vmatpush1.msra.mxu0 %v3997
    %4076 = vmatprep.subr.mxu0 %v4000
    %4077 = vmatpush1.msra.mxu0 %v3999
    %4078 = vmatprep.subr.mxu0 %v4002
    %4079 = vmatpush1.msra.mxu0 %v4001
    %4080 = vmatprep.subr.mxu0 %v4004
    %4081 = vmatpush1.msra.mxu0 %v4003
    %4082 = vmatprep.mubr.f32.mxu0 %v3926
    %4083 = vmatmul.mubr.f32.gmra.mrb[0].mxu0 %v3925
    %v4084 = vpop.f32.mrb[0].mxu0
    %v4085 = vadd.f32 %v4011, %v4084
    %v4086 = vpop.f32.mrb[0].mxu0
    %v4087 = vadd.f32 %v4015, %v4086
    %4088 = vmatprep.mubr.f32.mxu0 %v3928
    %4089 = vmatmul.mubr.f32.gmra.mrb[0].mxu0 %v3927
    %v4090 = vpop.f32.mrb[0].mxu0
    %v4091 = vadd.f32 %v4011, %v4090
    %v4092 = vpop.f32.mrb[0].mxu0
    %v4093 = vadd.f32 %v4015, %v4092
    %4094 = vmatprep.mubr.f32.mxu0 %v3930
    %4095 = vmatmul.mubr.f32.gmra.mrb[0].mxu0 %v3929
    %v4096 = vpop.f32.mrb[0].mxu0
    %v4097 = vadd.f32 %v4011, %v4096
    %v4098 = vpop.f32.mrb[0].mxu0
    %v4099 = vadd.f32 %v4015, %v4098
    %4100 = vmatprep.mubr.f32.mxu0 %v3932
    %4101 = vmatmul.mubr.f32.gmra.mrb[0].mxu0 %v3931
    %v4102 = vpop.f32.mrb[0].mxu0
    %v4103 = vadd.f32 %v4011, %v4102
    %v4104 = vpop.f32.mrb[0].mxu0
    %v4105 = vadd.f32 %v4015, %v4104
    %4106 = vdwg.mxu0
    %v4107 = vtanh.pop %v4085
    %v4108 = vtanh.pop %v4087
    %v4109 = vtanh.pop %v4091
    %v4110 = vtanh.pop %v4093
    %v4111 = vtanh.pop %v4097
    %v4112 = vtanh.pop %v4099
    %v4113 = vtanh.pop %v4103
    %v4114 = vtanh.pop %v4105
    %v4115 = vld [vmem:[#allocation2 + $0x100] sm:$0xff]
    %v4116 = vld [vmem:[#allocation2 + $0x108] sm:$0xff]
    %v4117 = vld [vmem:[#allocation2 + $0x110] sm:$0xff]
    %v4118 = vld [vmem:[#allocation2 + $0x118] sm:$0xff]
    %v4119 = vld [vmem:[#allocation2 + $0x120] sm:$0xff]
    %v4120 = vld [vmem:[#allocation2 + $0x128] sm:$0xff]
    %v4121 = vld [vmem:[#allocation2 + $0x130] sm:$0xff]
    %v4122 = vld [vmem:[#allocation2 + $0x138] sm:$0xff]
    %v4123 = vmul.f32 %v4115, %v240
    %v4124 = vmul.f32 %v4116, %v241
    %v4125 = vmul.f32 %v4117, %v242
    %v4126 = vmul.f32 %v4118, %v243
    %v4127 = vmul.f32 %v4119, %v244
    %v4128 = vmul.f32 %v4120, %v245
    %v4129 = vmul.f32 %v4121, %v246
    %v4130 = vmul.f32 %v4122, %v247
    %v4131 = vmul.f32 %v4115, %v248
    %v4132 = vmul.f32 %v4116, %v249
    %v4133 = vmul.f32 %v4117, %v250
    %v4134 = vmul.f32 %v4118, %v251
    %v4135 = vmul.f32 %v4119, %v252
    %v4136 = vmul.f32 %v4120, %v253
    %v4137 = vmul.f32 %v4121, %v254
    %v4138 = vmul.f32 %v4122, %v255
    %v4139 = vmul.f32 %v4115, %v256
    %v4140 = vmul.f32 %v4116, %v257
    %v4141 = vmul.f32 %v4117, %v258
    %v4142 = vmul.f32 %v4118, %v259
    %v4143 = vmul.f32 %v4119, %v260
    %v4144 = vmul.f32 %v4120, %v261
    %v4145 = vmul.f32 %v4121, %v262
    %v4146 = vmul.f32 %v4122, %v263
    %v4147 = vmul.f32 %v4115, %v264
    %v4148 = vmul.f32 %v4116, %v265
    %v4149 = vmul.f32 %v4117, %v266
    %v4150 = vmul.f32 %v4118, %v267
    %v4151 = vmul.f32 %v4119, %v268
    %v4152 = vmul.f32 %v4120, %v269
    %v4153 = vmul.f32 %v4121, %v270
    %v4154 = vmul.f32 %v4122, %v271
    %v4155 = vmul.f32 %v4115, %v272
    %v4156 = vmul.f32 %v4116, %v273
    %v4157 = vmul.f32 %v4117, %v274
    %v4158 = vmul.f32 %v4118, %v275
    %v4159 = vmul.f32 %v4119, %v276
    %v4160 = vmul.f32 %v4120, %v277
    %v4161 = vmul.f32 %v4121, %v278
    %v4162 = vmul.f32 %v4122, %v279
    %v4163 = vmul.f32 %v4115, %v280
    %v4164 = vmul.f32 %v4116, %v281
    %v4165 = vmul.f32 %v4117, %v282
    %v4166 = vmul.f32 %v4118, %v283
    %v4167 = vmul.f32 %v4119, %v284
    %v4168 = vmul.f32 %v4120, %v285
    %v4169 = vmul.f32 %v4121, %v286
    %v4170 = vmul.f32 %v4122, %v287
    %v4171 = vmul.f32 %v4115, %v288
    %v4172 = vmul.f32 %v4116, %v289
    %v4173 = vmul.f32 %v4117, %v290
    %v4174 = vmul.f32 %v4118, %v291
    %v4175 = vmul.f32 %v4119, %v292
    %v4176 = vmul.f32 %v4120, %v293
    %v4177 = vmul.f32 %v4121, %v294
    %v4178 = vmul.f32 %v4122, %v295
    %v4179 = vmul.f32 %v4115, %v296
    %v4180 = vmul.f32 %v4116, %v297
    %v4181 = vmul.f32 %v4117, %v298
    %v4182 = vmul.f32 %v4118, %v299
    %v4183 = vmul.f32 %v4119, %v300
    %v4184 = vmul.f32 %v4120, %v301
    %v4185 = vmul.f32 %v4121, %v302
    %v4186 = vmul.f32 %v4122, %v303
    %s4187 = scalar_lea.vmem [#allocation4], 166
    %v4188 = vld [vmem:[%s4187] ss:$8 sm:$0x3]
    %v4190 = vlaneseq
    %v4191 = vshrl.u32 %v4190, 7
    %v4192 = vsub.s32 0, %v4191
    %v4193 = vrot.slane %v4188, %v4192
    %v4194 = vlaneseq
    %v4195 = vshrl.u32 %v4194, 7
    %v4196 = vsub.s32 1, %v4195
    %v4197 = vrot.slane %v4188, %v4196
    %4200 = vmatprep.subr.mxu0 %v4124
    %4201 = vmatpush1.msra.mxu0 %v4123
    %4202 = vmatprep.subr.mxu0 %v4126
    %4203 = vmatpush1.msra.mxu0 %v4125
    %4204 = vmatprep.subr.mxu0 %v4128
    %4205 = vmatpush1.msra.mxu0 %v4127
    %4206 = vmatprep.subr.mxu0 %v4130
    %4207 = vmatpush1.msra.mxu0 %v4129
    %4208 = vmatprep.subr.mxu0 %v4132
    %4209 = vmatpush1.msra.mxu0 %v4131
    %4210 = vmatprep.subr.mxu0 %v4134
    %4211 = vmatpush1.msra.mxu0 %v4133
    %4212 = vmatprep.subr.mxu0 %v4136
    %4213 = vmatpush1.msra.mxu0 %v4135
    %4214 = vmatprep.subr.mxu0 %v4138
    %4215 = vmatpush1.msra.mxu0 %v4137
    %4216 = vmatprep.subr.mxu0 %v4140
    %4217 = vmatpush1.msra.mxu0 %v4139
    %4218 = vmatprep.subr.mxu0 %v4142
    %4219 = vmatpush1.msra.mxu0 %v4141
    %4220 = vmatprep.subr.mxu0 %v4144
    %4221 = vmatpush1.msra.mxu0 %v4143
    %4222 = vmatprep.subr.mxu0 %v4146
    %4223 = vmatpush1.msra.mxu0 %v4145
    %4224 = vmatprep.subr.mxu0 %v4148
    %4225 = vmatpush1.msra.mxu0 %v4147
    %4226 = vmatprep.subr.mxu0 %v4150
    %4227 = vmatpush1.msra.mxu0 %v4149
    %4228 = vmatprep.subr.mxu0 %v4152
    %4229 = vmatpush1.msra.mxu0 %v4151
    %4230 = vmatprep.subr.mxu0 %v4154
    %4231 = vmatpush1.msra.mxu0 %v4153
    %4232 = vmatprep.subr.mxu0 %v4156
    %4233 = vmatpush1.msra.mxu0 %v4155
    %4234 = vmatprep.subr.mxu0 %v4158
    %4235 = vmatpush1.msra.mxu0 %v4157
    %4236 = vmatprep.subr.mxu0 %v4160
    %4237 = vmatpush1.msra.mxu0 %v4159
    %4238 = vmatprep.subr.mxu0 %v4162
    %4239 = vmatpush1.msra.mxu0 %v4161
    %4240 = vmatprep.subr.mxu0 %v4164
    %4241 = vmatpush1.msra.mxu0 %v4163
    %4242 = vmatprep.subr.mxu0 %v4166
    %4243 = vmatpush1.msra.mxu0 %v4165
    %4244 = vmatprep.subr.mxu0 %v4168
    %4245 = vmatpush1.msra.mxu0 %v4167
    %4246 = vmatprep.subr.mxu0 %v4170
    %4247 = vmatpush1.msra.mxu0 %v4169
    %4248 = vmatprep.subr.mxu0 %v4172
    %4249 = vmatpush1.msra.mxu0 %v4171
    %4250 = vmatprep.subr.mxu0 %v4174
    %4251 = vmatpush1.msra.mxu0 %v4173
    %4252 = vmatprep.subr.mxu0 %v4176
    %4253 = vmatpush1.msra.mxu0 %v4175
    %4254 = vmatprep.subr.mxu0 %v4178
    %4255 = vmatpush1.msra.mxu0 %v4177
    %4256 = vmatprep.subr.mxu0 %v4180
    %4257 = vmatpush1.msra.mxu0 %v4179
    %4258 = vmatprep.subr.mxu0 %v4182
    %4259 = vmatpush1.msra.mxu0 %v4181
    %4260 = vmatprep.subr.mxu0 %v4184
    %4261 = vmatpush1.msra.mxu0 %v4183
    %4262 = vmatprep.subr.mxu0 %v4186
    %4263 = vmatpush1.msra.mxu0 %v4185
    %4264 = vmatprep.mubr.f32.mxu0 %v3926
    %4265 = vmatmul.mubr.f32.gmra.mrb[0].mxu0 %v3925
    %v4266 = vpop.f32.mrb[0].mxu0
    %v4267 = vadd.f32 %v4193, %v4266
    %v4268 = vpop.f32.mrb[0].mxu0
    %v4269 = vadd.f32 %v4197, %v4268
    %4270 = vmatprep.mubr.f32.mxu0 %v3928
    %4271 = vmatmul.mubr.f32.gmra.mrb[0].mxu0 %v3927
    %v4272 = vpop.f32.mrb[0].mxu0
    %v4273 = vadd.f32 %v4193, %v4272
    %v4274 = vpop.f32.mrb[0].mxu0
    %v4275 = vadd.f32 %v4197, %v4274
    %4276 = vmatprep.mubr.f32.mxu0 %v3930
    %4277 = vmatmul.mubr.f32.gmra.mrb[0].mxu0 %v3929
    %v4278 = vpop.f32.mrb[0].mxu0
    %v4279 = vadd.f32 %v4193, %v4278
    %v4280 = vpop.f32.mrb[0].mxu0
    %v4281 = vadd.f32 %v4197, %v4280
    %4282 = vmatprep.mubr.f32.mxu0 %v3932
    %4283 = vmatmul.mubr.f32.gmra.mrb[0].mxu0 %v3931
    %v4284 = vpop.f32.mrb[0].mxu0
    %v4285 = vadd.f32 %v4193, %v4284
    %v4286 = vpop.f32.mrb[0].mxu0
    %v4287 = vadd.f32 %v4197, %v4286
    %4288 = vdwg.mxu0
    %v4289 = vxor.u32 %v4267, 2147483648
    %v4290 = vxor.u32 %v4269, 2147483648
    %v4291 = vxor.u32 %v4273, 2147483648
    %v4292 = vxor.u32 %v4275, 2147483648
    %v4293 = vxor.u32 %v4279, 2147483648
    %v4294 = vxor.u32 %v4281, 2147483648
    %v4295 = vxor.u32 %v4285, 2147483648
    %v4296 = vxor.u32 %v4287, 2147483648
    %v4297 = vmul.f32 %v4289, 1.442695
    %v4298 = vpow.pop %v4297
    %v4299 = vmul.f32 %v4290, 1.442695
    %v4300 = vpow.pop %v4299
    %v4301 = vmul.f32 %v4291, 1.442695
    %v4302 = vpow.pop %v4301
    %v4303 = vmul.f32 %v4292, 1.442695
    %v4304 = vpow.pop %v4303
    %v4305 = vmul.f32 %v4293, 1.442695
    %v4306 = vpow.pop %v4305
    %v4307 = vmul.f32 %v4294, 1.442695
    %v4308 = vpow.pop %v4307
    %v4309 = vmul.f32 %v4295, 1.442695
    %v4310 = vpow.pop %v4309
    %v4311 = vmul.f32 %v4296, 1.442695
    %v4312 = vpow.pop %v4311
    %v4313 = vadd.f32 %v4298, 1.0
    %v4314 = vadd.f32 %v4300, 1.0
    %v4315 = vadd.f32 %v4302, 1.0
    %v4316 = vadd.f32 %v4304, 1.0
    %v4317 = vadd.f32 %v4306, 1.0
    %v4318 = vadd.f32 %v4308, 1.0
    %v4319 = vadd.f32 %v4310, 1.0
    %v4320 = vadd.f32 %v4312, 1.0
    %v4321 = vrcp.pop %v4313
    %v4322 = vmul.f32 1.0, %v4321
    %v4323 = vrcp.pop %v4314
    %v4324 = vmul.f32 1.0, %v4323
    %v4325 = vrcp.pop %v4315
    %v4326 = vmul.f32 1.0, %v4325
    %v4327 = vrcp.pop %v4316
    %v4328 = vmul.f32 1.0, %v4327
    %v4329 = vrcp.pop %v4317
    %v4330 = vmul.f32 1.0, %v4329
    %v4331 = vrcp.pop %v4318
    %v4332 = vmul.f32 1.0, %v4331
    %v4333 = vrcp.pop %v4319
    %v4334 = vmul.f32 1.0, %v4333
    %v4335 = vrcp.pop %v4320
    %v4336 = vmul.f32 1.0, %v4335
    %v4337 = vmul.f32 %v4107, %v4322
    %v4338 = vmul.f32 %v4108, %v4324
    %v4339 = vmul.f32 %v4109, %v4326
    %v4340 = vmul.f32 %v4110, %v4328
    %v4341 = vmul.f32 %v4111, %v4330
    %v4342 = vmul.f32 %v4112, %v4332
    %v4343 = vmul.f32 %v4113, %v4334
    %v4344 = vmul.f32 %v4114, %v4336
    %v4345 = vld [vmem:[#allocation2 + $0x140] sm:$0xff]
    %v4346 = vld [vmem:[#allocation2 + $0x148] sm:$0xff]
    %v4347 = vld [vmem:[#allocation2 + $0x150] sm:$0xff]
    %v4348 = vld [vmem:[#allocation2 + $0x158] sm:$0xff]
    %v4349 = vld [vmem:[#allocation2 + $0x160] sm:$0xff]
    %v4350 = vld [vmem:[#allocation2 + $0x168] sm:$0xff]
    %v4351 = vld [vmem:[#allocation2 + $0x170] sm:$0xff]
    %v4352 = vld [vmem:[#allocation2 + $0x178] sm:$0xff]
    %v4353 = vmul.f32 %v4345, %v240
    %v4354 = vmul.f32 %v4346, %v241
    %v4355 = vmul.f32 %v4347, %v242
    %v4356 = vmul.f32 %v4348, %v243
    %v4357 = vmul.f32 %v4349, %v244
    %v4358 = vmul.f32 %v4350, %v245
    %v4359 = vmul.f32 %v4351, %v246
    %v4360 = vmul.f32 %v4352, %v247
    %v4361 = vmul.f32 %v4345, %v248
    %v4362 = vmul.f32 %v4346, %v249
    %v4363 = vmul.f32 %v4347, %v250
    %v4364 = vmul.f32 %v4348, %v251
    %v4365 = vmul.f32 %v4349, %v252
    %v4366 = vmul.f32 %v4350, %v253
    %v4367 = vmul.f32 %v4351, %v254
    %v4368 = vmul.f32 %v4352, %v255
    %v4369 = vmul.f32 %v4345, %v256
    %v4370 = vmul.f32 %v4346, %v257
    %v4371 = vmul.f32 %v4347, %v258
    %v4372 = vmul.f32 %v4348, %v259
    %v4373 = vmul.f32 %v4349, %v260
    %v4374 = vmul.f32 %v4350, %v261
    %v4375 = vmul.f32 %v4351, %v262
    %v4376 = vmul.f32 %v4352, %v263
    %v4377 = vmul.f32 %v4345, %v264
    %v4378 = vmul.f32 %v4346, %v265
    %v4379 = vmul.f32 %v4347, %v266
    %v4380 = vmul.f32 %v4348, %v267
    %v4381 = vmul.f32 %v4349, %v268
    %v4382 = vmul.f32 %v4350, %v269
    %v4383 = vmul.f32 %v4351, %v270
    %v4384 = vmul.f32 %v4352, %v271
    %v4385 = vmul.f32 %v4345, %v272
    %v4386 = vmul.f32 %v4346, %v273
    %v4387 = vmul.f32 %v4347, %v274
    %v4388 = vmul.f32 %v4348, %v275
    %v4389 = vmul.f32 %v4349, %v276
    %v4390 = vmul.f32 %v4350, %v277
    %v4391 = vmul.f32 %v4351, %v278
    %v4392 = vmul.f32 %v4352, %v279
    %v4393 = vmul.f32 %v4345, %v280
    %v4394 = vmul.f32 %v4346, %v281
    %v4395 = vmul.f32 %v4347, %v282
    %v4396 = vmul.f32 %v4348, %v283
    %v4397 = vmul.f32 %v4349, %v284
    %v4398 = vmul.f32 %v4350, %v285
    %v4399 = vmul.f32 %v4351, %v286
    %v4400 = vmul.f32 %v4352, %v287
    %v4401 = vmul.f32 %v4345, %v288
    %v4402 = vmul.f32 %v4346, %v289
    %v4403 = vmul.f32 %v4347, %v290
    %v4404 = vmul.f32 %v4348, %v291
    %v4405 = vmul.f32 %v4349, %v292
    %v4406 = vmul.f32 %v4350, %v293
    %v4407 = vmul.f32 %v4351, %v294
    %v4408 = vmul.f32 %v4352, %v295
    %v4409 = vmul.f32 %v4345, %v296
    %v4410 = vmul.f32 %v4346, %v297
    %v4411 = vmul.f32 %v4347, %v298
    %v4412 = vmul.f32 %v4348, %v299
    %v4413 = vmul.f32 %v4349, %v300
    %v4414 = vmul.f32 %v4350, %v301
    %v4415 = vmul.f32 %v4351, %v302
    %v4416 = vmul.f32 %v4352, %v303
    %s4417 = scalar_lea.vmem [#allocation4], 167
    %v4418 = vld [vmem:[%s4417] ss:$8 sm:$0x3]
    %v4420 = vlaneseq
    %v4421 = vshrl.u32 %v4420, 7
    %v4422 = vsub.s32 0, %v4421
    %v4423 = vrot.slane %v4418, %v4422
    %v4424 = vlaneseq
    %v4425 = vshrl.u32 %v4424, 7
    %v4426 = vsub.s32 1, %v4425
    %v4427 = vrot.slane %v4418, %v4426
    %4430 = vmatprep.subr.mxu0 %v4354
    %4431 = vmatpush1.msra.mxu0 %v4353
    %4432 = vmatprep.subr.mxu0 %v4356
    %4433 = vmatpush1.msra.mxu0 %v4355
    %4434 = vmatprep.subr.mxu0 %v4358
    %4435 = vmatpush1.msra.mxu0 %v4357
    %4436 = vmatprep.subr.mxu0 %v4360
    %4437 = vmatpush1.msra.mxu0 %v4359
    %4438 = vmatprep.subr.mxu0 %v4362
    %4439 = vmatpush1.msra.mxu0 %v4361
    %4440 = vmatprep.subr.mxu0 %v4364
    %4441 = vmatpush1.msra.mxu0 %v4363
    %4442 = vmatprep.subr.mxu0 %v4366
    %4443 = vmatpush1.msra.mxu0 %v4365
    %4444 = vmatprep.subr.mxu0 %v4368
    %4445 = vmatpush1.msra.mxu0 %v4367
    %4446 = vmatprep.subr.mxu0 %v4370
    %4447 = vmatpush1.msra.mxu0 %v4369
    %4448 = vmatprep.subr.mxu0 %v4372
    %4449 = vmatpush1.msra.mxu0 %v4371
    %4450 = vmatprep.subr.mxu0 %v4374
    %4451 = vmatpush1.msra.mxu0 %v4373
    %4452 = vmatprep.subr.mxu0 %v4376
    %4453 = vmatpush1.msra.mxu0 %v4375
    %4454 = vmatprep.subr.mxu0 %v4378
    %4455 = vmatpush1.msra.mxu0 %v4377
    %4456 = vmatprep.subr.mxu0 %v4380
    %4457 = vmatpush1.msra.mxu0 %v4379
    %4458 = vmatprep.subr.mxu0 %v4382
    %4459 = vmatpush1.msra.mxu0 %v4381
    %4460 = vmatprep.subr.mxu0 %v4384
    %4461 = vmatpush1.msra.mxu0 %v4383
    %4462 = vmatprep.subr.mxu0 %v4386
    %4463 = vmatpush1.msra.mxu0 %v4385
    %4464 = vmatprep.subr.mxu0 %v4388
    %4465 = vmatpush1.msra.mxu0 %v4387
    %4466 = vmatprep.subr.mxu0 %v4390
    %4467 = vmatpush1.msra.mxu0 %v4389
    %4468 = vmatprep.subr.mxu0 %v4392
    %4469 = vmatpush1.msra.mxu0 %v4391
    %4470 = vmatprep.subr.mxu0 %v4394
    %4471 = vmatpush1.msra.mxu0 %v4393
    %4472 = vmatprep.subr.mxu0 %v4396
    %4473 = vmatpush1.msra.mxu0 %v4395
    %4474 = vmatprep.subr.mxu0 %v4398
    %4475 = vmatpush1.msra.mxu0 %v4397
    %4476 = vmatprep.subr.mxu0 %v4400
    %4477 = vmatpush1.msra.mxu0 %v4399
    %4478 = vmatprep.subr.mxu0 %v4402
    %4479 = vmatpush1.msra.mxu0 %v4401
    %4480 = vmatprep.subr.mxu0 %v4404
    %4481 = vmatpush1.msra.mxu0 %v4403
    %4482 = vmatprep.subr.mxu0 %v4406
    %4483 = vmatpush1.msra.mxu0 %v4405
    %4484 = vmatprep.subr.mxu0 %v4408
    %4485 = vmatpush1.msra.mxu0 %v4407
    %4486 = vmatprep.subr.mxu0 %v4410
    %4487 = vmatpush1.msra.mxu0 %v4409
    %4488 = vmatprep.subr.mxu0 %v4412
    %4489 = vmatpush1.msra.mxu0 %v4411
    %4490 = vmatprep.subr.mxu0 %v4414
    %4491 = vmatpush1.msra.mxu0 %v4413
    %4492 = vmatprep.subr.mxu0 %v4416
    %4493 = vmatpush1.msra.mxu0 %v4415
    %4494 = vmatprep.mubr.f32.mxu0 %v4338
    %4495 = vmatmul.mubr.f32.gmra.mrb[0].mxu0 %v4337
    %v4496 = vpop.f32.mrb[0].mxu0
    %v4497 = vadd.f32 %v4423, %v4496
    %v4498 = vpop.f32.mrb[0].mxu0
    %v4499 = vadd.f32 %v4427, %v4498
    %4500 = vmatprep.mubr.f32.mxu0 %v4340
    %4501 = vmatmul.mubr.f32.gmra.mrb[0].mxu0 %v4339
    %v4502 = vpop.f32.mrb[0].mxu0
    %v4503 = vadd.f32 %v4423, %v4502
    %v4504 = vpop.f32.mrb[0].mxu0
    %v4505 = vadd.f32 %v4427, %v4504
    %4506 = vmatprep.mubr.f32.mxu0 %v4342
    %4507 = vmatmul.mubr.f32.gmra.mrb[0].mxu0 %v4341
    %v4508 = vpop.f32.mrb[0].mxu0
    %v4509 = vadd.f32 %v4423, %v4508
    %v4510 = vpop.f32.mrb[0].mxu0
    %v4511 = vadd.f32 %v4427, %v4510
    %4512 = vmatprep.mubr.f32.mxu0 %v4344
    %4513 = vmatmul.mubr.f32.gmra.mrb[0].mxu0 %v4343
    %v4514 = vpop.f32.mrb[0].mxu0
    %v4515 = vadd.f32 %v4423, %v4514
    %v4516 = vpop.f32.mrb[0].mxu0
    %v4517 = vadd.f32 %v4427, %v4516
    %4518 = vdwg.mxu0
    %v4519 = vadd.f32 %v2139, %v4497
    %v4520 = vadd.f32 %v2140, %v4499
    %v4521 = vadd.f32 %v2141, %v4503
    %v4522 = vadd.f32 %v2142, %v4505
    %v4523 = vadd.f32 %v2143, %v4509
    %v4524 = vadd.f32 %v2144, %v4511
    %v4525 = vadd.f32 %v2145, %v4515
    %v4526 = vadd.f32 %v2146, %v4517
    %v4527 = vmax.f32 %v4519, 0.0
    %v4528 = vmax.f32 %v4520, 0.0
    %v4529 = vmax.f32 %v4521, 0.0
    %v4530 = vmax.f32 %v4522, 0.0
    %v4531 = vmax.f32 %v4523, 0.0
    %v4532 = vmax.f32 %v4524, 0.0
    %v4533 = vmax.f32 %v4525, 0.0
    %v4534 = vmax.f32 %v4526, 0.0
    %v4535 = vld [vmem:[#allocation2 + $0x3c0] sm:$0xff]
    %v4536 = vld [vmem:[#allocation2 + $0x3c8] sm:$0xff]
    %v4537 = vld [vmem:[#allocation2 + $0x3d0] sm:$0xff]
    %v4538 = vld [vmem:[#allocation2 + $0x3d8] sm:$0xff]
    %v4539 = vld [vmem:[#allocation2 + $0x3e0] sm:$0xff]
    %v4540 = vld [vmem:[#allocation2 + $0x3e8] sm:$0xff]
    %v4541 = vld [vmem:[#allocation2 + $0x3f0] sm:$0xff]
    %v4542 = vld [vmem:[#allocation2 + $0x3f8] sm:$0xff]
    %v4543 = vmul.f32 %v4535, %v240
    %v4544 = vmul.f32 %v4536, %v241
    %v4545 = vmul.f32 %v4537, %v242
    %v4546 = vmul.f32 %v4538, %v243
    %v4547 = vmul.f32 %v4539, %v244
    %v4548 = vmul.f32 %v4540, %v245
    %v4549 = vmul.f32 %v4541, %v246
    %v4550 = vmul.f32 %v4542, %v247
    %v4551 = vmul.f32 %v4535, %v248
    %v4552 = vmul.f32 %v4536, %v249
    %v4553 = vmul.f32 %v4537, %v250
    %v4554 = vmul.f32 %v4538, %v251
    %v4555 = vmul.f32 %v4539, %v252
    %v4556 = vmul.f32 %v4540, %v253
    %v4557 = vmul.f32 %v4541, %v254
    %v4558 = vmul.f32 %v4542, %v255
    %v4559 = vmul.f32 %v4535, %v256
    %v4560 = vmul.f32 %v4536, %v257
    %v4561 = vmul.f32 %v4537, %v258
    %v4562 = vmul.f32 %v4538, %v259
    %v4563 = vmul.f32 %v4539, %v260
    %v4564 = vmul.f32 %v4540, %v261
    %v4565 = vmul.f32 %v4541, %v262
    %v4566 = vmul.f32 %v4542, %v263
    %v4567 = vmul.f32 %v4535, %v264
    %v4568 = vmul.f32 %v4536, %v265
    %v4569 = vmul.f32 %v4537, %v266
    %v4570 = vmul.f32 %v4538, %v267
    %v4571 = vmul.f32 %v4539, %v268
    %v4572 = vmul.f32 %v4540, %v269
    %v4573 = vmul.f32 %v4541, %v270
    %v4574 = vmul.f32 %v4542, %v271
    %v4575 = vmul.f32 %v4535, %v272
    %v4576 = vmul.f32 %v4536, %v273
    %v4577 = vmul.f32 %v4537, %v274
    %v4578 = vmul.f32 %v4538, %v275
    %v4579 = vmul.f32 %v4539, %v276
    %v4580 = vmul.f32 %v4540, %v277
    %v4581 = vmul.f32 %v4541, %v278
    %v4582 = vmul.f32 %v4542, %v279
    %v4583 = vmul.f32 %v4535, %v280
    %v4584 = vmul.f32 %v4536, %v281
    %v4585 = vmul.f32 %v4537, %v282
    %v4586 = vmul.f32 %v4538, %v283
    %v4587 = vmul.f32 %v4539, %v284
    %v4588 = vmul.f32 %v4540, %v285
    %v4589 = vmul.f32 %v4541, %v286
    %v4590 = vmul.f32 %v4542, %v287
    %v4591 = vmul.f32 %v4535, %v288
    %v4592 = vmul.f32 %v4536, %v289
    %v4593 = vmul.f32 %v4537, %v290
    %v4594 = vmul.f32 %v4538, %v291
    %v4595 = vmul.f32 %v4539, %v292
    %v4596 = vmul.f32 %v4540, %v293
    %v4597 = vmul.f32 %v4541, %v294
    %v4598 = vmul.f32 %v4542, %v295
    %v4599 = vmul.f32 %v4535, %v296
    %v4600 = vmul.f32 %v4536, %v297
    %v4601 = vmul.f32 %v4537, %v298
    %v4602 = vmul.f32 %v4538, %v299
    %v4603 = vmul.f32 %v4539, %v300
    %v4604 = vmul.f32 %v4540, %v301
    %v4605 = vmul.f32 %v4541, %v302
    %v4606 = vmul.f32 %v4542, %v303
    %s4607 = scalar_lea.vmem [#allocation4], 179
    %v4608 = vld [vmem:[%s4607] ss:$8 sm:$0x3]
    %v4610 = vlaneseq
    %v4611 = vshrl.u32 %v4610, 7
    %v4612 = vsub.s32 0, %v4611
    %v4613 = vrot.slane %v4608, %v4612
    %v4614 = vlaneseq
    %v4615 = vshrl.u32 %v4614, 7
    %v4616 = vsub.s32 1, %v4615
    %v4617 = vrot.slane %v4608, %v4616
    %4620 = vmatprep.subr.mxu0 %v4544
    %4621 = vmatpush1.msra.mxu0 %v4543
    %4622 = vmatprep.subr.mxu0 %v4546
    %4623 = vmatpush1.msra.mxu0 %v4545
    %4624 = vmatprep.subr.mxu0 %v4548
    %4625 = vmatpush1.msra.mxu0 %v4547
    %4626 = vmatprep.subr.mxu0 %v4550
    %4627 = vmatpush1.msra.mxu0 %v4549
    %4628 = vmatprep.subr.mxu0 %v4552
    %4629 = vmatpush1.msra.mxu0 %v4551
    %4630 = vmatprep.subr.mxu0 %v4554
    %4631 = vmatpush1.msra.mxu0 %v4553
    %4632 = vmatprep.subr.mxu0 %v4556
    %4633 = vmatpush1.msra.mxu0 %v4555
    %4634 = vmatprep.subr.mxu0 %v4558
    %4635 = vmatpush1.msra.mxu0 %v4557
    %4636 = vmatprep.subr.mxu0 %v4560
    %4637 = vmatpush1.msra.mxu0 %v4559
    %4638 = vmatprep.subr.mxu0 %v4562
    %4639 = vmatpush1.msra.mxu0 %v4561
    %4640 = vmatprep.subr.mxu0 %v4564
    %4641 = vmatpush1.msra.mxu0 %v4563
    %4642 = vmatprep.subr.mxu0 %v4566
    %4643 = vmatpush1.msra.mxu0 %v4565
    %4644 = vmatprep.subr.mxu0 %v4568
    %4645 = vmatpush1.msra.mxu0 %v4567
    %4646 = vmatprep.subr.mxu0 %v4570
    %4647 = vmatpush1.msra.mxu0 %v4569
    %4648 = vmatprep.subr.mxu0 %v4572
    %4649 = vmatpush1.msra.mxu0 %v4571
    %4650 = vmatprep.subr.mxu0 %v4574
    %4651 = vmatpush1.msra.mxu0 %v4573
    %4652 = vmatprep.subr.mxu0 %v4576
    %4653 = vmatpush1.msra.mxu0 %v4575
    %4654 = vmatprep.subr.mxu0 %v4578
    %4655 = vmatpush1.msra.mxu0 %v4577
    %4656 = vmatprep.subr.mxu0 %v4580
    %4657 = vmatpush1.msra.mxu0 %v4579
    %4658 = vmatprep.subr.mxu0 %v4582
    %4659 = vmatpush1.msra.mxu0 %v4581
    %4660 = vmatprep.subr.mxu0 %v4584
    %4661 = vmatpush1.msra.mxu0 %v4583
    %4662 = vmatprep.subr.mxu0 %v4586
    %4663 = vmatpush1.msra.mxu0 %v4585
    %4664 = vmatprep.subr.mxu0 %v4588
    %4665 = vmatpush1.msra.mxu0 %v4587
    %4666 = vmatprep.subr.mxu0 %v4590
    %4667 = vmatpush1.msra.mxu0 %v4589
    %4668 = vmatprep.subr.mxu0 %v4592
    %4669 = vmatpush1.msra.mxu0 %v4591
    %4670 = vmatprep.subr.mxu0 %v4594
    %4671 = vmatpush1.msra.mxu0 %v4593
    %4672 = vmatprep.subr.mxu0 %v4596
    %4673 = vmatpush1.msra.mxu0 %v4595
    %4674 = vmatprep.subr.mxu0 %v4598
    %4675 = vmatpush1.msra.mxu0 %v4597
    %4676 = vmatprep.subr.mxu0 %v4600
    %4677 = vmatpush1.msra.mxu0 %v4599
    %4678 = vmatprep.subr.mxu0 %v4602
    %4679 = vmatpush1.msra.mxu0 %v4601
    %4680 = vmatprep.subr.mxu0 %v4604
    %4681 = vmatpush1.msra.mxu0 %v4603
    %4682 = vmatprep.subr.mxu0 %v4606
    %4683 = vmatpush1.msra.mxu0 %v4605
    %4684 = vmatprep.mubr.f32.mxu0 %v4528
    %4685 = vmatmul.mubr.f32.gmra.mrb[0].mxu0 %v4527
    %v4686 = vpop.f32.mrb[0].mxu0
    %v4687 = vadd.f32 %v4613, %v4686
    %v4688 = vpop.f32.mrb[0].mxu0
    %v4689 = vadd.f32 %v4617, %v4688
    %4690 = vmatprep.mubr.f32.mxu0 %v4530
    %4691 = vmatmul.mubr.f32.gmra.mrb[0].mxu0 %v4529
    %v4692 = vpop.f32.mrb[0].mxu0
    %v4693 = vadd.f32 %v4613, %v4692
    %v4694 = vpop.f32.mrb[0].mxu0
    %v4695 = vadd.f32 %v4617, %v4694
    %4696 = vmatprep.mubr.f32.mxu0 %v4532
    %4697 = vmatmul.mubr.f32.gmra.mrb[0].mxu0 %v4531
    %v4698 = vpop.f32.mrb[0].mxu0
    %v4699 = vadd.f32 %v4613, %v4698
    %v4700 = vpop.f32.mrb[0].mxu0
    %v4701 = vadd.f32 %v4617, %v4700
    %4702 = vmatprep.mubr.f32.mxu0 %v4534
    %4703 = vmatmul.mubr.f32.gmra.mrb[0].mxu0 %v4533
    %v4704 = vpop.f32.mrb[0].mxu0
    %v4705 = vadd.f32 %v4613, %v4704
    %v4706 = vpop.f32.mrb[0].mxu0
    %v4707 = vadd.f32 %v4617, %v4706
    %4708 = vdwg.mxu0
    %4709 = vst [vmem:[%s3] sm:$0xff] %v4687
    %4710 = vst [vmem:[%s3 + $0x8] sm:$0xff] %v4689
    %4711 = vst [vmem:[%s3 + $0x10] sm:$0xff] %v4693
    %4712 = vst [vmem:[%s3 + $0x18] sm:$0xff] %v4695
    %4713 = vst [vmem:[%s3 + $0x20] sm:$0xff] %v4699
    %4714 = vst [vmem:[%s3 + $0x28] sm:$0xff] %v4701
    %4715 = vst [vmem:[%s3 + $0x30] sm:$0xff] %v4705
    %4716 = vst [vmem:[%s3 + $0x38] sm:$0xff] %v4707
    // Predicated region
    $region22: #{sthgnn_forward.1} parent=1 // pred_check
      _
    $region23: #{sthgnn_forward.1} parent=1 // pred_check_branch
      %4718 = sbr.rel (0) target = $region25
    $region24: #{sthgnn_forward.1} parent=1 // pred_region
      _
    $region25: #{sthgnn_forward.1} parent=1 // pred_fallthru
      _
    // Predicated region
    $region26: #{sthgnn_forward.1} parent=1 // pred_check
      _
    $region27: #{sthgnn_forward.1} parent=1 // pred_check_branch
      %4720 = sbr.rel (0) target = $region29
    $region28: #{sthgnn_forward.1} parent=1 // pred_region
      _
    $region29: #{sthgnn_forward.1} parent=1 // pred_fallthru
      _
    %4721 = vsyncpa [#allocation3], 1
    %4722 = vsyncpa [#allocation5], 1

</llo_original>
